<compile_context>
chip_gen: v6e
topology: v6e:2x2x1
jax: 0.10.0
libtpu: 0.0.40
codegen_flags: <defaults>
</compile_context>

<pallas_src>
import math

import jax
import jax.numpy as jnp
from jax import lax
from jax.experimental import pallas as pl
from jax.experimental.pallas import tpu as pltpu

K = 5      # conv kernel size (both layers)
PAD = 2    # 'same' padding
CIN = 3    # input channels
C1 = 32    # conv1 out channels
C2 = 64    # conv2 out channels


def _make_lowered_weight(w_hwio, w_out):
    """kh-stacked, pool-permuted, bf16 lowered 'same'-conv weight.

    Returns M of shape (K*w_out*Cin, w_out*Cout) such that, with the input
    flattened to (..., w_out*Cin) and zero-padded along H only (W padding is
    folded into M), the single matmul of the im2row slab
        slab[b, h, kh*w_out*Cin + p*Cin + ci] = x_rowpad[b, h+kh, p*Cin + ci]
    against M computes the stride-1 KxK conv at every (h, w) output position.

    Output columns are permuted to [all even w | all odd w] (ordered (w//2, co)
    within each half) so the 2x2 max-pool W-step in the kernel is one aligned
    lane-half maximum, and the pooled result lands directly in the flat
    (w_out//2 * Cout) layout the next layer expects.
    """
    k, _, cin, cout = w_hwio.shape
    pad = (k - 1) // 2
    wk = w_hwio.reshape(k, k * cin, cout)                      # (kh, kw*ci, co)
    cols = [jnp.pad(wk, ((0, 0), (p * cin, (w_out - 1 - p) * cin), (0, 0)))
            for p in range(w_out)]
    m = jnp.concatenate(cols, axis=2)                          # (K, (w_out+K-1)*cin, w_out*cout)
    m = m[:, pad * cin:(pad + w_out) * cin, :]                 # drop W-padding rows
    m = m.reshape(k * w_out * cin, w_out * cout)               # stack kh on contraction axis
    ch = jnp.arange(cout)[None, :]
    order = jnp.concatenate([
        (jnp.arange(0, w_out, 2)[:, None] * cout + ch).reshape(-1),
        (jnp.arange(1, w_out, 2)[:, None] * cout + ch).reshape(-1)])
    return m[:, order].astype(jnp.bfloat16)                    # bf16 MXU operand


def _make_fused_kernel(bb, h, w, cin):
    hh2, hh4 = h // 2, h // 4
    ww2, ww4 = w // 2, w // 4
    pc1 = ww2 * C1          # pooled layer-1 lane width (256 at w=16)
    pc2 = ww4 * C2          # pooled layer-2 lane width (256 at w=16)

    def kernel(x_ref, m1_ref, b1_ref, m2_ref, b2_ref, o_ref, xp1_ref, xp2_ref):
        f32 = jnp.float32

        # -------- layer 1: conv 5x5 pad 2 + ReLU + maxpool 2x2 --------
        # Zero only the PAD halo rows; the interior is fully overwritten each step.
        xp1_ref[:, :PAD, :] = jnp.zeros((bb, PAD, w * cin), xp1_ref.dtype)
        xp1_ref[:, PAD + h:, :] = jnp.zeros((bb, PAD, w * cin), xp1_ref.dtype)
        xp1_ref[:, PAD:PAD + h, :] = x_ref[...]                       # bf16

        # One lane-dense im2row slab -> one MXU matmul (contraction K*w*cin = 240).
        slab1 = jnp.concatenate(
            [xp1_ref[:, kh:kh + h, :] for kh in range(K)],
            axis=-1).reshape(bb * h, K * w * cin)
        acc1 = jnp.dot(slab1, m1_ref[...], preferred_element_type=f32)  # (bb*h, w*C1)
        a1 = jnp.maximum(acc1 + b1_ref[...], 0.0)

        # 2x2 max-pool. Columns: weight columns are pre-permuted [even w | odd w],
        # so the W-pool is a single aligned lane-half maximum.
        a1 = jnp.maximum(a1[:, :pc1], a1[:, pc1:]).reshape(bb, h, pc1)
        # Rows: pairwise max of adjacent rows.
        p1 = jnp.concatenate(
            [jnp.maximum(a1[:, 2 * i:2 * i + 1, :], a1[:, 2 * i + 1:2 * i + 2, :])
             for i in range(hh2)], axis=1)                            # (bb, hh2, pc1)

        # -------- layer 2: conv 5x5 pad 2 + ReLU + maxpool 2x2 --------
        xp2_ref[:, :PAD, :] = jnp.zeros((bb, PAD, pc1), xp2_ref.dtype)
        xp2_ref[:, PAD + hh2:, :] = jnp.zeros((bb, PAD, pc1), xp2_ref.dtype)
        xp2_ref[:, PAD:PAD + hh2, :] = p1.astype(xp2_ref.dtype)       # bf16

        slab2 = jnp.concatenate(
            [xp2_ref[:, kh:kh + hh2, :] for kh in range(K)],
            axis=-1).reshape(bb * hh2, K * pc1)                       # contraction 1280
        acc2 = jnp.dot(slab2, m2_ref[...], preferred_element_type=f32)  # (bb*hh2, ww2*C2)
        a2 = jnp.maximum(acc2 + b2_ref[...], 0.0)

        a2 = jnp.maximum(a2[:, :pc2], a2[:, pc2:]).reshape(bb, hh2, pc2)
        # Row pool + lane-dense flat output: pooled row i4 goes to lane offset i4*pc2.
        for i in range(hh4):
            o_ref[:, i * pc2:(i + 1) * pc2] = jnp.maximum(
                a2[:, 2 * i, :], a2[:, 2 * i + 1, :]).astype(o_ref.dtype)

    return kernel


def mnist_features_forward(x_nchw, params, *, batch_block=64):
    """Replicates MNISTFeatures.forward (batch_norm=False). Input/output NCHW (f32)."""
    w1, b1, w2, b2 = params                       # conv weights HWIO, biases
    n, cin, h, w = x_nchw.shape
    assert cin == CIN and h % 4 == 0 and w % 4 == 0
    hh4, ww4 = h // 4, w // 4
    ww2 = w // 2

    # Lane-dense flat NHWC layout, bf16 MXU operands (accumulation stays f32 in-kernel).
    x = jnp.transpose(x_nchw, (0, 2, 3, 1)).reshape(n, h, w * cin).astype(jnp.bfloat16)

    # kh-stacked, pool-permuted, bf16 lowered conv weights; f32 W-tiled biases.
    m1 = _make_lowered_weight(w1, w)              # (K*w*cin,   w*C1)
    m2 = _make_lowered_weight(w2, ww2)            # (K*ww2*C1,  ww2*C2)
    b1f = jnp.tile(b1, w).reshape(1, w * C1).astype(jnp.float32)
    b2f = jnp.tile(b2, ww2).reshape(1, ww2 * C2).astype(jnp.float32)

    # Batch blocking: bb multiple of 8 (lane-dense 2-D output block) when possible and
    # >=2 grid steps so the "parallel" batch axis can use both TensorCores on v7x.
    bb = min(batch_block, n)
    if bb >= 16 and pl.cdiv(n, bb) < 2:
        bb = ((pl.cdiv(n, 2) + 7) // 8) * 8       # split the batch over two grid steps
    if bb % 8 != 0:
        bb = n                                    # tiny batch: one full-batch step
    n_pad = pl.cdiv(n, bb) * bb
    if n_pad != n:
        x = jnp.pad(x, ((0, n_pad - n), (0, 0), (0, 0)))

    out = pl.pallas_call(
        _make_fused_kernel(bb, h, w, cin),
        out_shape=jax.ShapeDtypeStruct((n_pad, hh4 * ww4 * C2), jnp.float32),
        grid=(n_pad // bb,),
        in_specs=[
            pl.BlockSpec((bb, h, w * cin), lambda i: (i, 0, 0)),
            # Grid-invariant operands: constant index_maps => fetched once.
            pl.BlockSpec(m1.shape, lambda i: (0, 0)),
            pl.BlockSpec(b1f.shape, lambda i: (0, 0)),
            pl.BlockSpec(m2.shape, lambda i: (0, 0)),
            pl.BlockSpec(b2f.shape, lambda i: (0, 0)),
        ],
        out_specs=pl.BlockSpec((bb, hh4 * ww4 * C2), lambda i: (i, 0)),
        scratch_shapes=[
            pltpu.VMEM((bb, h + 2 * PAD, w * cin), jnp.bfloat16),        # padded l1 input
            pltpu.VMEM((bb, h // 2 + 2 * PAD, ww2 * C1), jnp.bfloat16),  # padded l2 input
        ],
        compiler_params=pltpu.CompilerParams(
            dimension_semantics=("parallel",),
            vmem_limit_bytes=48 * 1024 * 1024),
    )(x, m1, b1f, m2, b2f)

    out = out[:n].reshape(n, hh4, ww4, C2)
    return jnp.transpose(out, (0, 3, 1, 2))       # NHWC -> NCHW


def init_params(key):
    """Params matching _initialize_weights (kaiming_normal fan_out, relu; bias=0)."""
    k1, k2 = jax.random.split(key)
    std1 = math.sqrt(2.0 / (C1 * K * K))
    w1 = std1 * jax.random.normal(k1, (K, K, CIN, C1), jnp.float32)   # HWIO
    b1 = jnp.zeros((C1,), jnp.float32)
    std2 = math.sqrt(2.0 / (C2 * K * K))
    w2 = std2 * jax.random.normal(k2, (K, K, C1, C2), jnp.float32)    # HWIO
    b2 = jnp.zeros((C2,), jnp.float32)
    return w1, b1, w2, b2


def _reference_forward(x_nchw, params, *, bf16_operands=False):
    """Pure-JAX reference (lax.conv + reduce_window).

    bf16_operands=True mirrors the kernel's numerics exactly (bf16 conv operands,
    f32 accumulation, bf16 layer-2 activations)."""
    w1, b1, w2, b2 = params

    def rnd(t):
        return t.astype(jnp.bfloat16).astype(jnp.float32) if bf16_operands else t

    def block(x, w_hwio, b):
        w_oihw = jnp.transpose(w_hwio, (3, 2, 0, 1))
        y = lax.conv_general_dilated(
            rnd(x), rnd(w_oihw), window_strides=(1, 1),
            padding=[(PAD, PAD), (PAD, PAD)],
            dimension_numbers=("NCHW", "OIHW", "NCHW"),
            preferred_element_type=jnp.float32,
            precision=lax.Precision.HIGHEST)
        y = jnp.maximum(y + b.reshape(1, -1, 1, 1), 0.0)
        return lax.reduce_window(y, -jnp.inf, lax.max,
                                 (1, 1, 2, 2), (1, 1, 2, 2), "VALID")

    return block(block(x_nchw, w1, b1), w2, b2)


if __name__ == "__main__":
    key = jax.random.PRNGKey(0)
    kx, kp = jax.random.split(key)

    # Small MNIST-style input: batch=2, 3 channels, 16x16 spatial (NCHW).
    x = jax.random.normal(kx, (2, 3, 16, 16), jnp.float32)
    params = init_params(kp)

    out = jax.block_until_ready(mnist_features_forward(x, params))
    assert out.shape == (2, C2, 4, 4), out.shape

    # Tight check vs. a precision-matched reference (bf16 operands, f32 accumulation).
    ref_bf16 = jax.block_until_ready(_reference_forward(x, params, bf16_operands=True))
    assert jnp.allclose(out, ref_bf16, atol=1e-3, rtol=1e-3), \
        float(jnp.max(jnp.abs(out - ref_bf16)))

    # Loose sanity check vs. the full-f32 reference (bounds the bf16 operand drift).
    ref_f32 = jax.block_until_ready(_reference_forward(x, params, bf16_operands=False))
    assert jnp.allclose(out, ref_f32, atol=5e-2, rtol=5e-2), \
        float(jnp.max(jnp.abs(out - ref_f32)))

    print("KERNEL_OK")
</pallas_src>

<mosaic_0001>
module attributes {stable_mosaic.version = 11 : i64} {
  func.func @kernel(%arg0: i32, %arg1: memref<2x16x48xbf16, #tpu.memory_space<vmem>>, %arg2: memref<240x512xbf16, #tpu.memory_space<vmem>>, %arg3: memref<1x512xf32, #tpu.memory_space<vmem>>, %arg4: memref<1280x512xbf16, #tpu.memory_space<vmem>>, %arg5: memref<1x512xf32, #tpu.memory_space<vmem>>, %arg6: memref<2x1024xf32, #tpu.memory_space<vmem>>, %arg7: memref<2x20x48xbf16, #tpu.memory_space<vmem>>, %arg8: memref<2x12x256xbf16, #tpu.memory_space<vmem>>) attributes {dimension_semantics = [#tpu.dimension_semantics<parallel>], iteration_bounds = array<i64: 1>, scalar_prefetch = 0 : i64, scratch_operands = 2 : i64, tpu.core_type = #tpu.core_type<tc>, window_params = [{transform_indices = @transform_0, window_bounds = array<i64: 2, 16, 48>}, {pipeline_mode = #tpu.pipeline_mode<synchronous>, transform_indices = @transform_1, window_bounds = array<i64: 240, 512>}, {pipeline_mode = #tpu.pipeline_mode<synchronous>, transform_indices = @transform_2, window_bounds = array<i64: 1, 512>}, {pipeline_mode = #tpu.pipeline_mode<synchronous>, transform_indices = @transform_3, window_bounds = array<i64: 1280, 512>}, {pipeline_mode = #tpu.pipeline_mode<synchronous>, transform_indices = @transform_4, window_bounds = array<i64: 1, 512>}, {transform_indices = @transform_5, window_bounds = array<i64: 2, 1024>}]} {
    %cst = arith.constant 0.000000e+00 : bf16
    %0 = vector.broadcast %cst : bf16 to vector<2x2x48xbf16>
    %c0 = arith.constant 0 : index
    %c0_0 = arith.constant 0 : index
    %c0_1 = arith.constant 0 : index
    %1 = vector.load %arg7[%c0, %c0_0, %c0_1] : memref<2x20x48xbf16, #tpu.memory_space<vmem>>, vector<2x2x48xbf16>
    tpu.vector_store %arg7[%c0, %c0_0, %c0_1], %0 {strides = array<i32>} : memref<2x20x48xbf16, #tpu.memory_space<vmem>>, vector<2x2x48xbf16>,
    %cst_2 = arith.constant 0.000000e+00 : bf16
    %2 = vector.broadcast %cst_2 : bf16 to vector<2x2x48xbf16>
    %c0_3 = arith.constant 0 : index
    %c18 = arith.constant 18 : index
    %c0_4 = arith.constant 0 : index
    %3 = vector.load %arg7[%c0_3, %c18, %c0_4] : memref<2x20x48xbf16, #tpu.memory_space<vmem>>, vector<2x2x48xbf16>
    tpu.vector_store %arg7[%c0_3, %c18, %c0_4], %2 {strides = array<i32>} : memref<2x20x48xbf16, #tpu.memory_space<vmem>>, vector<2x2x48xbf16>,
    %c0_5 = arith.constant 0 : index
    %c0_6 = arith.constant 0 : index
    %c0_7 = arith.constant 0 : index
    %4 = vector.load %arg1[%c0_5, %c0_6, %c0_7] : memref<2x16x48xbf16, #tpu.memory_space<vmem>>, vector<2x16x48xbf16>
    %c0_8 = arith.constant 0 : index
    %c2 = arith.constant 2 : index
    %c0_9 = arith.constant 0 : index
    %5 = vector.load %arg7[%c0_8, %c2, %c0_9] : memref<2x20x48xbf16, #tpu.memory_space<vmem>>, vector<2x16x48xbf16>
    tpu.vector_store %arg7[%c0_8, %c2, %c0_9], %4 {strides = array<i32>} : memref<2x20x48xbf16, #tpu.memory_space<vmem>>, vector<2x16x48xbf16>,
    %c0_10 = arith.constant 0 : index
    %c0_11 = arith.constant 0 : index
    %c0_12 = arith.constant 0 : index
    %6 = vector.load %arg7[%c0_10, %c0_11, %c0_12] : memref<2x20x48xbf16, #tpu.memory_space<vmem>>, vector<2x16x48xbf16>
    %c0_13 = arith.constant 0 : index
    %c1 = arith.constant 1 : index
    %c0_14 = arith.constant 0 : index
    %7 = vector.load %arg7[%c0_13, %c1, %c0_14] : memref<2x20x48xbf16, #tpu.memory_space<vmem>>, vector<2x16x48xbf16>
    %c0_15 = arith.constant 0 : index
    %c2_16 = arith.constant 2 : index
    %c0_17 = arith.constant 0 : index
    %8 = vector.load %arg7[%c0_15, %c2_16, %c0_17] : memref<2x20x48xbf16, #tpu.memory_space<vmem>>, vector<2x16x48xbf16>
    %c0_18 = arith.constant 0 : index
    %c3 = arith.constant 3 : index
    %c0_19 = arith.constant 0 : index
    %9 = vector.load %arg7[%c0_18, %c3, %c0_19] : memref<2x20x48xbf16, #tpu.memory_space<vmem>>, vector<2x16x48xbf16>
    %c0_20 = arith.constant 0 : index
    %c4 = arith.constant 4 : index
    %c0_21 = arith.constant 0 : index
    %10 = vector.load %arg7[%c0_20, %c4, %c0_21] : memref<2x20x48xbf16, #tpu.memory_space<vmem>>, vector<2x16x48xbf16>
    %11 = tpu.concatenate %6, %7, %8, %9, %10 in 2 : vector<2x16x48xbf16>, vector<2x16x48xbf16>, vector<2x16x48xbf16>, vector<2x16x48xbf16>, vector<2x16x48xbf16> -> vector<2x16x240xbf16>
    %12 = vector.shape_cast %11 : vector<2x16x240xbf16> to vector<32x240xbf16>
    %c0_22 = arith.constant 0 : index
    %c0_23 = arith.constant 0 : index
    %13 = vector.load %arg2[%c0_22, %c0_23] : memref<240x512xbf16, #tpu.memory_space<vmem>>, vector<240x512xbf16>
    %cst_24 = arith.constant dense<0.000000e+00> : vector<32x512xf32>
    %14 = tpu.matmul %12, %13, %cst_24 {dimension_numbers = #tpu.dot_dimension_numbers<[1], [0], [0], [1], [0, 0, 1, 1], [], []>} : vector<32x240xbf16>, vector<240x512xbf16>, vector<32x512xf32> -> vector<32x512xf32>
    %c0_25 = arith.constant 0 : index
    %c0_26 = arith.constant 0 : index
    %15 = vector.load %arg3[%c0_25, %c0_26] : memref<1x512xf32, #tpu.memory_space<vmem>>, vector<1x512xf32>
    %16 = vector.broadcast %15 : vector<1x512xf32> to vector<32x512xf32>
    %17 = arith.addf %14, %16 : vector<32x512xf32>
    %cst_27 = arith.constant 0.000000e+00 : f32
    %18 = vector.broadcast %cst_27 : f32 to vector<32x512xf32>
    %19 = arith.maximumf %17, %18 : vector<32x512xf32>
    %20 = vector.extract_strided_slice %19 {offsets = [0, 0], sizes = [32, 256], strides = [1, 1]} : vector<32x512xf32> to vector<32x256xf32>
    %21 = vector.extract_strided_slice %19 {offsets = [0, 256], sizes = [32, 256], strides = [1, 1]} : vector<32x512xf32> to vector<32x256xf32>
    %22 = arith.maximumf %20, %21 : vector<32x256xf32>
    %23 = vector.shape_cast %22 : vector<32x256xf32> to vector<2x16x256xf32>
    %24 = vector.extract_strided_slice %23 {offsets = [0, 0, 0], sizes = [2, 1, 256], strides = [1, 1, 1]} : vector<2x16x256xf32> to vector<2x1x256xf32>
    %25 = vector.extract_strided_slice %23 {offsets = [0, 1, 0], sizes = [2, 1, 256], strides = [1, 1, 1]} : vector<2x16x256xf32> to vector<2x1x256xf32>
    %26 = arith.maximumf %24, %25 : vector<2x1x256xf32>
    %27 = vector.extract_strided_slice %23 {offsets = [0, 2, 0], sizes = [2, 1, 256], strides = [1, 1, 1]} : vector<2x16x256xf32> to vector<2x1x256xf32>
    %28 = vector.extract_strided_slice %23 {offsets = [0, 3, 0], sizes = [2, 1, 256], strides = [1, 1, 1]} : vector<2x16x256xf32> to vector<2x1x256xf32>
    %29 = arith.maximumf %27, %28 : vector<2x1x256xf32>
    %30 = vector.extract_strided_slice %23 {offsets = [0, 4, 0], sizes = [2, 1, 256], strides = [1, 1, 1]} : vector<2x16x256xf32> to vector<2x1x256xf32>
    %31 = vector.extract_strided_slice %23 {offsets = [0, 5, 0], sizes = [2, 1, 256], strides = [1, 1, 1]} : vector<2x16x256xf32> to vector<2x1x256xf32>
    %32 = arith.maximumf %30, %31 : vector<2x1x256xf32>
    %33 = vector.extract_strided_slice %23 {offsets = [0, 6, 0], sizes = [2, 1, 256], strides = [1, 1, 1]} : vector<2x16x256xf32> to vector<2x1x256xf32>
    %34 = vector.extract_strided_slice %23 {offsets = [0, 7, 0], sizes = [2, 1, 256], strides = [1, 1, 1]} : vector<2x16x256xf32> to vector<2x1x256xf32>
    %35 = arith.maximumf %33, %34 : vector<2x1x256xf32>
    %36 = vector.extract_strided_slice %23 {offsets = [0, 8, 0], sizes = [2, 1, 256], strides = [1, 1, 1]} : vector<2x16x256xf32> to vector<2x1x256xf32>
    %37 = vector.extract_strided_slice %23 {offsets = [0, 9, 0], sizes = [2, 1, 256], strides = [1, 1, 1]} : vector<2x16x256xf32> to vector<2x1x256xf32>
    %38 = arith.maximumf %36, %37 : vector<2x1x256xf32>
    %39 = vector.extract_strided_slice %23 {offsets = [0, 10, 0], sizes = [2, 1, 256], strides = [1, 1, 1]} : vector<2x16x256xf32> to vector<2x1x256xf32>
    %40 = vector.extract_strided_slice %23 {offsets = [0, 11, 0], sizes = [2, 1, 256], strides = [1, 1, 1]} : vector<2x16x256xf32> to vector<2x1x256xf32>
    %41 = arith.maximumf %39, %40 : vector<2x1x256xf32>
    %42 = vector.extract_strided_slice %23 {offsets = [0, 12, 0], sizes = [2, 1, 256], strides = [1, 1, 1]} : vector<2x16x256xf32> to vector<2x1x256xf32>
    %43 = vector.extract_strided_slice %23 {offsets = [0, 13, 0], sizes = [2, 1, 256], strides = [1, 1, 1]} : vector<2x16x256xf32> to vector<2x1x256xf32>
    %44 = arith.maximumf %42, %43 : vector<2x1x256xf32>
    %45 = vector.extract_strided_slice %23 {offsets = [0, 14, 0], sizes = [2, 1, 256], strides = [1, 1, 1]} : vector<2x16x256xf32> to vector<2x1x256xf32>
    %46 = vector.extract_strided_slice %23 {offsets = [0, 15, 0], sizes = [2, 1, 256], strides = [1, 1, 1]} : vector<2x16x256xf32> to vector<2x1x256xf32>
    %47 = arith.maximumf %45, %46 : vector<2x1x256xf32>
    %48 = tpu.concatenate %26, %29, %32, %35, %38, %41, %44, %47 in 1 : vector<2x1x256xf32>, vector<2x1x256xf32>, vector<2x1x256xf32>, vector<2x1x256xf32>, vector<2x1x256xf32>, vector<2x1x256xf32>, vector<2x1x256xf32>, vector<2x1x256xf32> -> vector<2x8x256xf32>
    %cst_28 = arith.constant 0.000000e+00 : bf16
    %49 = vector.broadcast %cst_28 : bf16 to vector<2x2x256xbf16>
    %c0_29 = arith.constant 0 : index
    %c0_30 = arith.constant 0 : index
    %c0_31 = arith.constant 0 : index
    %50 = vector.load %arg8[%c0_29, %c0_30, %c0_31] : memref<2x12x256xbf16, #tpu.memory_space<vmem>>, vector<2x2x256xbf16>
    tpu.vector_store %arg8[%c0_29, %c0_30, %c0_31], %49 {strides = array<i32>} : memref<2x12x256xbf16, #tpu.memory_space<vmem>>, vector<2x2x256xbf16>,
    %cst_32 = arith.constant 0.000000e+00 : bf16
    %51 = vector.broadcast %cst_32 : bf16 to vector<2x2x256xbf16>
    %c0_33 = arith.constant 0 : index
    %c10 = arith.constant 10 : index
    %c0_34 = arith.constant 0 : index
    %52 = vector.load %arg8[%c0_33, %c10, %c0_34] : memref<2x12x256xbf16, #tpu.memory_space<vmem>>, vector<2x2x256xbf16>
    tpu.vector_store %arg8[%c0_33, %c10, %c0_34], %51 {strides = array<i32>} : memref<2x12x256xbf16, #tpu.memory_space<vmem>>, vector<2x2x256xbf16>,
    %53 = arith.truncf %48 : vector<2x8x256xf32> to vector<2x8x256xbf16>
    %c0_35 = arith.constant 0 : index
    %c2_36 = arith.constant 2 : index
    %c0_37 = arith.constant 0 : index
    %54 = vector.load %arg8[%c0_35, %c2_36, %c0_37] : memref<2x12x256xbf16, #tpu.memory_space<vmem>>, vector<2x8x256xbf16>
    tpu.vector_store %arg8[%c0_35, %c2_36, %c0_37], %53 {strides = array<i32>} : memref<2x12x256xbf16, #tpu.memory_space<vmem>>, vector<2x8x256xbf16>,
    %c0_38 = arith.constant 0 : index
    %c0_39 = arith.constant 0 : index
    %c0_40 = arith.constant 0 : index
    %55 = vector.load %arg8[%c0_38, %c0_39, %c0_40] : memref<2x12x256xbf16, #tpu.memory_space<vmem>>, vector<2x8x256xbf16>
    %c0_41 = arith.constant 0 : index
    %c1_42 = arith.constant 1 : index
    %c0_43 = arith.constant 0 : index
    %56 = vector.load %arg8[%c0_41, %c1_42, %c0_43] : memref<2x12x256xbf16, #tpu.memory_space<vmem>>, vector<2x8x256xbf16>
    %c0_44 = arith.constant 0 : index
    %c2_45 = arith.constant 2 : index
    %c0_46 = arith.constant 0 : index
    %57 = vector.load %arg8[%c0_44, %c2_45, %c0_46] : memref<2x12x256xbf16, #tpu.memory_space<vmem>>, vector<2x8x256xbf16>
    %c0_47 = arith.constant 0 : index
    %c3_48 = arith.constant 3 : index
    %c0_49 = arith.constant 0 : index
    %58 = vector.load %arg8[%c0_47, %c3_48, %c0_49] : memref<2x12x256xbf16, #tpu.memory_space<vmem>>, vector<2x8x256xbf16>
    %c0_50 = arith.constant 0 : index
    %c4_51 = arith.constant 4 : index
    %c0_52 = arith.constant 0 : index
    %59 = vector.load %arg8[%c0_50, %c4_51, %c0_52] : memref<2x12x256xbf16, #tpu.memory_space<vmem>>, vector<2x8x256xbf16>
    %60 = tpu.concatenate %55, %56, %57, %58, %59 in 2 : vector<2x8x256xbf16>, vector<2x8x256xbf16>, vector<2x8x256xbf16>, vector<2x8x256xbf16>, vector<2x8x256xbf16> -> vector<2x8x1280xbf16>
    %61 = vector.shape_cast %60 : vector<2x8x1280xbf16> to vector<16x1280xbf16>
    %c0_53 = arith.constant 0 : index
    %c0_54 = arith.constant 0 : index
    %62 = vector.load %arg4[%c0_53, %c0_54] : memref<1280x512xbf16, #tpu.memory_space<vmem>>, vector<1280x512xbf16>
    %cst_55 = arith.constant dense<0.000000e+00> : vector<16x512xf32>
    %63 = tpu.matmul %61, %62, %cst_55 {dimension_numbers = #tpu.dot_dimension_numbers<[1], [0], [0], [1], [0, 0, 1, 1], [], []>} : vector<16x1280xbf16>, vector<1280x512xbf16>, vector<16x512xf32> -> vector<16x512xf32>
    %c0_56 = arith.constant 0 : index
    %c0_57 = arith.constant 0 : index
    %64 = vector.load %arg5[%c0_56, %c0_57] : memref<1x512xf32, #tpu.memory_space<vmem>>, vector<1x512xf32>
    %65 = vector.broadcast %64 : vector<1x512xf32> to vector<16x512xf32>
    %66 = arith.addf %63, %65 : vector<16x512xf32>
    %cst_58 = arith.constant 0.000000e+00 : f32
    %67 = vector.broadcast %cst_58 : f32 to vector<16x512xf32>
    %68 = arith.maximumf %66, %67 : vector<16x512xf32>
    %69 = vector.extract_strided_slice %68 {offsets = [0, 0], sizes = [16, 256], strides = [1, 1]} : vector<16x512xf32> to vector<16x256xf32>
    %70 = vector.extract_strided_slice %68 {offsets = [0, 256], sizes = [16, 256], strides = [1, 1]} : vector<16x512xf32> to vector<16x256xf32>
    %71 = arith.maximumf %69, %70 : vector<16x256xf32>
    %72 = vector.shape_cast %71 : vector<16x256xf32> to vector<2x8x256xf32>
    %73 = vector.extract_strided_slice %72 {offsets = [0, 0, 0], sizes = [2, 1, 256], strides = [1, 1, 1]} : vector<2x8x256xf32> to vector<2x1x256xf32>
    %74 = vector.shape_cast %73 : vector<2x1x256xf32> to vector<2x256xf32>
    %75 = vector.extract_strided_slice %72 {offsets = [0, 1, 0], sizes = [2, 1, 256], strides = [1, 1, 1]} : vector<2x8x256xf32> to vector<2x1x256xf32>
    %76 = vector.shape_cast %75 : vector<2x1x256xf32> to vector<2x256xf32>
    %77 = arith.maximumf %74, %76 : vector<2x256xf32>
    %c0_59 = arith.constant 0 : index
    %c0_60 = arith.constant 0 : index
    %78 = vector.load %arg6[%c0_59, %c0_60] : memref<2x1024xf32, #tpu.memory_space<vmem>>, vector<2x256xf32>
    tpu.vector_store %arg6[%c0_59, %c0_60], %77 {strides = array<i32>} : memref<2x1024xf32, #tpu.memory_space<vmem>>, vector<2x256xf32>,
    %79 = vector.extract_strided_slice %72 {offsets = [0, 2, 0], sizes = [2, 1, 256], strides = [1, 1, 1]} : vector<2x8x256xf32> to vector<2x1x256xf32>
    %80 = vector.shape_cast %79 : vector<2x1x256xf32> to vector<2x256xf32>
    %81 = vector.extract_strided_slice %72 {offsets = [0, 3, 0], sizes = [2, 1, 256], strides = [1, 1, 1]} : vector<2x8x256xf32> to vector<2x1x256xf32>
    %82 = vector.shape_cast %81 : vector<2x1x256xf32> to vector<2x256xf32>
    %83 = arith.maximumf %80, %82 : vector<2x256xf32>
    %c0_61 = arith.constant 0 : index
    %c256 = arith.constant 256 : index
    %84 = vector.load %arg6[%c0_61, %c256] : memref<2x1024xf32, #tpu.memory_space<vmem>>, vector<2x256xf32>
    tpu.vector_store %arg6[%c0_61, %c256], %83 {strides = array<i32>} : memref<2x1024xf32, #tpu.memory_space<vmem>>, vector<2x256xf32>,
    %85 = vector.extract_strided_slice %72 {offsets = [0, 4, 0], sizes = [2, 1, 256], strides = [1, 1, 1]} : vector<2x8x256xf32> to vector<2x1x256xf32>
    %86 = vector.shape_cast %85 : vector<2x1x256xf32> to vector<2x256xf32>
    %87 = vector.extract_strided_slice %72 {offsets = [0, 5, 0], sizes = [2, 1, 256], strides = [1, 1, 1]} : vector<2x8x256xf32> to vector<2x1x256xf32>
    %88 = vector.shape_cast %87 : vector<2x1x256xf32> to vector<2x256xf32>
    %89 = arith.maximumf %86, %88 : vector<2x256xf32>
    %c0_62 = arith.constant 0 : index
    %c512 = arith.constant 512 : index
    %90 = vector.load %arg6[%c0_62, %c512] : memref<2x1024xf32, #tpu.memory_space<vmem>>, vector<2x256xf32>
    tpu.vector_store %arg6[%c0_62, %c512], %89 {strides = array<i32>} : memref<2x1024xf32, #tpu.memory_space<vmem>>, vector<2x256xf32>,
    %91 = vector.extract_strided_slice %72 {offsets = [0, 6, 0], sizes = [2, 1, 256], strides = [1, 1, 1]} : vector<2x8x256xf32> to vector<2x1x256xf32>
    %92 = vector.shape_cast %91 : vector<2x1x256xf32> to vector<2x256xf32>
    %93 = vector.extract_strided_slice %72 {offsets = [0, 7, 0], sizes = [2, 1, 256], strides = [1, 1, 1]} : vector<2x8x256xf32> to vector<2x1x256xf32>
    %94 = vector.shape_cast %93 : vector<2x1x256xf32> to vector<2x256xf32>
    %95 = arith.maximumf %92, %94 : vector<2x256xf32>
    %c0_63 = arith.constant 0 : index
    %c768 = arith.constant 768 : index
    %96 = vector.load %arg6[%c0_63, %c768] : memref<2x1024xf32, #tpu.memory_space<vmem>>, vector<2x256xf32>
    tpu.vector_store %arg6[%c0_63, %c768], %95 {strides = array<i32>} : memref<2x1024xf32, #tpu.memory_space<vmem>>, vector<2x256xf32>,
    return
  }
  func.func @transform_0(%arg0: i32) -> (i32, i32, i32) {
    %c0_i32 = arith.constant 0 : i32
    %c0_i32_0 = arith.constant 0 : i32
    %c0_i32_1 = arith.constant 0 : i32
    return %arg0, %c0_i32, %c0_i32_0 : i32, i32, i32
  }
  func.func @transform_1(%arg0: i32) -> (i32, i32) {
    %c0_i32 = arith.constant 0 : i32
    %c0_i32_0 = arith.constant 0 : i32
    %c0_i32_1 = arith.constant 0 : i32
    return %c0_i32, %c0_i32_0 : i32, i32
  }
  func.func @transform_2(%arg0: i32) -> (i32, i32) {
    %c0_i32 = arith.constant 0 : i32
    %c0_i32_0 = arith.constant 0 : i32
    %c0_i32_1 = arith.constant 0 : i32
    return %c0_i32, %c0_i32_0 : i32, i32
  }
  func.func @transform_3(%arg0: i32) -> (i32, i32) {
    %c0_i32 = arith.constant 0 : i32
    %c0_i32_0 = arith.constant 0 : i32
    %c0_i32_1 = arith.constant 0 : i32
    return %c0_i32, %c0_i32_0 : i32, i32
  }
  func.func @transform_4(%arg0: i32) -> (i32, i32) {
    %c0_i32 = arith.constant 0 : i32
    %c0_i32_0 = arith.constant 0 : i32
    %c0_i32_1 = arith.constant 0 : i32
    return %c0_i32, %c0_i32_0 : i32, i32
  }
  func.func @transform_5(%arg0: i32) -> (i32, i32) {
    %c0_i32 = arith.constant 0 : i32
    %c0_i32_0 = arith.constant 0 : i32
    return %arg0, %c0_i32 : i32, i32
  }
}

</mosaic_0001>

<llo_original>
// kernel: tpu_custom_call.1
$region0: #{tpu_custom_call.1}
  #allocation0 [shape = 'u32[]', space=smem, size = 0x4, offset = 0x4, fixed_abs, tag = 'smem constant byte address 0x4 - core index']
  #allocation1 [shape = 'u32[144,128]{1,0:T(1,128)}', space=vmem, size = 0x12000, scoped, tag = 'internal scratch']
  #allocation2 [shape = 'bf16[2,20,48]{2,1,0:T(8,128)(2,1)}', space=vmem, size = 0x3000, scoped, tag = 'scratch operand']
  #allocation3 [shape = 'bf16[2,12,256]{2,1,0:T(8,128)(2,1)}', space=vmem, size = 0x4000, scoped, tag = 'scratch operand']
  %s0 = inlined_call_operand.hbm [shape: bf16[2,16,48], index: 0, kind: input, shape index: {}]
  %s1 = inlined_call_operand.hbm [shape: bf16[240,512], index: 1, kind: input, shape index: {}]
  %s2 = inlined_call_operand.hbm [shape: f32[1,512], index: 2, kind: input, shape index: {}]
  %s3 = inlined_call_operand.hbm [shape: bf16[1280,512], index: 3, kind: input, shape index: {}]
  %s4 = inlined_call_operand.hbm [shape: f32[1,512], index: 4, kind: input, shape index: {}]
  %s5 = inlined_call_operand.hbm [shape: f32[2,1024], index: 5, kind: output, shape index: {}]
  %s6 = sld [smem:[#allocation0]]
  $region50: #{tpu_custom_call.1} parent=0
    _
  %s8 = ssub.s32 1, %s6
  %s9 = scalar_select 0, %s8, %s6
  $region1: #{tpu_custom_call.1} parent=0
    #allocation4 [shape = 'u8[8192]{0}', space=vmem, size = 0x2000, scoped, tag = 'input window, operand 0, single buffered']
    #allocation5 [shape = 's32[1]{0}', space=sflag, size = 0x4, scoped, tag = 'scoped memory for tpu_custom_call.1']
    #allocation6 [shape = 's32[1]{0}', space=sflag, size = 0x4, scoped, tag = 'scoped memory for tpu_custom_call.1']
    #allocation7 [shape = 'u8[245760]{0}', space=vmem, size = 0x3c000, scoped, tag = 'input window, operand 1, single buffered']
    #allocation8 [shape = 's32[1]{0}', space=sflag, size = 0x4, scoped, tag = 'scoped memory for tpu_custom_call.1']
    #allocation9 [shape = 'u8[2048]{0}', space=vmem, size = 0x800, scoped, tag = 'input window, operand 2, single buffered']
    #allocation10 [shape = 'u8[1310720]{0}', space=vmem, size = 0x140000, scoped, tag = 'input window, operand 3, single buffered']
    #allocation11 [shape = 's32[1]{0}', space=sflag, size = 0x4, scoped, tag = 'scoped memory for tpu_custom_call.1']
    #allocation12 [shape = 'u8[2048]{0}', space=vmem, size = 0x800, scoped, tag = 'input window, operand 4, single buffered']
    #allocation13 [shape = 'u8[8192]{0}', space=vmem, size = 0x2000, scoped, tag = 'output window, operand 0, single buffered']
    %10 = vsyncpa [#allocation5], 0
    %11 = vsyncpa [#allocation8], 0
    %12 = vsyncpa [#allocation11], 0
    %13 = vsyncpa [#allocation6], 0
    // Predicated region
    $region2: #{tpu_custom_call.1} parent=1 // pred_check
      _
    $region3: #{tpu_custom_call.1} parent=1 // pred_check_branch
      %15 = sbr.rel (0) target = $region5
    $region4: #{tpu_custom_call.1} parent=1 // pred_region
      %s17 = ssub.s32 256, 256
      %18 = vsyncadd [#allocation5], %s17
      %s19 = sshll.u32 [#allocation4], 4
      %s20 = int_to_ptr.vmem [resolvable:$true] %s19
      %25 = dma.hbm_to_vmem [thread:$0]  %s0, 256, %s20, [#allocation5], 64, 64, 4
    $region5: #{tpu_custom_call.1} parent=1 // pred_fallthru
      _
    // Predicated region
    $region6: #{tpu_custom_call.1} parent=1 // pred_check
      _
    $region7: #{tpu_custom_call.1} parent=1 // pred_check_branch
      %27 = sbr.rel (0) target = $region9
    $region8: #{tpu_custom_call.1} parent=1 // pred_region
      %s29 = ssub.s32 7680, 7680
      %30 = vsyncadd [#allocation8], %s29
      %s31 = sshll.u32 [#allocation7], 4
      %s32 = int_to_ptr.vmem [resolvable:$true] %s31
      %37 = dma.hbm_to_vmem [thread:$0]  %s1, 7680, %s32, [#allocation8], 256, 256, 16
    $region9: #{tpu_custom_call.1} parent=1 // pred_fallthru
      _
    // Predicated region
    $region10: #{tpu_custom_call.1} parent=1 // pred_check
      _
    $region11: #{tpu_custom_call.1} parent=1 // pred_check_branch
      %39 = sbr.rel (0) target = $region13
    $region12: #{tpu_custom_call.1} parent=1 // pred_region
      %s41 = ssub.s32 64, 64
      %42 = vsyncadd [#allocation8], %s41
      %s44 = sshll.u32 [#allocation9], 4
      %s45 = int_to_ptr.vmem [resolvable:$true] %s44
      %47 = dma.hbm_to_vmem [thread:$0]  %s2, 64, %s45, [#allocation8]
    $region13: #{tpu_custom_call.1} parent=1 // pred_fallthru
      _
    // Predicated region
    $region14: #{tpu_custom_call.1} parent=1 // pred_check
      _
    $region15: #{tpu_custom_call.1} parent=1 // pred_check_branch
      %49 = sbr.rel (0) target = $region17
    $region16: #{tpu_custom_call.1} parent=1 // pred_region
      %s51 = ssub.s32 40960, 40960
      %52 = vsyncadd [#allocation11], %s51
      %s53 = sshll.u32 [#allocation10], 4
      %s54 = int_to_ptr.vmem [resolvable:$true] %s53
      %59 = dma.hbm_to_vmem [thread:$0]  %s3, 40960, %s54, [#allocation11], 256, 256, 16
    $region17: #{tpu_custom_call.1} parent=1 // pred_fallthru
      _
    // Predicated region
    $region18: #{tpu_custom_call.1} parent=1 // pred_check
      _
    $region19: #{tpu_custom_call.1} parent=1 // pred_check_branch
      %61 = sbr.rel (0) target = $region21
    $region20: #{tpu_custom_call.1} parent=1 // pred_region
      %s63 = ssub.s32 64, 64
      %64 = vsyncadd [#allocation11], %s63
      %s66 = sshll.u32 [#allocation12], 4
      %s67 = int_to_ptr.vmem [resolvable:$true] %s66
      %69 = dma.hbm_to_vmem [thread:$0]  %s4, 64, %s67, [#allocation11]
    $region21: #{tpu_custom_call.1} parent=1 // pred_fallthru
      _
    // Predicated region
    $region22: #{tpu_custom_call.1} parent=1 // pred_check
      _
    $region23: #{tpu_custom_call.1} parent=1 // pred_check_branch
      %71 = sbr.rel (0) target = $region25
    $region24: #{tpu_custom_call.1} parent=1 // pred_region
      %72 = dma.done [#allocation5], 256
    $region25: #{tpu_custom_call.1} parent=1 // pred_fallthru
      _
    // Predicated region
    $region26: #{tpu_custom_call.1} parent=1 // pred_check
      _
    $region27: #{tpu_custom_call.1} parent=1 // pred_check_branch
      %74 = sbr.rel (0) target = $region29
    $region28: #{tpu_custom_call.1} parent=1 // pred_region
      %75 = dma.done [#allocation8], 7680
    $region29: #{tpu_custom_call.1} parent=1 // pred_fallthru
      _
    // Predicated region
    $region30: #{tpu_custom_call.1} parent=1 // pred_check
      _
    $region31: #{tpu_custom_call.1} parent=1 // pred_check_branch
      %77 = sbr.rel (0) target = $region33
    $region32: #{tpu_custom_call.1} parent=1 // pred_region
      %78 = dma.done [#allocation8], 64
    $region33: #{tpu_custom_call.1} parent=1 // pred_fallthru
      _
    // Predicated region
    $region34: #{tpu_custom_call.1} parent=1 // pred_check
      _
    $region35: #{tpu_custom_call.1} parent=1 // pred_check_branch
      %80 = sbr.rel (0) target = $region37
    $region36: #{tpu_custom_call.1} parent=1 // pred_region
      %81 = dma.done [#allocation11], 40960
    $region37: #{tpu_custom_call.1} parent=1 // pred_fallthru
      _
    // Predicated region
    $region38: #{tpu_custom_call.1} parent=1 // pred_check
      _
    $region39: #{tpu_custom_call.1} parent=1 // pred_check_branch
      %83 = sbr.rel (0) target = $region41
    $region40: #{tpu_custom_call.1} parent=1 // pred_region
      %84 = dma.done [#allocation11], 64
    $region41: #{tpu_custom_call.1} parent=1 // pred_fallthru
      _
    %vm86 = vcmask 385024
    %87 = vst.msk [vmem:[#allocation2] sm:$0x1] %vm86, 0
    %88 = vst.msk [vmem:[#allocation2 + $0xc] sm:$0x1] %vm86, 0
    %vm89 = vcmask 386049
    %90 = vst.msk [vmem:[#allocation2 + $0x8] sm:$0x2] %vm89, 0
    %91 = vst.msk [vmem:[#allocation2 + $0x14] sm:$0x2] %vm89, 0
    %v92 = vld [vmem:[#allocation4] sm:$0xf]
    %v93 = vld [vmem:[#allocation4 + $0x4] sm:$0xf]
    %v94 = vld [vmem:[#allocation4 + $0x8] sm:$0xf]
    %v95 = vld [vmem:[#allocation4 + $0xc] sm:$0xf]
    %vm100 = vcmask 1040384
    %vm101 = vcmask 1044484
    %vm102 = vmor %vm100, %vm101
    %v103 = vrot.slane %v92, 7
    %v104 = vrot.slane %v103, 4
    %v105 = vrot.slane %v93, 7
    %v106 = vsel %vm102, %v104, %v105
    %v107 = vrot.slane %v105, 4
    %v108 = vrot.slane %v94, 7
    %v109 = vrot.slane %v108, 4
    %v110 = vrot.slane %v95, 7
    %v111 = vsel %vm102, %v109, %v110
    %v112 = vrot.slane %v110, 4
    %vm119 = vcmask 388097
    %120 = vst.msk [vmem:[#allocation2] sm:$0xe] %vm119, %v103
    %vm121 = vcmask 388096
    %122 = vst.msk [vmem:[#allocation2 + $0x4] sm:$0xf] %vm121, %v106
    %123 = vst.msk [vmem:[#allocation2 + $0x8] sm:$0x1] %vm86, %v107
    %124 = vst.msk [vmem:[#allocation2 + $0xc] sm:$0xe] %vm119, %v108
    %125 = vst.msk [vmem:[#allocation2 + $0x10] sm:$0xf] %vm121, %v111
    %126 = vst.msk [vmem:[#allocation2 + $0x14] sm:$0x1] %vm86, %v112
    %v127 = vld [vmem:[#allocation2] sm:$0xf]
    %v128 = vld [vmem:[#allocation2 + $0x4] sm:$0xf]
    %v129 = vld [vmem:[#allocation2 + $0xc] sm:$0xf]
    %v130 = vld [vmem:[#allocation2 + $0x10] sm:$0xf]
    %v131 = vld [vmem:[#allocation2 + $0x8] sm:$0x1]
    %v132 = vld [vmem:[#allocation2 + $0x14] sm:$0x1]
    %v133 = vld [vmem:[#allocation2] sm:$0xe]
    %v134 = vld [vmem:[#allocation2 + $0xc] sm:$0xe]
    %v135 = vld [vmem:[#allocation2 + $0x8] sm:$0x3]
    %v136 = vld [vmem:[#allocation2 + $0x14] sm:$0x3]
    %v137 = vld [vmem:[#allocation2] sm:$0xc]
    %v138 = vld [vmem:[#allocation2 + $0xc] sm:$0xc]
    %v143 = vunpack.c.l.b16 %v127
    %v144 = vunpack.c.l.b16 %v128
    %v145 = vunpack.c.l.b16 %v129
    %v146 = vunpack.c.l.b16 %v130
    %v147 = vpack.c.b16 %v144, %v143
    %v148 = vpack.c.b16 %v146, %v145
    %v151 = vunpack.c.l.b16 %v131
    %v152 = vunpack.c.l.b16 %v132
    %v153 = vpack.c.b16 %v151, %v151
    %v154 = vpack.c.b16 %v152, %v152
    %vm155 = vsmask.f32 7424
    %v157 = vshrl.u32 %v147, 16
    %v159 = vshll.u32 %v147, 16
    %v161 = vrot.slane %v159, 1
    %v162 = vor.u32 %v157, %v161
    %v164 = vshll.u32 %v153, 16
    %v166 = vrot.slane %v164, 1
    %v167 = vsel %vm155, %v162, %v166
    %v169 = vshrl.u32 %v148, 16
    %v171 = vshll.u32 %v148, 16
    %v173 = vrot.slane %v171, 1
    %v174 = vor.u32 %v169, %v173
    %v176 = vshll.u32 %v154, 16
    %v178 = vrot.slane %v176, 1
    %v179 = vsel %vm155, %v174, %v178
    %180 = vrot.lane.b32.xlu0 %v167, 48
    %v181 = vpop.permute.xlu0 %180
    %182 = vrot.lane.b32.xlu0 %v179, 48
    %v183 = vpop.permute.xlu0 %182
    %v186 = vunpack.c.l.b16 %v133
    %v187 = vunpack.c.l.b16 %v134
    %v188 = vpack.c.b16 %v144, %v186
    %v189 = vpack.c.b16 %v146, %v187
    %vm190 = vcmask 1046528
    %v191 = vrot.slane %v188, 1
    %v192 = vrot.slane %v153, 1
    %v193 = vsel %vm190, %v191, %v192
    %v194 = vrot.slane %v189, 1
    %v195 = vrot.slane %v154, 1
    %v196 = vsel %vm190, %v194, %v195
    %197 = vrot.lane.b32.xlu0 %v193, 96
    %v198 = vpop.permute.xlu0 %197
    %199 = vrot.lane.b32.xlu0 %v196, 96
    %v200 = vpop.permute.xlu0 %199
    %v203 = vunpack.c.l.b16 %v135
    %v204 = vunpack.c.l.b16 %v136
    %v205 = vpack.c.b16 %v203, %v203
    %v206 = vpack.c.b16 %v204, %v204
    %vm207 = vsmask.f32 6400
    %v209 = vshrl.u32 %v188, 16
    %v211 = vrot.slane %v209, 1
    %v212 = vshll.u32 %v188, 16
    %v214 = vrot.slane %v212, 2
    %v215 = vor.u32 %v211, %v214
    %v217 = vshrl.u32 %v205, 16
    %v219 = vrot.slane %v217, 1
    %v220 = vshll.u32 %v205, 16
    %v222 = vrot.slane %v220, 2
    %v223 = vor.u32 %v219, %v222
    %v224 = vsel %vm207, %v215, %v223
    %v226 = vshrl.u32 %v189, 16
    %v228 = vrot.slane %v226, 1
    %v229 = vshll.u32 %v189, 16
    %v231 = vrot.slane %v229, 2
    %v232 = vor.u32 %v228, %v231
    %v234 = vshrl.u32 %v206, 16
    %v236 = vrot.slane %v234, 1
    %v237 = vshll.u32 %v206, 16
    %v239 = vrot.slane %v237, 2
    %v240 = vor.u32 %v236, %v239
    %v241 = vsel %vm207, %v232, %v240
    %242 = vrot.lane.b32.xlu0 %v224, 16
    %v243 = vpop.permute.xlu0 %242
    %244 = vrot.lane.b32.xlu0 %v241, 16
    %v245 = vpop.permute.xlu0 %244
    %v248 = vunpack.c.l.b16 %v137
    %v249 = vunpack.c.l.b16 %v138
    %v250 = vpack.c.b16 %v144, %v248
    %v251 = vpack.c.b16 %v146, %v249
    %vm252 = vcmask 1045504
    %v253 = vrot.slane %v250, 2
    %v254 = vrot.slane %v205, 2
    %v255 = vsel %vm252, %v253, %v254
    %v256 = vrot.slane %v251, 2
    %v257 = vrot.slane %v206, 2
    %v258 = vsel %vm252, %v256, %v257
    %259 = vrot.lane.b32.xlu0 %v255, 64
    %v260 = vpop.permute.xlu0 %259
    %261 = vrot.lane.b32.xlu0 %v258, 64
    %v262 = vpop.permute.xlu0 %261
    %vm263 = vcmask 392192
    %v265 = vsel %vm263, %v147, %v181
    %v267 = vsel %vm263, %v148, %v183
    %vm268 = vcmask 785408
    %v270 = vsel %vm268, %v265, %v198
    %v273 = vsel %vm268, %v267, %v200
    %vm275 = vcmask 130048
    %v277 = vsel %vm275, %v198, %v243
    %v279 = vsel %vm275, %v200, %v245
    %vm280 = vcmask 523264
    %v282 = vsel %vm280, %v277, %v260
    %v284 = vsel %vm280, %v279, %v262
    %v285 = vld [vmem:[#allocation7] sm:$0xff]
    %v286 = vld [vmem:[#allocation7 + $0x8] sm:$0xff]
    %v287 = vld [vmem:[#allocation7 + $0x10] sm:$0xff]
    %v288 = vld [vmem:[#allocation7 + $0x18] sm:$0xff]
    %v289 = vld [vmem:[#allocation7 + $0x20] sm:$0xff]
    %v290 = vld [vmem:[#allocation7 + $0x28] sm:$0xff]
    %v291 = vld [vmem:[#allocation7 + $0x30] sm:$0xff]
    %v292 = vld [vmem:[#allocation7 + $0x38] sm:$0xff]
    %v293 = vld [vmem:[#allocation7 + $0x40] sm:$0xff]
    %v294 = vld [vmem:[#allocation7 + $0x48] sm:$0xff]
    %v295 = vld [vmem:[#allocation7 + $0x50] sm:$0xff]
    %v296 = vld [vmem:[#allocation7 + $0x58] sm:$0xff]
    %v297 = vld [vmem:[#allocation7 + $0x60] sm:$0xff]
    %v298 = vld [vmem:[#allocation7 + $0x68] sm:$0xff]
    %v299 = vld [vmem:[#allocation7 + $0x70] sm:$0xff]
    %v300 = vld [vmem:[#allocation7 + $0x78] sm:$0xff]
    %v301 = vld [vmem:[#allocation7 + $0x80] sm:$0xff]
    %v302 = vld [vmem:[#allocation7 + $0x88] sm:$0xff]
    %v303 = vld [vmem:[#allocation7 + $0x90] sm:$0xff]
    %v304 = vld [vmem:[#allocation7 + $0x98] sm:$0xff]
    %v305 = vld [vmem:[#allocation7 + $0xa0] sm:$0xff]
    %v306 = vld [vmem:[#allocation7 + $0xa8] sm:$0xff]
    %v307 = vld [vmem:[#allocation7 + $0xb0] sm:$0xff]
    %v308 = vld [vmem:[#allocation7 + $0xb8] sm:$0xff]
    %v309 = vld [vmem:[#allocation7 + $0xc0] sm:$0xff]
    %v310 = vld [vmem:[#allocation7 + $0xc8] sm:$0xff]
    %v311 = vld [vmem:[#allocation7 + $0xd0] sm:$0xff]
    %v312 = vld [vmem:[#allocation7 + $0xd8] sm:$0xff]
    %v313 = vld [vmem:[#allocation7 + $0xe0] sm:$0xff]
    %v314 = vld [vmem:[#allocation7 + $0xe8] sm:$0xff]
    %v315 = vld [vmem:[#allocation7 + $0xf0] sm:$0xff]
    %v316 = vld [vmem:[#allocation7 + $0xf8] sm:$0xff]
    %v317 = vld [vmem:[#allocation7 + $0x100] sm:$0xff]
    %v318 = vld [vmem:[#allocation7 + $0x108] sm:$0xff]
    %v319 = vld [vmem:[#allocation7 + $0x110] sm:$0xff]
    %v320 = vld [vmem:[#allocation7 + $0x118] sm:$0xff]
    %v321 = vld [vmem:[#allocation7 + $0x120] sm:$0xff]
    %v322 = vld [vmem:[#allocation7 + $0x128] sm:$0xff]
    %v323 = vld [vmem:[#allocation7 + $0x130] sm:$0xff]
    %v324 = vld [vmem:[#allocation7 + $0x138] sm:$0xff]
    %v325 = vld [vmem:[#allocation7 + $0x140] sm:$0xff]
    %v326 = vld [vmem:[#allocation7 + $0x148] sm:$0xff]
    %v327 = vld [vmem:[#allocation7 + $0x150] sm:$0xff]
    %v328 = vld [vmem:[#allocation7 + $0x158] sm:$0xff]
    %v329 = vld [vmem:[#allocation7 + $0x160] sm:$0xff]
    %v330 = vld [vmem:[#allocation7 + $0x168] sm:$0xff]
    %v331 = vld [vmem:[#allocation7 + $0x170] sm:$0xff]
    %v332 = vld [vmem:[#allocation7 + $0x178] sm:$0xff]
    %v333 = vld [vmem:[#allocation7 + $0x180] sm:$0xff]
    %v334 = vld [vmem:[#allocation7 + $0x188] sm:$0xff]
    %v335 = vld [vmem:[#allocation7 + $0x190] sm:$0xff]
    %v336 = vld [vmem:[#allocation7 + $0x198] sm:$0xff]
    %v337 = vld [vmem:[#allocation7 + $0x1a0] sm:$0xff]
    %v338 = vld [vmem:[#allocation7 + $0x1a8] sm:$0xff]
    %v339 = vld [vmem:[#allocation7 + $0x1b0] sm:$0xff]
    %v340 = vld [vmem:[#allocation7 + $0x1b8] sm:$0xff]
    %v341 = vld [vmem:[#allocation7 + $0x1c0] sm:$0xff]
    %v342 = vld [vmem:[#allocation7 + $0x1c8] sm:$0xff]
    %v343 = vld [vmem:[#allocation7 + $0x1d0] sm:$0xff]
    %v344 = vld [vmem:[#allocation7 + $0x1d8] sm:$0xff]
    %v345 = vld [vmem:[#allocation9] sm:$0xf]
    %v347 = vlaneseq
    %v348 = vshrl.u32 %v347, 7
    %v349 = vsub.s32 0, %v348
    %v350 = vrot.slane %v345, %v349
    %v351 = vlaneseq
    %v352 = vshrl.u32 %v351, 7
    %v353 = vsub.s32 1, %v352
    %v354 = vrot.slane %v345, %v353
    %v355 = vlaneseq
    %v356 = vshrl.u32 %v355, 7
    %v357 = vsub.s32 2, %v356
    %v358 = vrot.slane %v345, %v357
    %v359 = vlaneseq
    %v360 = vshrl.u32 %v359, 7
    %v361 = vsub.s32 3, %v360
    %v362 = vrot.slane %v345, %v361
    %v427 = vunpack.c.l.b16 %v285
    %v428 = vunpack.c.h.b16 %v285
    %v429 = vunpack.c.l.b16 %v286
    %v430 = vunpack.c.h.b16 %v286
    %v431 = vunpack.c.l.b16 %v287
    %v432 = vunpack.c.h.b16 %v287
    %v433 = vunpack.c.l.b16 %v288
    %v434 = vunpack.c.h.b16 %v288
    %v435 = vunpack.c.l.b16 %v289
    %v436 = vunpack.c.h.b16 %v289
    %v437 = vunpack.c.l.b16 %v290
    %v438 = vunpack.c.h.b16 %v290
    %v439 = vunpack.c.l.b16 %v291
    %v440 = vunpack.c.h.b16 %v291
    %v441 = vunpack.c.l.b16 %v292
    %v442 = vunpack.c.h.b16 %v292
    %v443 = vunpack.c.l.b16 %v293
    %v444 = vunpack.c.h.b16 %v293
    %v445 = vunpack.c.l.b16 %v294
    %v446 = vunpack.c.h.b16 %v294
    %v447 = vunpack.c.l.b16 %v295
    %v448 = vunpack.c.h.b16 %v295
    %v449 = vunpack.c.l.b16 %v296
    %v450 = vunpack.c.h.b16 %v296
    %v451 = vunpack.c.l.b16 %v297
    %v452 = vunpack.c.h.b16 %v297
    %v453 = vunpack.c.l.b16 %v298
    %v454 = vunpack.c.h.b16 %v298
    %v455 = vunpack.c.l.b16 %v299
    %v456 = vunpack.c.h.b16 %v299
    %v457 = vunpack.c.l.b16 %v300
    %v458 = vunpack.c.h.b16 %v300
    %v459 = vunpack.c.l.b16 %v301
    %v460 = vunpack.c.h.b16 %v301
    %v461 = vunpack.c.l.b16 %v302
    %v462 = vunpack.c.h.b16 %v302
    %v463 = vunpack.c.l.b16 %v303
    %v464 = vunpack.c.h.b16 %v303
    %v465 = vunpack.c.l.b16 %v304
    %v466 = vunpack.c.h.b16 %v304
    %v467 = vunpack.c.l.b16 %v305
    %v468 = vunpack.c.h.b16 %v305
    %v469 = vunpack.c.l.b16 %v306
    %v470 = vunpack.c.h.b16 %v306
    %v471 = vunpack.c.l.b16 %v307
    %v472 = vunpack.c.h.b16 %v307
    %v473 = vunpack.c.l.b16 %v308
    %v474 = vunpack.c.h.b16 %v308
    %v475 = vunpack.c.l.b16 %v309
    %v476 = vunpack.c.h.b16 %v309
    %v477 = vunpack.c.l.b16 %v310
    %v478 = vunpack.c.h.b16 %v310
    %v479 = vunpack.c.l.b16 %v311
    %v480 = vunpack.c.h.b16 %v311
    %v481 = vunpack.c.l.b16 %v312
    %v482 = vunpack.c.h.b16 %v312
    %v483 = vunpack.c.l.b16 %v313
    %v484 = vunpack.c.h.b16 %v313
    %v485 = vunpack.c.l.b16 %v314
    %v486 = vunpack.c.h.b16 %v314
    %v487 = vunpack.c.l.b16 %v315
    %v488 = vunpack.c.h.b16 %v315
    %v489 = vunpack.c.l.b16 %v316
    %v490 = vunpack.c.h.b16 %v316
    %v491 = vunpack.c.l.b16 %v317
    %v492 = vunpack.c.h.b16 %v317
    %v493 = vunpack.c.l.b16 %v318
    %v494 = vunpack.c.h.b16 %v318
    %v495 = vunpack.c.l.b16 %v319
    %v496 = vunpack.c.h.b16 %v319
    %v497 = vunpack.c.l.b16 %v320
    %v498 = vunpack.c.h.b16 %v320
    %v499 = vunpack.c.l.b16 %v321
    %v500 = vunpack.c.h.b16 %v321
    %v501 = vunpack.c.l.b16 %v322
    %v502 = vunpack.c.h.b16 %v322
    %v503 = vunpack.c.l.b16 %v323
    %v504 = vunpack.c.h.b16 %v323
    %v505 = vunpack.c.l.b16 %v324
    %v506 = vunpack.c.h.b16 %v324
    %v507 = vunpack.c.l.b16 %v325
    %v508 = vunpack.c.h.b16 %v325
    %v509 = vunpack.c.l.b16 %v326
    %v510 = vunpack.c.h.b16 %v326
    %v511 = vunpack.c.l.b16 %v327
    %v512 = vunpack.c.h.b16 %v327
    %v513 = vunpack.c.l.b16 %v328
    %v514 = vunpack.c.h.b16 %v328
    %v515 = vunpack.c.l.b16 %v329
    %v516 = vunpack.c.h.b16 %v329
    %v517 = vunpack.c.l.b16 %v330
    %v518 = vunpack.c.h.b16 %v330
    %v519 = vunpack.c.l.b16 %v331
    %v520 = vunpack.c.h.b16 %v331
    %v521 = vunpack.c.l.b16 %v332
    %v522 = vunpack.c.h.b16 %v332
    %v523 = vunpack.c.l.b16 %v333
    %v524 = vunpack.c.h.b16 %v333
    %v525 = vunpack.c.l.b16 %v334
    %v526 = vunpack.c.h.b16 %v334
    %v527 = vunpack.c.l.b16 %v335
    %v528 = vunpack.c.h.b16 %v335
    %v529 = vunpack.c.l.b16 %v336
    %v530 = vunpack.c.h.b16 %v336
    %v531 = vunpack.c.l.b16 %v337
    %v532 = vunpack.c.h.b16 %v337
    %v533 = vunpack.c.l.b16 %v338
    %v534 = vunpack.c.h.b16 %v338
    %v535 = vunpack.c.l.b16 %v339
    %v536 = vunpack.c.h.b16 %v339
    %v537 = vunpack.c.l.b16 %v340
    %v538 = vunpack.c.h.b16 %v340
    %v539 = vunpack.c.l.b16 %v341
    %v540 = vunpack.c.h.b16 %v341
    %v541 = vunpack.c.l.b16 %v342
    %v542 = vunpack.c.h.b16 %v342
    %v543 = vunpack.c.l.b16 %v343
    %v544 = vunpack.c.h.b16 %v343
    %v545 = vunpack.c.l.b16 %v344
    %v546 = vunpack.c.h.b16 %v344
    %v547 = vpack.c.b16 %v431, %v427
    %v548 = vpack.c.b16 %v432, %v428
    %v549 = vpack.c.b16 %v433, %v429
    %v550 = vpack.c.b16 %v434, %v430
    %v551 = vpack.c.b16 %v439, %v435
    %v552 = vpack.c.b16 %v440, %v436
    %v553 = vpack.c.b16 %v441, %v437
    %v554 = vpack.c.b16 %v442, %v438
    %v555 = vpack.c.b16 %v447, %v443
    %v556 = vpack.c.b16 %v448, %v444
    %v557 = vpack.c.b16 %v449, %v445
    %v558 = vpack.c.b16 %v450, %v446
    %v559 = vpack.c.b16 %v455, %v451
    %v560 = vpack.c.b16 %v456, %v452
    %v561 = vpack.c.b16 %v457, %v453
    %v562 = vpack.c.b16 %v458, %v454
    %v563 = vpack.c.b16 %v463, %v459
    %v564 = vpack.c.b16 %v464, %v460
    %v565 = vpack.c.b16 %v465, %v461
    %v566 = vpack.c.b16 %v466, %v462
    %v567 = vpack.c.b16 %v471, %v467
    %v568 = vpack.c.b16 %v472, %v468
    %v569 = vpack.c.b16 %v473, %v469
    %v570 = vpack.c.b16 %v474, %v470
    %v571 = vpack.c.b16 %v479, %v475
    %v572 = vpack.c.b16 %v480, %v476
    %v573 = vpack.c.b16 %v481, %v477
    %v574 = vpack.c.b16 %v482, %v478
    %v575 = vpack.c.b16 %v487, %v483
    %v576 = vpack.c.b16 %v488, %v484
    %v577 = vpack.c.b16 %v489, %v485
    %v578 = vpack.c.b16 %v490, %v486
    %v579 = vpack.c.b16 %v495, %v491
    %v580 = vpack.c.b16 %v496, %v492
    %v581 = vpack.c.b16 %v497, %v493
    %v582 = vpack.c.b16 %v498, %v494
    %v583 = vpack.c.b16 %v503, %v499
    %v584 = vpack.c.b16 %v504, %v500
    %v585 = vpack.c.b16 %v505, %v501
    %v586 = vpack.c.b16 %v506, %v502
    %v587 = vpack.c.b16 %v511, %v507
    %v588 = vpack.c.b16 %v512, %v508
    %v589 = vpack.c.b16 %v513, %v509
    %v590 = vpack.c.b16 %v514, %v510
    %v591 = vpack.c.b16 %v519, %v515
    %v592 = vpack.c.b16 %v520, %v516
    %v593 = vpack.c.b16 %v521, %v517
    %v594 = vpack.c.b16 %v522, %v518
    %v595 = vpack.c.b16 %v527, %v523
    %v596 = vpack.c.b16 %v528, %v524
    %v597 = vpack.c.b16 %v529, %v525
    %v598 = vpack.c.b16 %v530, %v526
    %v599 = vpack.c.b16 %v535, %v531
    %v600 = vpack.c.b16 %v536, %v532
    %v601 = vpack.c.b16 %v537, %v533
    %v602 = vpack.c.b16 %v538, %v534
    %v603 = vpack.c.b16 %v543, %v539
    %v604 = vpack.c.b16 %v544, %v540
    %v605 = vpack.c.b16 %v545, %v541
    %v606 = vpack.c.b16 %v546, %v542
    %vm667 = vcmask 916480
    %v668 = vsel %vm667, %v282, 0
    %v670 = vsel %vm667, %v284, 0
    %672 = vmatprep.subr.bf16.mxu0 %v576
    %673 = vmatpush1.bf16.msra.mxu0 %v575
    %674 = vmatprep.subr.bf16.mxu0 %v572
    %675 = vmatpush1.bf16.msra.mxu0 %v571
    %676 = vmatprep.subr.bf16.mxu0 %v568
    %677 = vmatpush1.bf16.msra.mxu0 %v567
    %678 = vmatprep.subr.bf16.mxu0 %v564
    %679 = vmatpush1.bf16.msra.mxu0 %v563
    %680 = vmatprep.subr.bf16.mxu0 %v560
    %681 = vmatpush1.bf16.msra.mxu0 %v559
    %682 = vmatprep.subr.bf16.mxu0 %v556
    %683 = vmatpush1.bf16.msra.mxu0 %v555
    %684 = vmatprep.subr.bf16.mxu0 %v552
    %685 = vmatpush1.bf16.msra.mxu0 %v551
    %686 = vmatprep.subr.bf16.mxu0 %v548
    %687 = vmatpush1.bf16.msra.mxu0 %v547
    %688 = vmatprep.subr.bf16.mxu0 0
    %689 = vmatpush2.bf16.msra.mxu0 0
    %690 = vmatprep.subr.bf16.mxu0 %v604
    %691 = vmatpush2.bf16.msra.mxu0 %v603
    %692 = vmatprep.subr.bf16.mxu0 %v600
    %693 = vmatpush2.bf16.msra.mxu0 %v599
    %694 = vmatprep.subr.bf16.mxu0 %v596
    %695 = vmatpush2.bf16.msra.mxu0 %v595
    %696 = vmatprep.subr.bf16.mxu0 %v592
    %697 = vmatpush2.bf16.msra.mxu0 %v591
    %698 = vmatprep.subr.bf16.mxu0 %v588
    %699 = vmatpush2.bf16.msra.mxu0 %v587
    %700 = vmatprep.subr.bf16.mxu0 %v584
    %701 = vmatpush2.bf16.msra.mxu0 %v583
    %702 = vmatprep.subr.bf16.mxu0 %v580
    %703 = vmatpush2.bf16.msra.mxu0 %v579
    %704 = vmatprep.mubr.bf16.mxu0 %v668
    %705 = vmatmul.mubr.bf16.gmra.mxu0 %v270
    %v706 = vpop.f32.mrf.mxu0
    %v707 = vadd.f32 %v350, %v706
    %v708 = vpop.f32.mrf.mxu0
    %v709 = vadd.f32 %v354, %v708
    %v710 = vpop.f32.mrf.mxu0
    %v711 = vadd.f32 %v350, %v710
    %v712 = vpop.f32.mrf.mxu0
    %v713 = vadd.f32 %v354, %v712
    %714 = vmatprep.mubr.bf16.mxu0 %v670
    %715 = vmatmul.mubr.bf16.gmra.mxu0 %v273
    %v716 = vpop.f32.mrf.mxu0
    %v717 = vadd.f32 %v350, %v716
    %v718 = vpop.f32.mrf.mxu0
    %v719 = vadd.f32 %v354, %v718
    %v720 = vpop.f32.mrf.mxu0
    %v721 = vadd.f32 %v350, %v720
    %v722 = vpop.f32.mrf.mxu0
    %v723 = vadd.f32 %v354, %v722
    %724 = vdwg.mxu0
    %725 = vmatprep.subr.bf16.mxu0 %v578
    %726 = vmatpush1.bf16.msra.mxu0 %v577
    %727 = vmatprep.subr.bf16.mxu0 %v574
    %728 = vmatpush1.bf16.msra.mxu0 %v573
    %729 = vmatprep.subr.bf16.mxu0 %v570
    %730 = vmatpush1.bf16.msra.mxu0 %v569
    %731 = vmatprep.subr.bf16.mxu0 %v566
    %732 = vmatpush1.bf16.msra.mxu0 %v565
    %733 = vmatprep.subr.bf16.mxu0 %v562
    %734 = vmatpush1.bf16.msra.mxu0 %v561
    %735 = vmatprep.subr.bf16.mxu0 %v558
    %736 = vmatpush1.bf16.msra.mxu0 %v557
    %737 = vmatprep.subr.bf16.mxu0 %v554
    %738 = vmatpush1.bf16.msra.mxu0 %v553
    %739 = vmatprep.subr.bf16.mxu0 %v550
    %740 = vmatpush1.bf16.msra.mxu0 %v549
    %741 = vmatprep.subr.bf16.mxu0 0
    %742 = vmatpush2.bf16.msra.mxu0 0
    %743 = vmatprep.subr.bf16.mxu0 %v606
    %744 = vmatpush2.bf16.msra.mxu0 %v605
    %745 = vmatprep.subr.bf16.mxu0 %v602
    %746 = vmatpush2.bf16.msra.mxu0 %v601
    %747 = vmatprep.subr.bf16.mxu0 %v598
    %748 = vmatpush2.bf16.msra.mxu0 %v597
    %749 = vmatprep.subr.bf16.mxu0 %v594
    %750 = vmatpush2.bf16.msra.mxu0 %v593
    %751 = vmatprep.subr.bf16.mxu0 %v590
    %752 = vmatpush2.bf16.msra.mxu0 %v589
    %753 = vmatprep.subr.bf16.mxu0 %v586
    %754 = vmatpush2.bf16.msra.mxu0 %v585
    %755 = vmatprep.subr.bf16.mxu0 %v582
    %756 = vmatpush2.bf16.msra.mxu0 %v581
    %757 = vmatprep.mubr.bf16.mxu0 %v668
    %758 = vmatmul.mubr.bf16.gmra.mxu0 %v270
    %v759 = vpop.f32.mrf.mxu0
    %v760 = vadd.f32 %v358, %v759
    %v761 = vpop.f32.mrf.mxu0
    %v762 = vadd.f32 %v362, %v761
    %v763 = vpop.f32.mrf.mxu0
    %v764 = vadd.f32 %v358, %v763
    %v765 = vpop.f32.mrf.mxu0
    %v766 = vadd.f32 %v362, %v765
    %767 = vmatprep.mubr.bf16.mxu0 %v670
    %768 = vmatmul.mubr.bf16.gmra.mxu0 %v273
    %v769 = vpop.f32.mrf.mxu0
    %v770 = vadd.f32 %v358, %v769
    %v771 = vpop.f32.mrf.mxu0
    %v772 = vadd.f32 %v362, %v771
    %v773 = vpop.f32.mrf.mxu0
    %v774 = vadd.f32 %v358, %v773
    %v775 = vpop.f32.mrf.mxu0
    %v776 = vadd.f32 %v362, %v775
    %777 = vdwg.mxu0
    %v778 = vmax.f32 %v707, 0.0
    %v779 = vmax.f32 %v709, 0.0
    %v780 = vmax.f32 %v760, 0.0
    %v781 = vmax.f32 %v762, 0.0
    %v782 = vmax.f32 %v711, 0.0
    %v783 = vmax.f32 %v713, 0.0
    %v784 = vmax.f32 %v764, 0.0
    %v785 = vmax.f32 %v766, 0.0
    %v786 = vmax.f32 %v717, 0.0
    %v787 = vmax.f32 %v719, 0.0
    %v788 = vmax.f32 %v770, 0.0
    %v789 = vmax.f32 %v772, 0.0
    %v790 = vmax.f32 %v721, 0.0
    %v791 = vmax.f32 %v723, 0.0
    %v792 = vmax.f32 %v774, 0.0
    %v793 = vmax.f32 %v776, 0.0
    %v794 = vmax.f32 %v778, %v780
    %v795 = vmax.f32 %v779, %v781
    %v796 = vmax.f32 %v782, %v784
    %v797 = vmax.f32 %v783, %v785
    %v798 = vmax.f32 %v786, %v788
    %v799 = vmax.f32 %v787, %v789
    %v800 = vmax.f32 %v790, %v792
    %v801 = vmax.f32 %v791, %v793
    %v806 = vrot.slane %v794, 1
    %v807 = vrot.slane %v795, 1
    %v808 = vrot.slane %v798, 1
    %v809 = vrot.slane %v799, 1
    %v814 = vmax.f32 %v794, %v806
    %v815 = vmax.f32 %v795, %v807
    %v816 = vmax.f32 %v798, %v808
    %v817 = vmax.f32 %v799, %v809
    %v822 = vrot.slane %v796, 1
    %v823 = vrot.slane %v797, 1
    %v824 = vrot.slane %v800, 1
    %v825 = vrot.slane %v801, 1
    %v830 = vmax.f32 %v796, %v822
    %v831 = vmax.f32 %v797, %v823
    %v832 = vmax.f32 %v800, %v824
    %v833 = vmax.f32 %v801, %v825
    %v838 = vrot.slane %v814, 1
    %v839 = vrot.slane %v815, 1
    %v840 = vrot.slane %v816, 1
    %v841 = vrot.slane %v817, 1
    %v846 = vrot.slane %v814, 2
    %v847 = vrot.slane %v815, 2
    %v848 = vrot.slane %v816, 2
    %v849 = vrot.slane %v817, 2
    %v854 = vrot.slane %v814, 3
    %v855 = vrot.slane %v815, 3
    %v856 = vrot.slane %v816, 3
    %v857 = vrot.slane %v817, 3
    %v866 = vrot.slane %v830, 4
    %v867 = vrot.slane %v831, 4
    %v868 = vrot.slane %v832, 4
    %v869 = vrot.slane %v833, 4
    %v874 = vrot.slane %v830, 5
    %v875 = vrot.slane %v831, 5
    %v876 = vrot.slane %v832, 5
    %v877 = vrot.slane %v833, 5
    %v882 = vrot.slane %v830, 6
    %v883 = vrot.slane %v831, 6
    %v884 = vrot.slane %v832, 6
    %v885 = vrot.slane %v833, 6
    %v890 = vrot.slane %v830, 7
    %v891 = vrot.slane %v831, 7
    %v892 = vrot.slane %v832, 7
    %v893 = vrot.slane %v833, 7
    %vm898 = vcmask 1040384
    %v899 = vsel %vm898, %v814, %v838
    %v900 = vsel %vm898, %v815, %v839
    %v901 = vsel %vm898, %v816, %v840
    %v902 = vsel %vm898, %v817, %v841
    %vm903 = vcmask 1041408
    %v904 = vsel %vm903, %v899, %v846
    %v905 = vsel %vm903, %v900, %v847
    %v906 = vsel %vm903, %v901, %v848
    %v907 = vsel %vm903, %v902, %v849
    %vm908 = vcmask 1042432
    %v909 = vsel %vm908, %v904, %v854
    %v910 = vsel %vm908, %v905, %v855
    %v911 = vsel %vm908, %v906, %v856
    %v912 = vsel %vm908, %v907, %v857
    %vm913 = vcmask 1043456
    %v914 = vsel %vm913, %v909, %v866
    %v915 = vsel %vm913, %v910, %v867
    %v916 = vsel %vm913, %v911, %v868
    %v917 = vsel %vm913, %v912, %v869
    %vm918 = vcmask 1044480
    %v919 = vsel %vm918, %v914, %v874
    %v920 = vsel %vm918, %v915, %v875
    %v921 = vsel %vm918, %v916, %v876
    %v922 = vsel %vm918, %v917, %v877
    %vm923 = vcmask 1045504
    %v924 = vsel %vm923, %v919, %v882
    %v925 = vsel %vm923, %v920, %v883
    %v926 = vsel %vm923, %v921, %v884
    %v927 = vsel %vm923, %v922, %v885
    %vm928 = vcmask 1046528
    %v929 = vsel %vm928, %v924, %v890
    %v930 = vsel %vm928, %v925, %v891
    %v931 = vsel %vm928, %v926, %v892
    %v932 = vsel %vm928, %v927, %v893
    %933 = vst [vmem:[#allocation3] sm:$0x11] 0
    %934 = vst [vmem:[#allocation3 + $0x10] sm:$0x11] 0
    %935 = vst [vmem:[#allocation3 + $0x8] sm:$0x22] 0
    %936 = vst [vmem:[#allocation3 + $0x18] sm:$0x22] 0
    %v937 = vpack.c.bf16 %v929, %v929
    %v938 = vpack.c.bf16 %v930, %v930
    %v939 = vpack.c.bf16 %v931, %v931
    %v940 = vpack.c.bf16 %v932, %v932
    %v945 = vunpack.c.l.b16 %v937
    %v946 = vunpack.c.l.b16 %v938
    %v947 = vunpack.c.l.b16 %v939
    %v948 = vunpack.c.l.b16 %v940
    %v949 = vpack.c.b16 %v946, %v945
    %v950 = vpack.c.b16 %v948, %v947
    %v951 = vrot.slane %v949, 7
    %v952 = vrot.slane %v951, 4
    %v953 = vrot.slane %v950, 7
    %v954 = vrot.slane %v953, 4
    %959 = vst [vmem:[#allocation3] sm:$0xee] %v951
    %960 = vst [vmem:[#allocation3 + $0x8] sm:$0x11] %v952
    %961 = vst [vmem:[#allocation3 + $0x10] sm:$0xee] %v953
    %962 = vst [vmem:[#allocation3 + $0x18] sm:$0x11] %v954
    %v963 = vld [vmem:[#allocation3] sm:$0xff]
    %v964 = vld [vmem:[#allocation3 + $0x10] sm:$0xff]
    %v965 = vld [vmem:[#allocation3 + $0x8] sm:$0x11]
    %v966 = vld [vmem:[#allocation3 + $0x18] sm:$0x11]
    %v967 = vld [vmem:[#allocation3] sm:$0xee]
    %v968 = vld [vmem:[#allocation3 + $0x10] sm:$0xee]
    %v969 = vld [vmem:[#allocation3 + $0x8] sm:$0x33]
    %v970 = vld [vmem:[#allocation3 + $0x18] sm:$0x33]
    %v971 = vld [vmem:[#allocation3] sm:$0xcc]
    %v972 = vld [vmem:[#allocation3 + $0x10] sm:$0xcc]
    %v975 = vunpack.c.l.b16 %v963
    %v976 = vunpack.c.h.b16 %v963
    %v977 = vunpack.c.l.b16 %v964
    %v978 = vunpack.c.h.b16 %v964
    %v981 = vunpack.c.l.b16 %v965
    %v982 = vunpack.c.h.b16 %v965
    %v983 = vunpack.c.l.b16 %v966
    %v984 = vunpack.c.h.b16 %v966
    %v985 = vpack.c.b16 %v981, %v975
    %v986 = vpack.c.b16 %v982, %v976
    %v987 = vpack.c.b16 %v983, %v977
    %v988 = vpack.c.b16 %v984, %v978
    %v990 = vshrl.u32 %v985, 16
    %v992 = vshll.u32 %v985, 16
    %v994 = vrot.slane %v992, 1
    %v995 = vor.u32 %v990, %v994
    %v997 = vshrl.u32 %v986, 16
    %v999 = vshll.u32 %v986, 16
    %v1001 = vrot.slane %v999, 1
    %v1002 = vor.u32 %v997, %v1001
    %v1004 = vshrl.u32 %v987, 16
    %v1006 = vshll.u32 %v987, 16
    %v1008 = vrot.slane %v1006, 1
    %v1009 = vor.u32 %v1004, %v1008
    %v1011 = vshrl.u32 %v988, 16
    %v1013 = vshll.u32 %v988, 16
    %v1015 = vrot.slane %v1013, 1
    %v1016 = vor.u32 %v1011, %v1015
    %v1019 = vunpack.c.l.b16 %v967
    %v1020 = vunpack.c.h.b16 %v967
    %v1021 = vunpack.c.l.b16 %v968
    %v1022 = vunpack.c.h.b16 %v968
    %v1023 = vpack.c.b16 %v981, %v1019
    %v1024 = vpack.c.b16 %v982, %v1020
    %v1025 = vpack.c.b16 %v983, %v1021
    %v1026 = vpack.c.b16 %v984, %v1022
    %v1027 = vrot.slane %v1023, 1
    %v1028 = vrot.slane %v1024, 1
    %v1029 = vrot.slane %v1025, 1
    %v1030 = vrot.slane %v1026, 1
    %v1033 = vunpack.c.l.b16 %v969
    %v1034 = vunpack.c.h.b16 %v969
    %v1035 = vunpack.c.l.b16 %v970
    %v1036 = vunpack.c.h.b16 %v970
    %v1037 = vpack.c.b16 %v1033, %v1019
    %v1038 = vpack.c.b16 %v1034, %v1020
    %v1039 = vpack.c.b16 %v1035, %v1021
    %v1040 = vpack.c.b16 %v1036, %v1022
    %v1042 = vshrl.u32 %v1037, 16
    %v1044 = vrot.slane %v1042, 1
    %v1045 = vshll.u32 %v1037, 16
    %v1047 = vrot.slane %v1045, 2
    %v1048 = vor.u32 %v1044, %v1047
    %v1050 = vshrl.u32 %v1038, 16
    %v1052 = vrot.slane %v1050, 1
    %v1053 = vshll.u32 %v1038, 16
    %v1055 = vrot.slane %v1053, 2
    %v1056 = vor.u32 %v1052, %v1055
    %v1058 = vshrl.u32 %v1039, 16
    %v1060 = vrot.slane %v1058, 1
    %v1061 = vshll.u32 %v1039, 16
    %v1063 = vrot.slane %v1061, 2
    %v1064 = vor.u32 %v1060, %v1063
    %v1066 = vshrl.u32 %v1040, 16
    %v1068 = vrot.slane %v1066, 1
    %v1069 = vshll.u32 %v1040, 16
    %v1071 = vrot.slane %v1069, 2
    %v1072 = vor.u32 %v1068, %v1071
    %v1075 = vunpack.c.l.b16 %v971
    %v1076 = vunpack.c.h.b16 %v971
    %v1077 = vunpack.c.l.b16 %v972
    %v1078 = vunpack.c.h.b16 %v972
    %v1079 = vpack.c.b16 %v1033, %v1075
    %v1080 = vpack.c.b16 %v1034, %v1076
    %v1081 = vpack.c.b16 %v1035, %v1077
    %v1082 = vpack.c.b16 %v1036, %v1078
    %v1083 = vrot.slane %v1079, 2
    %v1084 = vrot.slane %v1080, 2
    %v1085 = vrot.slane %v1081, 2
    %v1086 = vrot.slane %v1082, 2
    %v1087 = vunpack.c.l.b16 %v995
    %v1088 = vunpack.c.l.b16 %v1002
    %v1089 = vunpack.c.l.b16 %v1027
    %v1090 = vunpack.c.l.b16 %v1028
    %v1091 = vunpack.c.l.b16 %v1048
    %v1092 = vunpack.c.l.b16 %v1056
    %v1093 = vunpack.c.l.b16 %v1083
    %v1094 = vunpack.c.l.b16 %v1084
    %v1095 = vunpack.c.l.b16 %v1009
    %v1096 = vunpack.c.l.b16 %v1016
    %v1097 = vunpack.c.l.b16 %v1029
    %v1098 = vunpack.c.l.b16 %v1030
    %v1099 = vunpack.c.l.b16 %v1064
    %v1100 = vunpack.c.l.b16 %v1072
    %v1101 = vunpack.c.l.b16 %v1085
    %v1102 = vunpack.c.l.b16 %v1086
    %v1103 = vld [vmem:[#allocation10] sm:$0xff]
    %v1104 = vld [vmem:[#allocation10 + $0x8] sm:$0xff]
    %v1105 = vld [vmem:[#allocation10 + $0x10] sm:$0xff]
    %v1106 = vld [vmem:[#allocation10 + $0x18] sm:$0xff]
    %v1107 = vld [vmem:[#allocation10 + $0x20] sm:$0xff]
    %v1108 = vld [vmem:[#allocation10 + $0x28] sm:$0xff]
    %v1109 = vld [vmem:[#allocation10 + $0x30] sm:$0xff]
    %v1110 = vld [vmem:[#allocation10 + $0x38] sm:$0xff]
    %v1111 = vld [vmem:[#allocation10 + $0x40] sm:$0xff]
    %v1112 = vld [vmem:[#allocation10 + $0x48] sm:$0xff]
    %v1113 = vld [vmem:[#allocation10 + $0x50] sm:$0xff]
    %v1114 = vld [vmem:[#allocation10 + $0x58] sm:$0xff]
    %v1115 = vld [vmem:[#allocation10 + $0x60] sm:$0xff]
    %v1116 = vld [vmem:[#allocation10 + $0x68] sm:$0xff]
    %v1117 = vld [vmem:[#allocation10 + $0x70] sm:$0xff]
    %v1118 = vld [vmem:[#allocation10 + $0x78] sm:$0xff]
    %v1119 = vld [vmem:[#allocation10 + $0x80] sm:$0xff]
    %v1120 = vld [vmem:[#allocation10 + $0x88] sm:$0xff]
    %v1121 = vld [vmem:[#allocation10 + $0x90] sm:$0xff]
    %v1122 = vld [vmem:[#allocation10 + $0x98] sm:$0xff]
    %v1123 = vld [vmem:[#allocation10 + $0xa0] sm:$0xff]
    %v1124 = vld [vmem:[#allocation10 + $0xa8] sm:$0xff]
    %v1125 = vld [vmem:[#allocation10 + $0xb0] sm:$0xff]
    %v1126 = vld [vmem:[#allocation10 + $0xb8] sm:$0xff]
    %v1127 = vld [vmem:[#allocation10 + $0xc0] sm:$0xff]
    %v1128 = vld [vmem:[#allocation10 + $0xc8] sm:$0xff]
    %v1129 = vld [vmem:[#allocation10 + $0xd0] sm:$0xff]
    %v1130 = vld [vmem:[#allocation10 + $0xd8] sm:$0xff]
    %v1131 = vld [vmem:[#allocation10 + $0xe0] sm:$0xff]
    %v1132 = vld [vmem:[#allocation10 + $0xe8] sm:$0xff]
    %v1133 = vld [vmem:[#allocation10 + $0xf0] sm:$0xff]
    %v1134 = vld [vmem:[#allocation10 + $0xf8] sm:$0xff]
    %v1135 = vld [vmem:[#allocation10 + $0x100] sm:$0xff]
    %v1136 = vld [vmem:[#allocation10 + $0x108] sm:$0xff]
    %v1137 = vld [vmem:[#allocation10 + $0x110] sm:$0xff]
    %v1138 = vld [vmem:[#allocation10 + $0x118] sm:$0xff]
    %v1139 = vld [vmem:[#allocation10 + $0x120] sm:$0xff]
    %v1140 = vld [vmem:[#allocation10 + $0x128] sm:$0xff]
    %v1141 = vld [vmem:[#allocation10 + $0x130] sm:$0xff]
    %v1142 = vld [vmem:[#allocation10 + $0x138] sm:$0xff]
    %v1143 = vld [vmem:[#allocation10 + $0x140] sm:$0xff]
    %v1144 = vld [vmem:[#allocation10 + $0x148] sm:$0xff]
    %v1145 = vld [vmem:[#allocation10 + $0x150] sm:$0xff]
    %v1146 = vld [vmem:[#allocation10 + $0x158] sm:$0xff]
    %v1147 = vld [vmem:[#allocation10 + $0x160] sm:$0xff]
    %v1148 = vld [vmem:[#allocation10 + $0x168] sm:$0xff]
    %v1149 = vld [vmem:[#allocation10 + $0x170] sm:$0xff]
    %v1150 = vld [vmem:[#allocation10 + $0x178] sm:$0xff]
    %v1151 = vld [vmem:[#allocation10 + $0x180] sm:$0xff]
    %v1152 = vld [vmem:[#allocation10 + $0x188] sm:$0xff]
    %v1153 = vld [vmem:[#allocation10 + $0x190] sm:$0xff]
    %v1154 = vld [vmem:[#allocation10 + $0x198] sm:$0xff]
    %v1155 = vld [vmem:[#allocation10 + $0x1a0] sm:$0xff]
    %v1156 = vld [vmem:[#allocation10 + $0x1a8] sm:$0xff]
    %v1157 = vld [vmem:[#allocation10 + $0x1b0] sm:$0xff]
    %v1158 = vld [vmem:[#allocation10 + $0x1b8] sm:$0xff]
    %v1159 = vld [vmem:[#allocation10 + $0x1c0] sm:$0xff]
    %v1160 = vld [vmem:[#allocation10 + $0x1c8] sm:$0xff]
    %v1161 = vld [vmem:[#allocation10 + $0x1d0] sm:$0xff]
    %v1162 = vld [vmem:[#allocation10 + $0x1d8] sm:$0xff]
    %v1163 = vld [vmem:[#allocation10 + $0x1e0] sm:$0xff]
    %v1164 = vld [vmem:[#allocation10 + $0x1e8] sm:$0xff]
    %v1165 = vld [vmem:[#allocation10 + $0x1f0] sm:$0xff]
    %v1166 = vld [vmem:[#allocation10 + $0x1f8] sm:$0xff]
    %v1167 = vld [vmem:[#allocation10 + $0x200] sm:$0xff]
    %v1168 = vld [vmem:[#allocation10 + $0x208] sm:$0xff]
    %v1169 = vld [vmem:[#allocation10 + $0x210] sm:$0xff]
    %v1170 = vld [vmem:[#allocation10 + $0x218] sm:$0xff]
    %v1171 = vld [vmem:[#allocation10 + $0x220] sm:$0xff]
    %v1172 = vld [vmem:[#allocation10 + $0x228] sm:$0xff]
    %v1173 = vld [vmem:[#allocation10 + $0x230] sm:$0xff]
    %v1174 = vld [vmem:[#allocation10 + $0x238] sm:$0xff]
    %v1175 = vld [vmem:[#allocation10 + $0x240] sm:$0xff]
    %v1176 = vld [vmem:[#allocation10 + $0x248] sm:$0xff]
    %v1177 = vld [vmem:[#allocation10 + $0x250] sm:$0xff]
    %v1178 = vld [vmem:[#allocation10 + $0x258] sm:$0xff]
    %v1179 = vld [vmem:[#allocation10 + $0x260] sm:$0xff]
    %v1180 = vld [vmem:[#allocation10 + $0x268] sm:$0xff]
    %v1181 = vld [vmem:[#allocation10 + $0x270] sm:$0xff]
    %v1182 = vld [vmem:[#allocation10 + $0x278] sm:$0xff]
    %v1183 = vld [vmem:[#allocation10 + $0x280] sm:$0xff]
    %v1184 = vld [vmem:[#allocation10 + $0x288] sm:$0xff]
    %v1185 = vld [vmem:[#allocation10 + $0x290] sm:$0xff]
    %v1186 = vld [vmem:[#allocation10 + $0x298] sm:$0xff]
    %v1187 = vld [vmem:[#allocation10 + $0x2a0] sm:$0xff]
    %v1188 = vld [vmem:[#allocation10 + $0x2a8] sm:$0xff]
    %v1189 = vld [vmem:[#allocation10 + $0x2b0] sm:$0xff]
    %v1190 = vld [vmem:[#allocation10 + $0x2b8] sm:$0xff]
    %v1191 = vld [vmem:[#allocation10 + $0x2c0] sm:$0xff]
    %v1192 = vld [vmem:[#allocation10 + $0x2c8] sm:$0xff]
    %v1193 = vld [vmem:[#allocation10 + $0x2d0] sm:$0xff]
    %v1194 = vld [vmem:[#allocation10 + $0x2d8] sm:$0xff]
    %v1195 = vld [vmem:[#allocation10 + $0x2e0] sm:$0xff]
    %v1196 = vld [vmem:[#allocation10 + $0x2e8] sm:$0xff]
    %v1197 = vld [vmem:[#allocation10 + $0x2f0] sm:$0xff]
    %v1198 = vld [vmem:[#allocation10 + $0x2f8] sm:$0xff]
    %v1199 = vld [vmem:[#allocation10 + $0x300] sm:$0xff]
    %v1200 = vld [vmem:[#allocation10 + $0x308] sm:$0xff]
    %v1201 = vld [vmem:[#allocation10 + $0x310] sm:$0xff]
    %v1202 = vld [vmem:[#allocation10 + $0x318] sm:$0xff]
    %v1203 = vld [vmem:[#allocation10 + $0x320] sm:$0xff]
    %v1204 = vld [vmem:[#allocation10 + $0x328] sm:$0xff]
    %v1205 = vld [vmem:[#allocation10 + $0x330] sm:$0xff]
    %v1206 = vld [vmem:[#allocation10 + $0x338] sm:$0xff]
    %v1207 = vld [vmem:[#allocation10 + $0x340] sm:$0xff]
    %v1208 = vld [vmem:[#allocation10 + $0x348] sm:$0xff]
    %v1209 = vld [vmem:[#allocation10 + $0x350] sm:$0xff]
    %v1210 = vld [vmem:[#allocation10 + $0x358] sm:$0xff]
    %v1211 = vld [vmem:[#allocation10 + $0x360] sm:$0xff]
    %v1212 = vld [vmem:[#allocation10 + $0x368] sm:$0xff]
    %v1213 = vld [vmem:[#allocation10 + $0x370] sm:$0xff]
    %v1214 = vld [vmem:[#allocation10 + $0x378] sm:$0xff]
    %v1215 = vld [vmem:[#allocation10 + $0x380] sm:$0xff]
    %v1216 = vld [vmem:[#allocation10 + $0x388] sm:$0xff]
    %v1217 = vld [vmem:[#allocation10 + $0x390] sm:$0xff]
    %v1218 = vld [vmem:[#allocation10 + $0x398] sm:$0xff]
    %v1219 = vld [vmem:[#allocation10 + $0x3a0] sm:$0xff]
    %v1220 = vld [vmem:[#allocation10 + $0x3a8] sm:$0xff]
    %v1221 = vld [vmem:[#allocation10 + $0x3b0] sm:$0xff]
    %v1222 = vld [vmem:[#allocation10 + $0x3b8] sm:$0xff]
    %v1223 = vld [vmem:[#allocation10 + $0x3c0] sm:$0xff]
    %v1224 = vld [vmem:[#allocation10 + $0x3c8] sm:$0xff]
    %v1225 = vld [vmem:[#allocation10 + $0x3d0] sm:$0xff]
    %v1226 = vld [vmem:[#allocation10 + $0x3d8] sm:$0xff]
    %v1227 = vld [vmem:[#allocation10 + $0x3e0] sm:$0xff]
    %v1228 = vld [vmem:[#allocation10 + $0x3e8] sm:$0xff]
    %v1229 = vld [vmem:[#allocation10 + $0x3f0] sm:$0xff]
    %v1230 = vld [vmem:[#allocation10 + $0x3f8] sm:$0xff]
    %v1231 = vld [vmem:[#allocation10 + $0x400] sm:$0xff]
    %v1232 = vld [vmem:[#allocation10 + $0x408] sm:$0xff]
    %v1233 = vld [vmem:[#allocation10 + $0x410] sm:$0xff]
    %v1234 = vld [vmem:[#allocation10 + $0x418] sm:$0xff]
    %v1235 = vld [vmem:[#allocation10 + $0x420] sm:$0xff]
    %v1236 = vld [vmem:[#allocation10 + $0x428] sm:$0xff]
    %v1237 = vld [vmem:[#allocation10 + $0x430] sm:$0xff]
    %v1238 = vld [vmem:[#allocation10 + $0x438] sm:$0xff]
    %v1239 = vld [vmem:[#allocation10 + $0x440] sm:$0xff]
    %v1240 = vld [vmem:[#allocation10 + $0x448] sm:$0xff]
    %v1241 = vld [vmem:[#allocation10 + $0x450] sm:$0xff]
    %v1242 = vld [vmem:[#allocation10 + $0x458] sm:$0xff]
    %v1243 = vld [vmem:[#allocation10 + $0x460] sm:$0xff]
    %v1244 = vld [vmem:[#allocation10 + $0x468] sm:$0xff]
    %v1245 = vld [vmem:[#allocation10 + $0x470] sm:$0xff]
    %v1246 = vld [vmem:[#allocation10 + $0x478] sm:$0xff]
    %v1247 = vld [vmem:[#allocation10 + $0x480] sm:$0xff]
    %v1248 = vld [vmem:[#allocation10 + $0x488] sm:$0xff]
    %v1249 = vld [vmem:[#allocation10 + $0x490] sm:$0xff]
    %v1250 = vld [vmem:[#allocation10 + $0x498] sm:$0xff]
    %v1251 = vld [vmem:[#allocation10 + $0x4a0] sm:$0xff]
    %v1252 = vld [vmem:[#allocation10 + $0x4a8] sm:$0xff]
    %v1253 = vld [vmem:[#allocation10 + $0x4b0] sm:$0xff]
    %v1254 = vld [vmem:[#allocation10 + $0x4b8] sm:$0xff]
    %v1255 = vld [vmem:[#allocation10 + $0x4c0] sm:$0xff]
    %v1256 = vld [vmem:[#allocation10 + $0x4c8] sm:$0xff]
    %v1257 = vld [vmem:[#allocation10 + $0x4d0] sm:$0xff]
    %v1258 = vld [vmem:[#allocation10 + $0x4d8] sm:$0xff]
    %v1259 = vld [vmem:[#allocation10 + $0x4e0] sm:$0xff]
    %v1260 = vld [vmem:[#allocation10 + $0x4e8] sm:$0xff]
    %v1261 = vld [vmem:[#allocation10 + $0x4f0] sm:$0xff]
    %v1262 = vld [vmem:[#allocation10 + $0x4f8] sm:$0xff]
    %v1263 = vld [vmem:[#allocation10 + $0x500] sm:$0xff]
    %v1264 = vld [vmem:[#allocation10 + $0x508] sm:$0xff]
    %v1265 = vld [vmem:[#allocation10 + $0x510] sm:$0xff]
    %v1266 = vld [vmem:[#allocation10 + $0x518] sm:$0xff]
    %v1267 = vld [vmem:[#allocation10 + $0x520] sm:$0xff]
    %v1268 = vld [vmem:[#allocation10 + $0x528] sm:$0xff]
    %v1269 = vld [vmem:[#allocation10 + $0x530] sm:$0xff]
    %v1270 = vld [vmem:[#allocation10 + $0x538] sm:$0xff]
    %v1271 = vld [vmem:[#allocation10 + $0x540] sm:$0xff]
    %v1272 = vld [vmem:[#allocation10 + $0x548] sm:$0xff]
    %v1273 = vld [vmem:[#allocation10 + $0x550] sm:$0xff]
    %v1274 = vld [vmem:[#allocation10 + $0x558] sm:$0xff]
    %v1275 = vld [vmem:[#allocation10 + $0x560] sm:$0xff]
    %v1276 = vld [vmem:[#allocation10 + $0x568] sm:$0xff]
    %v1277 = vld [vmem:[#allocation10 + $0x570] sm:$0xff]
    %v1278 = vld [vmem:[#allocation10 + $0x578] sm:$0xff]
    %v1279 = vld [vmem:[#allocation10 + $0x580] sm:$0xff]
    %v1280 = vld [vmem:[#allocation10 + $0x588] sm:$0xff]
    %v1281 = vld [vmem:[#allocation10 + $0x590] sm:$0xff]
    %v1282 = vld [vmem:[#allocation10 + $0x598] sm:$0xff]
    %v1283 = vld [vmem:[#allocation10 + $0x5a0] sm:$0xff]
    %v1284 = vld [vmem:[#allocation10 + $0x5a8] sm:$0xff]
    %v1285 = vld [vmem:[#allocation10 + $0x5b0] sm:$0xff]
    %v1286 = vld [vmem:[#allocation10 + $0x5b8] sm:$0xff]
    %v1287 = vld [vmem:[#allocation10 + $0x5c0] sm:$0xff]
    %v1288 = vld [vmem:[#allocation10 + $0x5c8] sm:$0xff]
    %v1289 = vld [vmem:[#allocation10 + $0x5d0] sm:$0xff]
    %v1290 = vld [vmem:[#allocation10 + $0x5d8] sm:$0xff]
    %v1291 = vld [vmem:[#allocation10 + $0x5e0] sm:$0xff]
    %v1292 = vld [vmem:[#allocation10 + $0x5e8] sm:$0xff]
    %v1293 = vld [vmem:[#allocation10 + $0x5f0] sm:$0xff]
    %v1294 = vld [vmem:[#allocation10 + $0x5f8] sm:$0xff]
    %v1295 = vld [vmem:[#allocation10 + $0x600] sm:$0xff]
    %v1296 = vld [vmem:[#allocation10 + $0x608] sm:$0xff]
    %v1297 = vld [vmem:[#allocation10 + $0x610] sm:$0xff]
    %v1298 = vld [vmem:[#allocation10 + $0x618] sm:$0xff]
    %v1299 = vld [vmem:[#allocation10 + $0x620] sm:$0xff]
    %v1300 = vld [vmem:[#allocation10 + $0x628] sm:$0xff]
    %v1301 = vld [vmem:[#allocation10 + $0x630] sm:$0xff]
    %v1302 = vld [vmem:[#allocation10 + $0x638] sm:$0xff]
    %v1303 = vld [vmem:[#allocation10 + $0x640] sm:$0xff]
    %v1304 = vld [vmem:[#allocation10 + $0x648] sm:$0xff]
    %v1305 = vld [vmem:[#allocation10 + $0x650] sm:$0xff]
    %v1306 = vld [vmem:[#allocation10 + $0x658] sm:$0xff]
    %v1307 = vld [vmem:[#allocation10 + $0x660] sm:$0xff]
    %v1308 = vld [vmem:[#allocation10 + $0x668] sm:$0xff]
    %v1309 = vld [vmem:[#allocation10 + $0x670] sm:$0xff]
    %v1310 = vld [vmem:[#allocation10 + $0x678] sm:$0xff]
    %v1311 = vld [vmem:[#allocation10 + $0x680] sm:$0xff]
    %v1312 = vld [vmem:[#allocation10 + $0x688] sm:$0xff]
    %v1313 = vld [vmem:[#allocation10 + $0x690] sm:$0xff]
    %v1314 = vld [vmem:[#allocation10 + $0x698] sm:$0xff]
    %v1315 = vld [vmem:[#allocation10 + $0x6a0] sm:$0xff]
    %v1316 = vld [vmem:[#allocation10 + $0x6a8] sm:$0xff]
    %v1317 = vld [vmem:[#allocation10 + $0x6b0] sm:$0xff]
    %v1318 = vld [vmem:[#allocation10 + $0x6b8] sm:$0xff]
    %v1319 = vld [vmem:[#allocation10 + $0x6c0] sm:$0xff]
    %v1320 = vld [vmem:[#allocation10 + $0x6c8] sm:$0xff]
    %v1321 = vld [vmem:[#allocation10 + $0x6d0] sm:$0xff]
    %v1322 = vld [vmem:[#allocation10 + $0x6d8] sm:$0xff]
    %v1323 = vld [vmem:[#allocation10 + $0x6e0] sm:$0xff]
    %v1324 = vld [vmem:[#allocation10 + $0x6e8] sm:$0xff]
    %v1325 = vld [vmem:[#allocation10 + $0x6f0] sm:$0xff]
    %v1326 = vld [vmem:[#allocation10 + $0x6f8] sm:$0xff]
    %v1327 = vld [vmem:[#allocation10 + $0x700] sm:$0xff]
    %v1328 = vld [vmem:[#allocation10 + $0x708] sm:$0xff]
    %v1329 = vld [vmem:[#allocation10 + $0x710] sm:$0xff]
    %v1330 = vld [vmem:[#allocation10 + $0x718] sm:$0xff]
    %v1331 = vld [vmem:[#allocation10 + $0x720] sm:$0xff]
    %v1332 = vld [vmem:[#allocation10 + $0x728] sm:$0xff]
    %v1333 = vld [vmem:[#allocation10 + $0x730] sm:$0xff]
    %v1334 = vld [vmem:[#allocation10 + $0x738] sm:$0xff]
    %v1335 = vld [vmem:[#allocation10 + $0x740] sm:$0xff]
    %v1336 = vld [vmem:[#allocation10 + $0x748] sm:$0xff]
    %v1337 = vld [vmem:[#allocation10 + $0x750] sm:$0xff]
    %v1338 = vld [vmem:[#allocation10 + $0x758] sm:$0xff]
    %v1339 = vld [vmem:[#allocation10 + $0x760] sm:$0xff]
    %v1340 = vld [vmem:[#allocation10 + $0x768] sm:$0xff]
    %v1341 = vld [vmem:[#allocation10 + $0x770] sm:$0xff]
    %v1342 = vld [vmem:[#allocation10 + $0x778] sm:$0xff]
    %v1343 = vld [vmem:[#allocation10 + $0x780] sm:$0xff]
    %v1344 = vld [vmem:[#allocation10 + $0x788] sm:$0xff]
    %v1345 = vld [vmem:[#allocation10 + $0x790] sm:$0xff]
    %v1346 = vld [vmem:[#allocation10 + $0x798] sm:$0xff]
    %v1347 = vld [vmem:[#allocation10 + $0x7a0] sm:$0xff]
    %v1348 = vld [vmem:[#allocation10 + $0x7a8] sm:$0xff]
    %v1349 = vld [vmem:[#allocation10 + $0x7b0] sm:$0xff]
    %v1350 = vld [vmem:[#allocation10 + $0x7b8] sm:$0xff]
    %v1351 = vld [vmem:[#allocation10 + $0x7c0] sm:$0xff]
    %v1352 = vld [vmem:[#allocation10 + $0x7c8] sm:$0xff]
    %v1353 = vld [vmem:[#allocation10 + $0x7d0] sm:$0xff]
    %v1354 = vld [vmem:[#allocation10 + $0x7d8] sm:$0xff]
    %v1355 = vld [vmem:[#allocation10 + $0x7e0] sm:$0xff]
    %v1356 = vld [vmem:[#allocation10 + $0x7e8] sm:$0xff]
    %v1357 = vld [vmem:[#allocation10 + $0x7f0] sm:$0xff]
    %v1358 = vld [vmem:[#allocation10 + $0x7f8] sm:$0xff]
    %v1359 = vld [vmem:[#allocation10 + $0x800] sm:$0xff]
    %v1360 = vld [vmem:[#allocation10 + $0x808] sm:$0xff]
    %v1361 = vld [vmem:[#allocation10 + $0x810] sm:$0xff]
    %v1362 = vld [vmem:[#allocation10 + $0x818] sm:$0xff]
    %v1363 = vld [vmem:[#allocation10 + $0x820] sm:$0xff]
    %v1364 = vld [vmem:[#allocation10 + $0x828] sm:$0xff]
    %v1365 = vld [vmem:[#allocation10 + $0x830] sm:$0xff]
    %v1366 = vld [vmem:[#allocation10 + $0x838] sm:$0xff]
    %v1367 = vld [vmem:[#allocation10 + $0x840] sm:$0xff]
    %v1368 = vld [vmem:[#allocation10 + $0x848] sm:$0xff]
    %v1369 = vld [vmem:[#allocation10 + $0x850] sm:$0xff]
    %v1370 = vld [vmem:[#allocation10 + $0x858] sm:$0xff]
    %v1371 = vld [vmem:[#allocation10 + $0x860] sm:$0xff]
    %v1372 = vld [vmem:[#allocation10 + $0x868] sm:$0xff]
    %v1373 = vld [vmem:[#allocation10 + $0x870] sm:$0xff]
    %v1374 = vld [vmem:[#allocation10 + $0x878] sm:$0xff]
    %v1375 = vld [vmem:[#allocation10 + $0x880] sm:$0xff]
    %v1376 = vld [vmem:[#allocation10 + $0x888] sm:$0xff]
    %v1377 = vld [vmem:[#allocation10 + $0x890] sm:$0xff]
    %v1378 = vld [vmem:[#allocation10 + $0x898] sm:$0xff]
    %v1379 = vld [vmem:[#allocation10 + $0x8a0] sm:$0xff]
    %v1380 = vld [vmem:[#allocation10 + $0x8a8] sm:$0xff]
    %v1381 = vld [vmem:[#allocation10 + $0x8b0] sm:$0xff]
    %v1382 = vld [vmem:[#allocation10 + $0x8b8] sm:$0xff]
    %v1383 = vld [vmem:[#allocation10 + $0x8c0] sm:$0xff]
    %v1384 = vld [vmem:[#allocation10 + $0x8c8] sm:$0xff]
    %v1385 = vld [vmem:[#allocation10 + $0x8d0] sm:$0xff]
    %v1386 = vld [vmem:[#allocation10 + $0x8d8] sm:$0xff]
    %v1387 = vld [vmem:[#allocation10 + $0x8e0] sm:$0xff]
    %v1388 = vld [vmem:[#allocation10 + $0x8e8] sm:$0xff]
    %v1389 = vld [vmem:[#allocation10 + $0x8f0] sm:$0xff]
    %v1390 = vld [vmem:[#allocation10 + $0x8f8] sm:$0xff]
    %v1391 = vld [vmem:[#allocation10 + $0x900] sm:$0xff]
    %v1392 = vld [vmem:[#allocation10 + $0x908] sm:$0xff]
    %v1393 = vld [vmem:[#allocation10 + $0x910] sm:$0xff]
    %v1394 = vld [vmem:[#allocation10 + $0x918] sm:$0xff]
    %v1395 = vld [vmem:[#allocation10 + $0x920] sm:$0xff]
    %v1396 = vld [vmem:[#allocation10 + $0x928] sm:$0xff]
    %v1397 = vld [vmem:[#allocation10 + $0x930] sm:$0xff]
    %v1398 = vld [vmem:[#allocation10 + $0x938] sm:$0xff]
    %v1399 = vld [vmem:[#allocation10 + $0x940] sm:$0xff]
    %v1400 = vld [vmem:[#allocation10 + $0x948] sm:$0xff]
    %v1401 = vld [vmem:[#allocation10 + $0x950] sm:$0xff]
    %v1402 = vld [vmem:[#allocation10 + $0x958] sm:$0xff]
    %v1403 = vld [vmem:[#allocation10 + $0x960] sm:$0xff]
    %v1404 = vld [vmem:[#allocation10 + $0x968] sm:$0xff]
    %v1405 = vld [vmem:[#allocation10 + $0x970] sm:$0xff]
    %v1406 = vld [vmem:[#allocation10 + $0x978] sm:$0xff]
    %v1407 = vld [vmem:[#allocation10 + $0x980] sm:$0xff]
    %v1408 = vld [vmem:[#allocation10 + $0x988] sm:$0xff]
    %v1409 = vld [vmem:[#allocation10 + $0x990] sm:$0xff]
    %v1410 = vld [vmem:[#allocation10 + $0x998] sm:$0xff]
    %v1411 = vld [vmem:[#allocation10 + $0x9a0] sm:$0xff]
    %v1412 = vld [vmem:[#allocation10 + $0x9a8] sm:$0xff]
    %v1413 = vld [vmem:[#allocation10 + $0x9b0] sm:$0xff]
    %v1414 = vld [vmem:[#allocation10 + $0x9b8] sm:$0xff]
    %v1415 = vld [vmem:[#allocation10 + $0x9c0] sm:$0xff]
    %v1416 = vld [vmem:[#allocation10 + $0x9c8] sm:$0xff]
    %v1417 = vld [vmem:[#allocation10 + $0x9d0] sm:$0xff]
    %v1418 = vld [vmem:[#allocation10 + $0x9d8] sm:$0xff]
    %v1419 = vld [vmem:[#allocation10 + $0x9e0] sm:$0xff]
    %v1420 = vld [vmem:[#allocation10 + $0x9e8] sm:$0xff]
    %v1421 = vld [vmem:[#allocation10 + $0x9f0] sm:$0xff]
    %v1422 = vld [vmem:[#allocation10 + $0x9f8] sm:$0xff]
    %v1423 = vld [vmem:[#allocation12] sm:$0xf]
    %v1425 = vlaneseq
    %v1426 = vshrl.u32 %v1425, 7
    %v1427 = vsub.s32 0, %v1426
    %v1428 = vrot.slane %v1423, %v1427
    %v1429 = vlaneseq
    %v1430 = vshrl.u32 %v1429, 7
    %v1431 = vsub.s32 1, %v1430
    %v1432 = vrot.slane %v1423, %v1431
    %v1433 = vlaneseq
    %v1434 = vshrl.u32 %v1433, 7
    %v1435 = vsub.s32 2, %v1434
    %v1436 = vrot.slane %v1423, %v1435
    %v1437 = vlaneseq
    %v1438 = vshrl.u32 %v1437, 7
    %v1439 = vsub.s32 3, %v1438
    %v1440 = vrot.slane %v1423, %v1439
    %v1445 = vpack.c.b16 %v977, %v975
    %v1446 = vpack.c.b16 %v978, %v976
    %v1447 = vpack.c.b16 %v1095, %v1087
    %v1448 = vpack.c.b16 %v1096, %v1088
    %v1449 = vpack.c.b16 %v1097, %v1089
    %v1450 = vpack.c.b16 %v1098, %v1090
    %v1451 = vpack.c.b16 %v1099, %v1091
    %v1452 = vpack.c.b16 %v1100, %v1092
    %v1453 = vpack.c.b16 %v1101, %v1093
    %v1454 = vpack.c.b16 %v1102, %v1094
    %v1785 = vunpack.c.l.b16 %v1103
    %v1786 = vunpack.c.h.b16 %v1103
    %v1787 = vunpack.c.l.b16 %v1104
    %v1788 = vunpack.c.h.b16 %v1104
    %v1789 = vunpack.c.l.b16 %v1105
    %v1790 = vunpack.c.h.b16 %v1105
    %v1791 = vunpack.c.l.b16 %v1106
    %v1792 = vunpack.c.h.b16 %v1106
    %v1793 = vunpack.c.l.b16 %v1107
    %v1794 = vunpack.c.h.b16 %v1107
    %v1795 = vunpack.c.l.b16 %v1108
    %v1796 = vunpack.c.h.b16 %v1108
    %v1797 = vunpack.c.l.b16 %v1109
    %v1798 = vunpack.c.h.b16 %v1109
    %v1799 = vunpack.c.l.b16 %v1110
    %v1800 = vunpack.c.h.b16 %v1110
    %v1801 = vunpack.c.l.b16 %v1111
    %v1802 = vunpack.c.h.b16 %v1111
    %v1803 = vunpack.c.l.b16 %v1112
    %v1804 = vunpack.c.h.b16 %v1112
    %v1805 = vunpack.c.l.b16 %v1113
    %v1806 = vunpack.c.h.b16 %v1113
    %v1807 = vunpack.c.l.b16 %v1114
    %v1808 = vunpack.c.h.b16 %v1114
    %v1809 = vunpack.c.l.b16 %v1115
    %v1810 = vunpack.c.h.b16 %v1115
    %v1811 = vunpack.c.l.b16 %v1116
    %v1812 = vunpack.c.h.b16 %v1116
    %v1813 = vunpack.c.l.b16 %v1117
    %v1814 = vunpack.c.h.b16 %v1117
    %v1815 = vunpack.c.l.b16 %v1118
    %v1816 = vunpack.c.h.b16 %v1118
    %v1817 = vunpack.c.l.b16 %v1119
    %v1818 = vunpack.c.h.b16 %v1119
    %v1819 = vunpack.c.l.b16 %v1120
    %v1820 = vunpack.c.h.b16 %v1120
    %v1821 = vunpack.c.l.b16 %v1121
    %v1822 = vunpack.c.h.b16 %v1121
    %v1823 = vunpack.c.l.b16 %v1122
    %v1824 = vunpack.c.h.b16 %v1122
    %v1825 = vunpack.c.l.b16 %v1123
    %v1826 = vunpack.c.h.b16 %v1123
    %v1827 = vunpack.c.l.b16 %v1124
    %v1828 = vunpack.c.h.b16 %v1124
    %v1829 = vunpack.c.l.b16 %v1125
    %v1830 = vunpack.c.h.b16 %v1125
    %v1831 = vunpack.c.l.b16 %v1126
    %v1832 = vunpack.c.h.b16 %v1126
    %v1833 = vunpack.c.l.b16 %v1127
    %v1834 = vunpack.c.h.b16 %v1127
    %v1835 = vunpack.c.l.b16 %v1128
    %v1836 = vunpack.c.h.b16 %v1128
    %v1837 = vunpack.c.l.b16 %v1129
    %v1838 = vunpack.c.h.b16 %v1129
    %v1839 = vunpack.c.l.b16 %v1130
    %v1840 = vunpack.c.h.b16 %v1130
    %v1841 = vunpack.c.l.b16 %v1131
    %v1842 = vunpack.c.h.b16 %v1131
    %v1843 = vunpack.c.l.b16 %v1132
    %v1844 = vunpack.c.h.b16 %v1132
    %v1845 = vunpack.c.l.b16 %v1133
    %v1846 = vunpack.c.h.b16 %v1133
    %v1847 = vunpack.c.l.b16 %v1134
    %v1848 = vunpack.c.h.b16 %v1134
    %v1849 = vunpack.c.l.b16 %v1135
    %v1850 = vunpack.c.h.b16 %v1135
    %v1851 = vunpack.c.l.b16 %v1136
    %v1852 = vunpack.c.h.b16 %v1136
    %v1853 = vunpack.c.l.b16 %v1137
    %v1854 = vunpack.c.h.b16 %v1137
    %v1855 = vunpack.c.l.b16 %v1138
    %v1856 = vunpack.c.h.b16 %v1138
    %v1857 = vunpack.c.l.b16 %v1139
    %v1858 = vunpack.c.h.b16 %v1139
    %v1859 = vunpack.c.l.b16 %v1140
    %v1860 = vunpack.c.h.b16 %v1140
    %v1861 = vunpack.c.l.b16 %v1141
    %v1862 = vunpack.c.h.b16 %v1141
    %v1863 = vunpack.c.l.b16 %v1142
    %v1864 = vunpack.c.h.b16 %v1142
    %v1865 = vunpack.c.l.b16 %v1143
    %v1866 = vunpack.c.h.b16 %v1143
    %v1867 = vunpack.c.l.b16 %v1144
    %v1868 = vunpack.c.h.b16 %v1144
    %v1869 = vunpack.c.l.b16 %v1145
    %v1870 = vunpack.c.h.b16 %v1145
    %v1871 = vunpack.c.l.b16 %v1146
    %v1872 = vunpack.c.h.b16 %v1146
    %v1873 = vunpack.c.l.b16 %v1147
    %v1874 = vunpack.c.h.b16 %v1147
    %v1875 = vunpack.c.l.b16 %v1148
    %v1876 = vunpack.c.h.b16 %v1148
    %v1877 = vunpack.c.l.b16 %v1149
    %v1878 = vunpack.c.h.b16 %v1149
    %v1879 = vunpack.c.l.b16 %v1150
    %v1880 = vunpack.c.h.b16 %v1150
    %v1881 = vunpack.c.l.b16 %v1151
    %v1882 = vunpack.c.h.b16 %v1151
    %v1883 = vunpack.c.l.b16 %v1152
    %v1884 = vunpack.c.h.b16 %v1152
    %v1885 = vunpack.c.l.b16 %v1153
    %v1886 = vunpack.c.h.b16 %v1153
    %v1887 = vunpack.c.l.b16 %v1154
    %v1888 = vunpack.c.h.b16 %v1154
    %v1889 = vunpack.c.l.b16 %v1155
    %v1890 = vunpack.c.h.b16 %v1155
    %v1891 = vunpack.c.l.b16 %v1156
    %v1892 = vunpack.c.h.b16 %v1156
    %v1893 = vunpack.c.l.b16 %v1157
    %v1894 = vunpack.c.h.b16 %v1157
    %v1895 = vunpack.c.l.b16 %v1158
    %v1896 = vunpack.c.h.b16 %v1158
    %v1897 = vunpack.c.l.b16 %v1159
    %v1898 = vunpack.c.h.b16 %v1159
    %v1899 = vunpack.c.l.b16 %v1160
    %v1900 = vunpack.c.h.b16 %v1160
    %v1901 = vunpack.c.l.b16 %v1161
    %v1902 = vunpack.c.h.b16 %v1161
    %v1903 = vunpack.c.l.b16 %v1162
    %v1904 = vunpack.c.h.b16 %v1162
    %v1905 = vunpack.c.l.b16 %v1163
    %v1906 = vunpack.c.h.b16 %v1163
    %v1907 = vunpack.c.l.b16 %v1164
    %v1908 = vunpack.c.h.b16 %v1164
    %v1909 = vunpack.c.l.b16 %v1165
    %v1910 = vunpack.c.h.b16 %v1165
    %v1911 = vunpack.c.l.b16 %v1166
    %v1912 = vunpack.c.h.b16 %v1166
    %v1913 = vunpack.c.l.b16 %v1167
    %v1914 = vunpack.c.h.b16 %v1167
    %v1915 = vunpack.c.l.b16 %v1168
    %v1916 = vunpack.c.h.b16 %v1168
    %v1917 = vunpack.c.l.b16 %v1169
    %v1918 = vunpack.c.h.b16 %v1169
    %v1919 = vunpack.c.l.b16 %v1170
    %v1920 = vunpack.c.h.b16 %v1170
    %v1921 = vunpack.c.l.b16 %v1171
    %v1922 = vunpack.c.h.b16 %v1171
    %v1923 = vunpack.c.l.b16 %v1172
    %v1924 = vunpack.c.h.b16 %v1172
    %v1925 = vunpack.c.l.b16 %v1173
    %v1926 = vunpack.c.h.b16 %v1173
    %v1927 = vunpack.c.l.b16 %v1174
    %v1928 = vunpack.c.h.b16 %v1174
    %v1929 = vunpack.c.l.b16 %v1175
    %v1930 = vunpack.c.h.b16 %v1175
    %v1931 = vunpack.c.l.b16 %v1176
    %v1932 = vunpack.c.h.b16 %v1176
    %v1933 = vunpack.c.l.b16 %v1177
    %v1934 = vunpack.c.h.b16 %v1177
    %v1935 = vunpack.c.l.b16 %v1178
    %v1936 = vunpack.c.h.b16 %v1178
    %v1937 = vunpack.c.l.b16 %v1179
    %v1938 = vunpack.c.h.b16 %v1179
    %v1939 = vunpack.c.l.b16 %v1180
    %v1940 = vunpack.c.h.b16 %v1180
    %v1941 = vunpack.c.l.b16 %v1181
    %v1942 = vunpack.c.h.b16 %v1181
    %v1943 = vunpack.c.l.b16 %v1182
    %v1944 = vunpack.c.h.b16 %v1182
    %v1945 = vunpack.c.l.b16 %v1183
    %v1946 = vunpack.c.h.b16 %v1183
    %v1947 = vunpack.c.l.b16 %v1184
    %v1948 = vunpack.c.h.b16 %v1184
    %v1949 = vunpack.c.l.b16 %v1185
    %v1950 = vunpack.c.h.b16 %v1185
    %v1951 = vunpack.c.l.b16 %v1186
    %v1952 = vunpack.c.h.b16 %v1186
    %v1953 = vunpack.c.l.b16 %v1187
    %v1954 = vunpack.c.h.b16 %v1187
    %v1955 = vunpack.c.l.b16 %v1188
    %v1956 = vunpack.c.h.b16 %v1188
    %v1957 = vunpack.c.l.b16 %v1189
    %v1958 = vunpack.c.h.b16 %v1189
    %v1959 = vunpack.c.l.b16 %v1190
    %v1960 = vunpack.c.h.b16 %v1190
    %v1961 = vunpack.c.l.b16 %v1191
    %v1962 = vunpack.c.h.b16 %v1191
    %v1963 = vunpack.c.l.b16 %v1192
    %v1964 = vunpack.c.h.b16 %v1192
    %v1965 = vunpack.c.l.b16 %v1193
    %v1966 = vunpack.c.h.b16 %v1193
    %v1967 = vunpack.c.l.b16 %v1194
    %v1968 = vunpack.c.h.b16 %v1194
    %v1969 = vunpack.c.l.b16 %v1195
    %v1970 = vunpack.c.h.b16 %v1195
    %v1971 = vunpack.c.l.b16 %v1196
    %v1972 = vunpack.c.h.b16 %v1196
    %v1973 = vunpack.c.l.b16 %v1197
    %v1974 = vunpack.c.h.b16 %v1197
    %v1975 = vunpack.c.l.b16 %v1198
    %v1976 = vunpack.c.h.b16 %v1198
    %v1977 = vunpack.c.l.b16 %v1199
    %v1978 = vunpack.c.h.b16 %v1199
    %v1979 = vunpack.c.l.b16 %v1200
    %v1980 = vunpack.c.h.b16 %v1200
    %v1981 = vunpack.c.l.b16 %v1201
    %v1982 = vunpack.c.h.b16 %v1201
    %v1983 = vunpack.c.l.b16 %v1202
    %v1984 = vunpack.c.h.b16 %v1202
    %v1985 = vunpack.c.l.b16 %v1203
    %v1986 = vunpack.c.h.b16 %v1203
    %v1987 = vunpack.c.l.b16 %v1204
    %v1988 = vunpack.c.h.b16 %v1204
    %v1989 = vunpack.c.l.b16 %v1205
    %v1990 = vunpack.c.h.b16 %v1205
    %v1991 = vunpack.c.l.b16 %v1206
    %v1992 = vunpack.c.h.b16 %v1206
    %v1993 = vunpack.c.l.b16 %v1207
    %v1994 = vunpack.c.h.b16 %v1207
    %v1995 = vunpack.c.l.b16 %v1208
    %v1996 = vunpack.c.h.b16 %v1208
    %v1997 = vunpack.c.l.b16 %v1209
    %v1998 = vunpack.c.h.b16 %v1209
    %v1999 = vunpack.c.l.b16 %v1210
    %v2000 = vunpack.c.h.b16 %v1210
    %v2001 = vunpack.c.l.b16 %v1211
    %v2002 = vunpack.c.h.b16 %v1211
    %v2003 = vunpack.c.l.b16 %v1212
    %v2004 = vunpack.c.h.b16 %v1212
    %v2005 = vunpack.c.l.b16 %v1213
    %v2006 = vunpack.c.h.b16 %v1213
    %v2007 = vunpack.c.l.b16 %v1214
    %v2008 = vunpack.c.h.b16 %v1214
    %v2009 = vunpack.c.l.b16 %v1215
    %v2010 = vunpack.c.h.b16 %v1215
    %v2011 = vunpack.c.l.b16 %v1216
    %v2012 = vunpack.c.h.b16 %v1216
    %v2013 = vunpack.c.l.b16 %v1217
    %v2014 = vunpack.c.h.b16 %v1217
    %v2015 = vunpack.c.l.b16 %v1218
    %v2016 = vunpack.c.h.b16 %v1218
    %v2017 = vunpack.c.l.b16 %v1219
    %v2018 = vunpack.c.h.b16 %v1219
    %v2019 = vunpack.c.l.b16 %v1220
    %v2020 = vunpack.c.h.b16 %v1220
    %v2021 = vunpack.c.l.b16 %v1221
    %v2022 = vunpack.c.h.b16 %v1221
    %v2023 = vunpack.c.l.b16 %v1222
    %v2024 = vunpack.c.h.b16 %v1222
    %v2025 = vunpack.c.l.b16 %v1223
    %v2026 = vunpack.c.h.b16 %v1223
    %v2027 = vunpack.c.l.b16 %v1224
    %v2028 = vunpack.c.h.b16 %v1224
    %v2029 = vunpack.c.l.b16 %v1225
    %v2030 = vunpack.c.h.b16 %v1225
    %v2031 = vunpack.c.l.b16 %v1226
    %v2032 = vunpack.c.h.b16 %v1226
    %v2033 = vunpack.c.l.b16 %v1227
    %v2034 = vunpack.c.h.b16 %v1227
    %v2035 = vunpack.c.l.b16 %v1228
    %v2036 = vunpack.c.h.b16 %v1228
    %v2037 = vunpack.c.l.b16 %v1229
    %v2038 = vunpack.c.h.b16 %v1229
    %v2039 = vunpack.c.l.b16 %v1230
    %v2040 = vunpack.c.h.b16 %v1230
    %v2041 = vunpack.c.l.b16 %v1231
    %v2042 = vunpack.c.h.b16 %v1231
    %v2043 = vunpack.c.l.b16 %v1232
    %v2044 = vunpack.c.h.b16 %v1232
    %v2045 = vunpack.c.l.b16 %v1233
    %v2046 = vunpack.c.h.b16 %v1233
    %v2047 = vunpack.c.l.b16 %v1234
    %v2048 = vunpack.c.h.b16 %v1234
    %v2049 = vunpack.c.l.b16 %v1235
    %v2050 = vunpack.c.h.b16 %v1235
    %v2051 = vunpack.c.l.b16 %v1236
    %v2052 = vunpack.c.h.b16 %v1236
    %v2053 = vunpack.c.l.b16 %v1237
    %v2054 = vunpack.c.h.b16 %v1237
    %v2055 = vunpack.c.l.b16 %v1238
    %v2056 = vunpack.c.h.b16 %v1238
    %v2057 = vunpack.c.l.b16 %v1239
    %v2058 = vunpack.c.h.b16 %v1239
    %v2059 = vunpack.c.l.b16 %v1240
    %v2060 = vunpack.c.h.b16 %v1240
    %v2061 = vunpack.c.l.b16 %v1241
    %v2062 = vunpack.c.h.b16 %v1241
    %v2063 = vunpack.c.l.b16 %v1242
    %v2064 = vunpack.c.h.b16 %v1242
    %v2065 = vunpack.c.l.b16 %v1243
    %v2066 = vunpack.c.h.b16 %v1243
    %v2067 = vunpack.c.l.b16 %v1244
    %v2068 = vunpack.c.h.b16 %v1244
    %v2069 = vunpack.c.l.b16 %v1245
    %v2070 = vunpack.c.h.b16 %v1245
    %v2071 = vunpack.c.l.b16 %v1246
    %v2072 = vunpack.c.h.b16 %v1246
    %v2073 = vunpack.c.l.b16 %v1247
    %v2074 = vunpack.c.h.b16 %v1247
    %v2075 = vunpack.c.l.b16 %v1248
    %v2076 = vunpack.c.h.b16 %v1248
    %v2077 = vunpack.c.l.b16 %v1249
    %v2078 = vunpack.c.h.b16 %v1249
    %v2079 = vunpack.c.l.b16 %v1250
    %v2080 = vunpack.c.h.b16 %v1250
    %v2081 = vunpack.c.l.b16 %v1251
    %v2082 = vunpack.c.h.b16 %v1251
    %v2083 = vunpack.c.l.b16 %v1252
    %v2084 = vunpack.c.h.b16 %v1252
    %v2085 = vunpack.c.l.b16 %v1253
    %v2086 = vunpack.c.h.b16 %v1253
    %v2087 = vunpack.c.l.b16 %v1254
    %v2088 = vunpack.c.h.b16 %v1254
    %v2089 = vunpack.c.l.b16 %v1255
    %v2090 = vunpack.c.h.b16 %v1255
    %v2091 = vunpack.c.l.b16 %v1256
    %v2092 = vunpack.c.h.b16 %v1256
    %v2093 = vunpack.c.l.b16 %v1257
    %v2094 = vunpack.c.h.b16 %v1257
    %v2095 = vunpack.c.l.b16 %v1258
    %v2096 = vunpack.c.h.b16 %v1258
    %v2097 = vunpack.c.l.b16 %v1259
    %v2098 = vunpack.c.h.b16 %v1259
    %v2099 = vunpack.c.l.b16 %v1260
    %v2100 = vunpack.c.h.b16 %v1260
    %v2101 = vunpack.c.l.b16 %v1261
    %v2102 = vunpack.c.h.b16 %v1261
    %v2103 = vunpack.c.l.b16 %v1262
    %v2104 = vunpack.c.h.b16 %v1262
    %v2105 = vunpack.c.l.b16 %v1263
    %v2106 = vunpack.c.h.b16 %v1263
    %v2107 = vunpack.c.l.b16 %v1264
    %v2108 = vunpack.c.h.b16 %v1264
    %v2109 = vunpack.c.l.b16 %v1265
    %v2110 = vunpack.c.h.b16 %v1265
    %v2111 = vunpack.c.l.b16 %v1266
    %v2112 = vunpack.c.h.b16 %v1266
    %v2113 = vunpack.c.l.b16 %v1267
    %v2114 = vunpack.c.h.b16 %v1267
    %v2115 = vunpack.c.l.b16 %v1268
    %v2116 = vunpack.c.h.b16 %v1268
    %v2117 = vunpack.c.l.b16 %v1269
    %v2118 = vunpack.c.h.b16 %v1269
    %v2119 = vunpack.c.l.b16 %v1270
    %v2120 = vunpack.c.h.b16 %v1270
    %v2121 = vunpack.c.l.b16 %v1271
    %v2122 = vunpack.c.h.b16 %v1271
    %v2123 = vunpack.c.l.b16 %v1272
    %v2124 = vunpack.c.h.b16 %v1272
    %v2125 = vunpack.c.l.b16 %v1273
    %v2126 = vunpack.c.h.b16 %v1273
    %v2127 = vunpack.c.l.b16 %v1274
    %v2128 = vunpack.c.h.b16 %v1274
    %v2129 = vunpack.c.l.b16 %v1275
    %v2130 = vunpack.c.h.b16 %v1275
    %v2131 = vunpack.c.l.b16 %v1276
    %v2132 = vunpack.c.h.b16 %v1276
    %v2133 = vunpack.c.l.b16 %v1277
    %v2134 = vunpack.c.h.b16 %v1277
    %v2135 = vunpack.c.l.b16 %v1278
    %v2136 = vunpack.c.h.b16 %v1278
    %v2137 = vunpack.c.l.b16 %v1279
    %v2138 = vunpack.c.h.b16 %v1279
    %v2139 = vunpack.c.l.b16 %v1280
    %v2140 = vunpack.c.h.b16 %v1280
    %v2141 = vunpack.c.l.b16 %v1281
    %v2142 = vunpack.c.h.b16 %v1281
    %v2143 = vunpack.c.l.b16 %v1282
    %v2144 = vunpack.c.h.b16 %v1282
    %v2145 = vunpack.c.l.b16 %v1283
    %v2146 = vunpack.c.h.b16 %v1283
    %v2147 = vunpack.c.l.b16 %v1284
    %v2148 = vunpack.c.h.b16 %v1284
    %v2149 = vunpack.c.l.b16 %v1285
    %v2150 = vunpack.c.h.b16 %v1285
    %v2151 = vunpack.c.l.b16 %v1286
    %v2152 = vunpack.c.h.b16 %v1286
    %v2153 = vunpack.c.l.b16 %v1287
    %v2154 = vunpack.c.h.b16 %v1287
    %v2155 = vunpack.c.l.b16 %v1288
    %v2156 = vunpack.c.h.b16 %v1288
    %v2157 = vunpack.c.l.b16 %v1289
    %v2158 = vunpack.c.h.b16 %v1289
    %v2159 = vunpack.c.l.b16 %v1290
    %v2160 = vunpack.c.h.b16 %v1290
    %v2161 = vunpack.c.l.b16 %v1291
    %v2162 = vunpack.c.h.b16 %v1291
    %v2163 = vunpack.c.l.b16 %v1292
    %v2164 = vunpack.c.h.b16 %v1292
    %v2165 = vunpack.c.l.b16 %v1293
    %v2166 = vunpack.c.h.b16 %v1293
    %v2167 = vunpack.c.l.b16 %v1294
    %v2168 = vunpack.c.h.b16 %v1294
    %v2169 = vunpack.c.l.b16 %v1295
    %v2170 = vunpack.c.h.b16 %v1295
    %v2171 = vunpack.c.l.b16 %v1296
    %v2172 = vunpack.c.h.b16 %v1296
    %v2173 = vunpack.c.l.b16 %v1297
    %v2174 = vunpack.c.h.b16 %v1297
    %v2175 = vunpack.c.l.b16 %v1298
    %v2176 = vunpack.c.h.b16 %v1298
    %v2177 = vunpack.c.l.b16 %v1299
    %v2178 = vunpack.c.h.b16 %v1299
    %v2179 = vunpack.c.l.b16 %v1300
    %v2180 = vunpack.c.h.b16 %v1300
    %v2181 = vunpack.c.l.b16 %v1301
    %v2182 = vunpack.c.h.b16 %v1301
    %v2183 = vunpack.c.l.b16 %v1302
    %v2184 = vunpack.c.h.b16 %v1302
    %v2185 = vunpack.c.l.b16 %v1303
    %v2186 = vunpack.c.h.b16 %v1303
    %v2187 = vunpack.c.l.b16 %v1304
    %v2188 = vunpack.c.h.b16 %v1304
    %v2189 = vunpack.c.l.b16 %v1305
    %v2190 = vunpack.c.h.b16 %v1305
    %v2191 = vunpack.c.l.b16 %v1306
    %v2192 = vunpack.c.h.b16 %v1306
    %v2193 = vunpack.c.l.b16 %v1307
    %v2194 = vunpack.c.h.b16 %v1307
    %v2195 = vunpack.c.l.b16 %v1308
    %v2196 = vunpack.c.h.b16 %v1308
    %v2197 = vunpack.c.l.b16 %v1309
    %v2198 = vunpack.c.h.b16 %v1309
    %v2199 = vunpack.c.l.b16 %v1310
    %v2200 = vunpack.c.h.b16 %v1310
    %v2201 = vunpack.c.l.b16 %v1311
    %v2202 = vunpack.c.h.b16 %v1311
    %v2203 = vunpack.c.l.b16 %v1312
    %v2204 = vunpack.c.h.b16 %v1312
    %v2205 = vunpack.c.l.b16 %v1313
    %v2206 = vunpack.c.h.b16 %v1313
    %v2207 = vunpack.c.l.b16 %v1314
    %v2208 = vunpack.c.h.b16 %v1314
    %v2209 = vunpack.c.l.b16 %v1315
    %v2210 = vunpack.c.h.b16 %v1315
    %v2211 = vunpack.c.l.b16 %v1316
    %v2212 = vunpack.c.h.b16 %v1316
    %v2213 = vunpack.c.l.b16 %v1317
    %v2214 = vunpack.c.h.b16 %v1317
    %v2215 = vunpack.c.l.b16 %v1318
    %v2216 = vunpack.c.h.b16 %v1318
    %v2217 = vunpack.c.l.b16 %v1319
    %v2218 = vunpack.c.h.b16 %v1319
    %v2219 = vunpack.c.l.b16 %v1320
    %v2220 = vunpack.c.h.b16 %v1320
    %v2221 = vunpack.c.l.b16 %v1321
    %v2222 = vunpack.c.h.b16 %v1321
    %v2223 = vunpack.c.l.b16 %v1322
    %v2224 = vunpack.c.h.b16 %v1322
    %v2225 = vunpack.c.l.b16 %v1323
    %v2226 = vunpack.c.h.b16 %v1323
    %v2227 = vunpack.c.l.b16 %v1324
    %v2228 = vunpack.c.h.b16 %v1324
    %v2229 = vunpack.c.l.b16 %v1325
    %v2230 = vunpack.c.h.b16 %v1325
    %v2231 = vunpack.c.l.b16 %v1326
    %v2232 = vunpack.c.h.b16 %v1326
    %v2233 = vunpack.c.l.b16 %v1327
    %v2234 = vunpack.c.h.b16 %v1327
    %v2235 = vunpack.c.l.b16 %v1328
    %v2236 = vunpack.c.h.b16 %v1328
    %v2237 = vunpack.c.l.b16 %v1329
    %v2238 = vunpack.c.h.b16 %v1329
    %v2239 = vunpack.c.l.b16 %v1330
    %v2240 = vunpack.c.h.b16 %v1330
    %v2241 = vunpack.c.l.b16 %v1331
    %v2242 = vunpack.c.h.b16 %v1331
    %v2243 = vunpack.c.l.b16 %v1332
    %v2244 = vunpack.c.h.b16 %v1332
    %v2245 = vunpack.c.l.b16 %v1333
    %v2246 = vunpack.c.h.b16 %v1333
    %v2247 = vunpack.c.l.b16 %v1334
    %v2248 = vunpack.c.h.b16 %v1334
    %v2249 = vunpack.c.l.b16 %v1335
    %v2250 = vunpack.c.h.b16 %v1335
    %v2251 = vunpack.c.l.b16 %v1336
    %v2252 = vunpack.c.h.b16 %v1336
    %v2253 = vunpack.c.l.b16 %v1337
    %v2254 = vunpack.c.h.b16 %v1337
    %v2255 = vunpack.c.l.b16 %v1338
    %v2256 = vunpack.c.h.b16 %v1338
    %v2257 = vunpack.c.l.b16 %v1339
    %v2258 = vunpack.c.h.b16 %v1339
    %v2259 = vunpack.c.l.b16 %v1340
    %v2260 = vunpack.c.h.b16 %v1340
    %v2261 = vunpack.c.l.b16 %v1341
    %v2262 = vunpack.c.h.b16 %v1341
    %v2263 = vunpack.c.l.b16 %v1342
    %v2264 = vunpack.c.h.b16 %v1342
    %v2265 = vunpack.c.l.b16 %v1343
    %v2266 = vunpack.c.h.b16 %v1343
    %v2267 = vunpack.c.l.b16 %v1344
    %v2268 = vunpack.c.h.b16 %v1344
    %v2269 = vunpack.c.l.b16 %v1345
    %v2270 = vunpack.c.h.b16 %v1345
    %v2271 = vunpack.c.l.b16 %v1346
    %v2272 = vunpack.c.h.b16 %v1346
    %v2273 = vunpack.c.l.b16 %v1347
    %v2274 = vunpack.c.h.b16 %v1347
    %v2275 = vunpack.c.l.b16 %v1348
    %v2276 = vunpack.c.h.b16 %v1348
    %v2277 = vunpack.c.l.b16 %v1349
    %v2278 = vunpack.c.h.b16 %v1349
    %v2279 = vunpack.c.l.b16 %v1350
    %v2280 = vunpack.c.h.b16 %v1350
    %v2281 = vunpack.c.l.b16 %v1351
    %v2282 = vunpack.c.h.b16 %v1351
    %v2283 = vunpack.c.l.b16 %v1352
    %v2284 = vunpack.c.h.b16 %v1352
    %v2285 = vunpack.c.l.b16 %v1353
    %v2286 = vunpack.c.h.b16 %v1353
    %v2287 = vunpack.c.l.b16 %v1354
    %v2288 = vunpack.c.h.b16 %v1354
    %v2289 = vunpack.c.l.b16 %v1355
    %v2290 = vunpack.c.h.b16 %v1355
    %v2291 = vunpack.c.l.b16 %v1356
    %v2292 = vunpack.c.h.b16 %v1356
    %v2293 = vunpack.c.l.b16 %v1357
    %v2294 = vunpack.c.h.b16 %v1357
    %v2295 = vunpack.c.l.b16 %v1358
    %v2296 = vunpack.c.h.b16 %v1358
    %v2297 = vunpack.c.l.b16 %v1359
    %v2298 = vunpack.c.h.b16 %v1359
    %v2299 = vunpack.c.l.b16 %v1360
    %v2300 = vunpack.c.h.b16 %v1360
    %v2301 = vunpack.c.l.b16 %v1361
    %v2302 = vunpack.c.h.b16 %v1361
    %v2303 = vunpack.c.l.b16 %v1362
    %v2304 = vunpack.c.h.b16 %v1362
    %v2305 = vunpack.c.l.b16 %v1363
    %v2306 = vunpack.c.h.b16 %v1363
    %v2307 = vunpack.c.l.b16 %v1364
    %v2308 = vunpack.c.h.b16 %v1364
    %v2309 = vunpack.c.l.b16 %v1365
    %v2310 = vunpack.c.h.b16 %v1365
    %v2311 = vunpack.c.l.b16 %v1366
    %v2312 = vunpack.c.h.b16 %v1366
    %v2313 = vunpack.c.l.b16 %v1367
    %v2314 = vunpack.c.h.b16 %v1367
    %v2315 = vunpack.c.l.b16 %v1368
    %v2316 = vunpack.c.h.b16 %v1368
    %v2317 = vunpack.c.l.b16 %v1369
    %v2318 = vunpack.c.h.b16 %v1369
    %v2319 = vunpack.c.l.b16 %v1370
    %v2320 = vunpack.c.h.b16 %v1370
    %v2321 = vunpack.c.l.b16 %v1371
    %v2322 = vunpack.c.h.b16 %v1371
    %v2323 = vunpack.c.l.b16 %v1372
    %v2324 = vunpack.c.h.b16 %v1372
    %v2325 = vunpack.c.l.b16 %v1373
    %v2326 = vunpack.c.h.b16 %v1373
    %v2327 = vunpack.c.l.b16 %v1374
    %v2328 = vunpack.c.h.b16 %v1374
    %v2329 = vunpack.c.l.b16 %v1375
    %v2330 = vunpack.c.h.b16 %v1375
    %v2331 = vunpack.c.l.b16 %v1376
    %v2332 = vunpack.c.h.b16 %v1376
    %v2333 = vunpack.c.l.b16 %v1377
    %v2334 = vunpack.c.h.b16 %v1377
    %v2335 = vunpack.c.l.b16 %v1378
    %v2336 = vunpack.c.h.b16 %v1378
    %v2337 = vunpack.c.l.b16 %v1379
    %v2338 = vunpack.c.h.b16 %v1379
    %v2339 = vunpack.c.l.b16 %v1380
    %v2340 = vunpack.c.h.b16 %v1380
    %v2341 = vunpack.c.l.b16 %v1381
    %v2342 = vunpack.c.h.b16 %v1381
    %v2343 = vunpack.c.l.b16 %v1382
    %v2344 = vunpack.c.h.b16 %v1382
    %v2345 = vunpack.c.l.b16 %v1383
    %v2346 = vunpack.c.h.b16 %v1383
    %v2347 = vunpack.c.l.b16 %v1384
    %v2348 = vunpack.c.h.b16 %v1384
    %v2349 = vunpack.c.l.b16 %v1385
    %v2350 = vunpack.c.h.b16 %v1385
    %v2351 = vunpack.c.l.b16 %v1386
    %v2352 = vunpack.c.h.b16 %v1386
    %v2353 = vunpack.c.l.b16 %v1387
    %v2354 = vunpack.c.h.b16 %v1387
    %v2355 = vunpack.c.l.b16 %v1388
    %v2356 = vunpack.c.h.b16 %v1388
    %v2357 = vunpack.c.l.b16 %v1389
    %v2358 = vunpack.c.h.b16 %v1389
    %v2359 = vunpack.c.l.b16 %v1390
    %v2360 = vunpack.c.h.b16 %v1390
    %v2361 = vunpack.c.l.b16 %v1391
    %v2362 = vunpack.c.h.b16 %v1391
    %v2363 = vunpack.c.l.b16 %v1392
    %v2364 = vunpack.c.h.b16 %v1392
    %v2365 = vunpack.c.l.b16 %v1393
    %v2366 = vunpack.c.h.b16 %v1393
    %v2367 = vunpack.c.l.b16 %v1394
    %v2368 = vunpack.c.h.b16 %v1394
    %v2369 = vunpack.c.l.b16 %v1395
    %v2370 = vunpack.c.h.b16 %v1395
    %v2371 = vunpack.c.l.b16 %v1396
    %v2372 = vunpack.c.h.b16 %v1396
    %v2373 = vunpack.c.l.b16 %v1397
    %v2374 = vunpack.c.h.b16 %v1397
    %v2375 = vunpack.c.l.b16 %v1398
    %v2376 = vunpack.c.h.b16 %v1398
    %v2377 = vunpack.c.l.b16 %v1399
    %v2378 = vunpack.c.h.b16 %v1399
    %v2379 = vunpack.c.l.b16 %v1400
    %v2380 = vunpack.c.h.b16 %v1400
    %v2381 = vunpack.c.l.b16 %v1401
    %v2382 = vunpack.c.h.b16 %v1401
    %v2383 = vunpack.c.l.b16 %v1402
    %v2384 = vunpack.c.h.b16 %v1402
    %v2385 = vunpack.c.l.b16 %v1403
    %v2386 = vunpack.c.h.b16 %v1403
    %v2387 = vunpack.c.l.b16 %v1404
    %v2388 = vunpack.c.h.b16 %v1404
    %v2389 = vunpack.c.l.b16 %v1405
    %v2390 = vunpack.c.h.b16 %v1405
    %v2391 = vunpack.c.l.b16 %v1406
    %v2392 = vunpack.c.h.b16 %v1406
    %v2393 = vunpack.c.l.b16 %v1407
    %v2394 = vunpack.c.h.b16 %v1407
    %v2395 = vunpack.c.l.b16 %v1408
    %v2396 = vunpack.c.h.b16 %v1408
    %v2397 = vunpack.c.l.b16 %v1409
    %v2398 = vunpack.c.h.b16 %v1409
    %v2399 = vunpack.c.l.b16 %v1410
    %v2400 = vunpack.c.h.b16 %v1410
    %v2401 = vunpack.c.l.b16 %v1411
    %v2402 = vunpack.c.h.b16 %v1411
    %v2403 = vunpack.c.l.b16 %v1412
    %v2404 = vunpack.c.h.b16 %v1412
    %v2405 = vunpack.c.l.b16 %v1413
    %v2406 = vunpack.c.h.b16 %v1413
    %v2407 = vunpack.c.l.b16 %v1414
    %v2408 = vunpack.c.h.b16 %v1414
    %v2409 = vunpack.c.l.b16 %v1415
    %v2410 = vunpack.c.h.b16 %v1415
    %v2411 = vunpack.c.l.b16 %v1416
    %v2412 = vunpack.c.h.b16 %v1416
    %v2413 = vunpack.c.l.b16 %v1417
    %v2414 = vunpack.c.h.b16 %v1417
    %v2415 = vunpack.c.l.b16 %v1418
    %v2416 = vunpack.c.h.b16 %v1418
    %v2417 = vunpack.c.l.b16 %v1419
    %v2418 = vunpack.c.h.b16 %v1419
    %v2419 = vunpack.c.l.b16 %v1420
    %v2420 = vunpack.c.h.b16 %v1420
    %v2421 = vunpack.c.l.b16 %v1421
    %v2422 = vunpack.c.h.b16 %v1421
    %v2423 = vunpack.c.l.b16 %v1422
    %v2424 = vunpack.c.h.b16 %v1422
    %v2425 = vpack.c.b16 %v1789, %v1785
    %v2426 = vpack.c.b16 %v1790, %v1786
    %v2427 = vpack.c.b16 %v1791, %v1787
    %v2428 = vpack.c.b16 %v1792, %v1788
    %v2429 = vpack.c.b16 %v1797, %v1793
    %v2430 = vpack.c.b16 %v1798, %v1794
    %v2431 = vpack.c.b16 %v1799, %v1795
    %v2432 = vpack.c.b16 %v1800, %v1796
    %v2433 = vpack.c.b16 %v1805, %v1801
    %v2434 = vpack.c.b16 %v1806, %v1802
    %v2435 = vpack.c.b16 %v1807, %v1803
    %v2436 = vpack.c.b16 %v1808, %v1804
    %v2437 = vpack.c.b16 %v1813, %v1809
    %v2438 = vpack.c.b16 %v1814, %v1810
    %v2439 = vpack.c.b16 %v1815, %v1811
    %v2440 = vpack.c.b16 %v1816, %v1812
    %v2441 = vpack.c.b16 %v1821, %v1817
    %v2442 = vpack.c.b16 %v1822, %v1818
    %v2443 = vpack.c.b16 %v1823, %v1819
    %v2444 = vpack.c.b16 %v1824, %v1820
    %v2445 = vpack.c.b16 %v1829, %v1825
    %v2446 = vpack.c.b16 %v1830, %v1826
    %v2447 = vpack.c.b16 %v1831, %v1827
    %v2448 = vpack.c.b16 %v1832, %v1828
    %v2449 = vpack.c.b16 %v1837, %v1833
    %v2450 = vpack.c.b16 %v1838, %v1834
    %v2451 = vpack.c.b16 %v1839, %v1835
    %v2452 = vpack.c.b16 %v1840, %v1836
    %v2453 = vpack.c.b16 %v1845, %v1841
    %v2454 = vpack.c.b16 %v1846, %v1842
    %v2455 = vpack.c.b16 %v1847, %v1843
    %v2456 = vpack.c.b16 %v1848, %v1844
    %v2457 = vpack.c.b16 %v1853, %v1849
    %v2458 = vpack.c.b16 %v1854, %v1850
    %v2459 = vpack.c.b16 %v1855, %v1851
    %v2460 = vpack.c.b16 %v1856, %v1852
    %v2461 = vpack.c.b16 %v1861, %v1857
    %v2462 = vpack.c.b16 %v1862, %v1858
    %v2463 = vpack.c.b16 %v1863, %v1859
    %v2464 = vpack.c.b16 %v1864, %v1860
    %v2465 = vpack.c.b16 %v1869, %v1865
    %v2466 = vpack.c.b16 %v1870, %v1866
    %v2467 = vpack.c.b16 %v1871, %v1867
    %v2468 = vpack.c.b16 %v1872, %v1868
    %v2469 = vpack.c.b16 %v1877, %v1873
    %v2470 = vpack.c.b16 %v1878, %v1874
    %v2471 = vpack.c.b16 %v1879, %v1875
    %v2472 = vpack.c.b16 %v1880, %v1876
    %v2473 = vpack.c.b16 %v1885, %v1881
    %v2474 = vpack.c.b16 %v1886, %v1882
    %v2475 = vpack.c.b16 %v1887, %v1883
    %v2476 = vpack.c.b16 %v1888, %v1884
    %v2477 = vpack.c.b16 %v1893, %v1889
    %v2478 = vpack.c.b16 %v1894, %v1890
    %v2479 = vpack.c.b16 %v1895, %v1891
    %v2480 = vpack.c.b16 %v1896, %v1892
    %v2481 = vpack.c.b16 %v1901, %v1897
    %v2482 = vpack.c.b16 %v1902, %v1898
    %v2483 = vpack.c.b16 %v1903, %v1899
    %v2484 = vpack.c.b16 %v1904, %v1900
    %v2485 = vpack.c.b16 %v1909, %v1905
    %v2486 = vpack.c.b16 %v1910, %v1906
    %v2487 = vpack.c.b16 %v1911, %v1907
    %v2488 = vpack.c.b16 %v1912, %v1908
    %v2489 = vpack.c.b16 %v1917, %v1913
    %v2490 = vpack.c.b16 %v1918, %v1914
    %v2491 = vpack.c.b16 %v1919, %v1915
    %v2492 = vpack.c.b16 %v1920, %v1916
    %v2493 = vpack.c.b16 %v1925, %v1921
    %v2494 = vpack.c.b16 %v1926, %v1922
    %v2495 = vpack.c.b16 %v1927, %v1923
    %v2496 = vpack.c.b16 %v1928, %v1924
    %v2497 = vpack.c.b16 %v1933, %v1929
    %v2498 = vpack.c.b16 %v1934, %v1930
    %v2499 = vpack.c.b16 %v1935, %v1931
    %v2500 = vpack.c.b16 %v1936, %v1932
    %v2501 = vpack.c.b16 %v1941, %v1937
    %v2502 = vpack.c.b16 %v1942, %v1938
    %v2503 = vpack.c.b16 %v1943, %v1939
    %v2504 = vpack.c.b16 %v1944, %v1940
    %v2505 = vpack.c.b16 %v1949, %v1945
    %v2506 = vpack.c.b16 %v1950, %v1946
    %v2507 = vpack.c.b16 %v1951, %v1947
    %v2508 = vpack.c.b16 %v1952, %v1948
    %v2509 = vpack.c.b16 %v1957, %v1953
    %v2510 = vpack.c.b16 %v1958, %v1954
    %v2511 = vpack.c.b16 %v1959, %v1955
    %v2512 = vpack.c.b16 %v1960, %v1956
    %v2513 = vpack.c.b16 %v1965, %v1961
    %v2514 = vpack.c.b16 %v1966, %v1962
    %v2515 = vpack.c.b16 %v1967, %v1963
    %v2516 = vpack.c.b16 %v1968, %v1964
    %v2517 = vpack.c.b16 %v1973, %v1969
    %v2518 = vpack.c.b16 %v1974, %v1970
    %v2519 = vpack.c.b16 %v1975, %v1971
    %v2520 = vpack.c.b16 %v1976, %v1972
    %v2521 = vpack.c.b16 %v1981, %v1977
    %v2522 = vpack.c.b16 %v1982, %v1978
    %v2523 = vpack.c.b16 %v1983, %v1979
    %v2524 = vpack.c.b16 %v1984, %v1980
    %v2525 = vpack.c.b16 %v1989, %v1985
    %v2526 = vpack.c.b16 %v1990, %v1986
    %v2527 = vpack.c.b16 %v1991, %v1987
    %v2528 = vpack.c.b16 %v1992, %v1988
    %v2529 = vpack.c.b16 %v1997, %v1993
    %v2530 = vpack.c.b16 %v1998, %v1994
    %v2531 = vpack.c.b16 %v1999, %v1995
    %v2532 = vpack.c.b16 %v2000, %v1996
    %v2533 = vpack.c.b16 %v2005, %v2001
    %v2534 = vpack.c.b16 %v2006, %v2002
    %v2535 = vpack.c.b16 %v2007, %v2003
    %v2536 = vpack.c.b16 %v2008, %v2004
    %v2537 = vpack.c.b16 %v2013, %v2009
    %v2538 = vpack.c.b16 %v2014, %v2010
    %v2539 = vpack.c.b16 %v2015, %v2011
    %v2540 = vpack.c.b16 %v2016, %v2012
    %v2541 = vpack.c.b16 %v2021, %v2017
    %v2542 = vpack.c.b16 %v2022, %v2018
    %v2543 = vpack.c.b16 %v2023, %v2019
    %v2544 = vpack.c.b16 %v2024, %v2020
    %v2545 = vpack.c.b16 %v2029, %v2025
    %v2546 = vpack.c.b16 %v2030, %v2026
    %v2547 = vpack.c.b16 %v2031, %v2027
    %v2548 = vpack.c.b16 %v2032, %v2028
    %v2549 = vpack.c.b16 %v2037, %v2033
    %v2550 = vpack.c.b16 %v2038, %v2034
    %v2551 = vpack.c.b16 %v2039, %v2035
    %v2552 = vpack.c.b16 %v2040, %v2036
    %v2553 = vpack.c.b16 %v2045, %v2041
    %v2554 = vpack.c.b16 %v2046, %v2042
    %v2555 = vpack.c.b16 %v2047, %v2043
    %v2556 = vpack.c.b16 %v2048, %v2044
    %v2557 = vpack.c.b16 %v2053, %v2049
    %v2558 = vpack.c.b16 %v2054, %v2050
    %v2559 = vpack.c.b16 %v2055, %v2051
    %v2560 = vpack.c.b16 %v2056, %v2052
    %v2561 = vpack.c.b16 %v2061, %v2057
    %v2562 = vpack.c.b16 %v2062, %v2058
    %v2563 = vpack.c.b16 %v2063, %v2059
    %v2564 = vpack.c.b16 %v2064, %v2060
    %v2565 = vpack.c.b16 %v2069, %v2065
    %v2566 = vpack.c.b16 %v2070, %v2066
    %v2567 = vpack.c.b16 %v2071, %v2067
    %v2568 = vpack.c.b16 %v2072, %v2068
    %v2569 = vpack.c.b16 %v2077, %v2073
    %v2570 = vpack.c.b16 %v2078, %v2074
    %v2571 = vpack.c.b16 %v2079, %v2075
    %v2572 = vpack.c.b16 %v2080, %v2076
    %v2573 = vpack.c.b16 %v2085, %v2081
    %v2574 = vpack.c.b16 %v2086, %v2082
    %v2575 = vpack.c.b16 %v2087, %v2083
    %v2576 = vpack.c.b16 %v2088, %v2084
    %v2577 = vpack.c.b16 %v2093, %v2089
    %v2578 = vpack.c.b16 %v2094, %v2090
    %v2579 = vpack.c.b16 %v2095, %v2091
    %v2580 = vpack.c.b16 %v2096, %v2092
    %v2581 = vpack.c.b16 %v2101, %v2097
    %v2582 = vpack.c.b16 %v2102, %v2098
    %v2583 = vpack.c.b16 %v2103, %v2099
    %v2584 = vpack.c.b16 %v2104, %v2100
    %v2585 = vpack.c.b16 %v2109, %v2105
    %v2586 = vpack.c.b16 %v2110, %v2106
    %v2587 = vpack.c.b16 %v2111, %v2107
    %v2588 = vpack.c.b16 %v2112, %v2108
    %v2589 = vpack.c.b16 %v2117, %v2113
    %v2590 = vpack.c.b16 %v2118, %v2114
    %v2591 = vpack.c.b16 %v2119, %v2115
    %v2592 = vpack.c.b16 %v2120, %v2116
    %v2593 = vpack.c.b16 %v2125, %v2121
    %v2594 = vpack.c.b16 %v2126, %v2122
    %v2595 = vpack.c.b16 %v2127, %v2123
    %v2596 = vpack.c.b16 %v2128, %v2124
    %v2597 = vpack.c.b16 %v2133, %v2129
    %v2598 = vpack.c.b16 %v2134, %v2130
    %v2599 = vpack.c.b16 %v2135, %v2131
    %v2600 = vpack.c.b16 %v2136, %v2132
    %v2601 = vpack.c.b16 %v2141, %v2137
    %v2602 = vpack.c.b16 %v2142, %v2138
    %v2603 = vpack.c.b16 %v2143, %v2139
    %v2604 = vpack.c.b16 %v2144, %v2140
    %v2605 = vpack.c.b16 %v2149, %v2145
    %v2606 = vpack.c.b16 %v2150, %v2146
    %v2607 = vpack.c.b16 %v2151, %v2147
    %v2608 = vpack.c.b16 %v2152, %v2148
    %v2609 = vpack.c.b16 %v2157, %v2153
    %v2610 = vpack.c.b16 %v2158, %v2154
    %v2611 = vpack.c.b16 %v2159, %v2155
    %v2612 = vpack.c.b16 %v2160, %v2156
    %v2613 = vpack.c.b16 %v2165, %v2161
    %v2614 = vpack.c.b16 %v2166, %v2162
    %v2615 = vpack.c.b16 %v2167, %v2163
    %v2616 = vpack.c.b16 %v2168, %v2164
    %v2617 = vpack.c.b16 %v2173, %v2169
    %v2618 = vpack.c.b16 %v2174, %v2170
    %v2619 = vpack.c.b16 %v2175, %v2171
    %v2620 = vpack.c.b16 %v2176, %v2172
    %v2621 = vpack.c.b16 %v2181, %v2177
    %v2622 = vpack.c.b16 %v2182, %v2178
    %v2623 = vpack.c.b16 %v2183, %v2179
    %v2624 = vpack.c.b16 %v2184, %v2180
    %v2625 = vpack.c.b16 %v2189, %v2185
    %v2626 = vpack.c.b16 %v2190, %v2186
    %v2627 = vpack.c.b16 %v2191, %v2187
    %v2628 = vpack.c.b16 %v2192, %v2188
    %v2629 = vpack.c.b16 %v2197, %v2193
    %v2630 = vpack.c.b16 %v2198, %v2194
    %v2631 = vpack.c.b16 %v2199, %v2195
    %v2632 = vpack.c.b16 %v2200, %v2196
    %v2633 = vpack.c.b16 %v2205, %v2201
    %v2634 = vpack.c.b16 %v2206, %v2202
    %v2635 = vpack.c.b16 %v2207, %v2203
    %v2636 = vpack.c.b16 %v2208, %v2204
    %v2637 = vpack.c.b16 %v2213, %v2209
    %v2638 = vpack.c.b16 %v2214, %v2210
    %v2639 = vpack.c.b16 %v2215, %v2211
    %v2640 = vpack.c.b16 %v2216, %v2212
    %v2641 = vpack.c.b16 %v2221, %v2217
    %v2642 = vpack.c.b16 %v2222, %v2218
    %v2643 = vpack.c.b16 %v2223, %v2219
    %v2644 = vpack.c.b16 %v2224, %v2220
    %v2645 = vpack.c.b16 %v2229, %v2225
    %v2646 = vpack.c.b16 %v2230, %v2226
    %v2647 = vpack.c.b16 %v2231, %v2227
    %v2648 = vpack.c.b16 %v2232, %v2228
    %v2649 = vpack.c.b16 %v2237, %v2233
    %v2650 = vpack.c.b16 %v2238, %v2234
    %v2651 = vpack.c.b16 %v2239, %v2235
    %v2652 = vpack.c.b16 %v2240, %v2236
    %v2653 = vpack.c.b16 %v2245, %v2241
    %v2654 = vpack.c.b16 %v2246, %v2242
    %v2655 = vpack.c.b16 %v2247, %v2243
    %v2656 = vpack.c.b16 %v2248, %v2244
    %v2657 = vpack.c.b16 %v2253, %v2249
    %v2658 = vpack.c.b16 %v2254, %v2250
    %v2659 = vpack.c.b16 %v2255, %v2251
    %v2660 = vpack.c.b16 %v2256, %v2252
    %v2661 = vpack.c.b16 %v2261, %v2257
    %v2662 = vpack.c.b16 %v2262, %v2258
    %v2663 = vpack.c.b16 %v2263, %v2259
    %v2664 = vpack.c.b16 %v2264, %v2260
    %v2665 = vpack.c.b16 %v2269, %v2265
    %v2666 = vpack.c.b16 %v2270, %v2266
    %v2667 = vpack.c.b16 %v2271, %v2267
    %v2668 = vpack.c.b16 %v2272, %v2268
    %v2669 = vpack.c.b16 %v2277, %v2273
    %v2670 = vpack.c.b16 %v2278, %v2274
    %v2671 = vpack.c.b16 %v2279, %v2275
    %v2672 = vpack.c.b16 %v2280, %v2276
    %v2673 = vpack.c.b16 %v2285, %v2281
    %v2674 = vpack.c.b16 %v2286, %v2282
    %v2675 = vpack.c.b16 %v2287, %v2283
    %v2676 = vpack.c.b16 %v2288, %v2284
    %v2677 = vpack.c.b16 %v2293, %v2289
    %v2678 = vpack.c.b16 %v2294, %v2290
    %v2679 = vpack.c.b16 %v2295, %v2291
    %v2680 = vpack.c.b16 %v2296, %v2292
    %v2681 = vpack.c.b16 %v2301, %v2297
    %v2682 = vpack.c.b16 %v2302, %v2298
    %v2683 = vpack.c.b16 %v2303, %v2299
    %v2684 = vpack.c.b16 %v2304, %v2300
    %v2685 = vpack.c.b16 %v2309, %v2305
    %v2686 = vpack.c.b16 %v2310, %v2306
    %v2687 = vpack.c.b16 %v2311, %v2307
    %v2688 = vpack.c.b16 %v2312, %v2308
    %v2689 = vpack.c.b16 %v2317, %v2313
    %v2690 = vpack.c.b16 %v2318, %v2314
    %v2691 = vpack.c.b16 %v2319, %v2315
    %v2692 = vpack.c.b16 %v2320, %v2316
    %v2693 = vpack.c.b16 %v2325, %v2321
    %v2694 = vpack.c.b16 %v2326, %v2322
    %v2695 = vpack.c.b16 %v2327, %v2323
    %v2696 = vpack.c.b16 %v2328, %v2324
    %v2697 = vpack.c.b16 %v2333, %v2329
    %v2698 = vpack.c.b16 %v2334, %v2330
    %v2699 = vpack.c.b16 %v2335, %v2331
    %v2700 = vpack.c.b16 %v2336, %v2332
    %v2701 = vpack.c.b16 %v2341, %v2337
    %v2702 = vpack.c.b16 %v2342, %v2338
    %v2703 = vpack.c.b16 %v2343, %v2339
    %v2704 = vpack.c.b16 %v2344, %v2340
    %v2705 = vpack.c.b16 %v2349, %v2345
    %v2706 = vpack.c.b16 %v2350, %v2346
    %v2707 = vpack.c.b16 %v2351, %v2347
    %v2708 = vpack.c.b16 %v2352, %v2348
    %v2709 = vpack.c.b16 %v2357, %v2353
    %v2710 = vpack.c.b16 %v2358, %v2354
    %v2711 = vpack.c.b16 %v2359, %v2355
    %v2712 = vpack.c.b16 %v2360, %v2356
    %v2713 = vpack.c.b16 %v2365, %v2361
    %v2714 = vpack.c.b16 %v2366, %v2362
    %v2715 = vpack.c.b16 %v2367, %v2363
    %v2716 = vpack.c.b16 %v2368, %v2364
    %v2717 = vpack.c.b16 %v2373, %v2369
    %v2718 = vpack.c.b16 %v2374, %v2370
    %v2719 = vpack.c.b16 %v2375, %v2371
    %v2720 = vpack.c.b16 %v2376, %v2372
    %v2721 = vpack.c.b16 %v2381, %v2377
    %v2722 = vpack.c.b16 %v2382, %v2378
    %v2723 = vpack.c.b16 %v2383, %v2379
    %v2724 = vpack.c.b16 %v2384, %v2380
    %v2725 = vpack.c.b16 %v2389, %v2385
    %v2726 = vpack.c.b16 %v2390, %v2386
    %v2727 = vpack.c.b16 %v2391, %v2387
    %v2728 = vpack.c.b16 %v2392, %v2388
    %v2729 = vpack.c.b16 %v2397, %v2393
    %v2730 = vpack.c.b16 %v2398, %v2394
    %v2731 = vpack.c.b16 %v2399, %v2395
    %v2732 = vpack.c.b16 %v2400, %v2396
    %v2733 = vpack.c.b16 %v2405, %v2401
    %v2734 = vpack.c.b16 %v2406, %v2402
    %v2735 = vpack.c.b16 %v2407, %v2403
    %v2736 = vpack.c.b16 %v2408, %v2404
    %v2737 = vpack.c.b16 %v2413, %v2409
    %v2738 = vpack.c.b16 %v2414, %v2410
    %v2739 = vpack.c.b16 %v2415, %v2411
    %v2740 = vpack.c.b16 %v2416, %v2412
    %v2741 = vpack.c.b16 %v2421, %v2417
    %v2742 = vpack.c.b16 %v2422, %v2418
    %v2743 = vpack.c.b16 %v2423, %v2419
    %v2744 = vpack.c.b16 %v2424, %v2420
    %3065 = vmatprep.subr.bf16.mxu0 %v2454
    %3066 = vmatpush1.bf16.msra.mxu0 %v2453
    %3067 = vmatprep.subr.bf16.mxu0 %v2450
    %3068 = vmatpush1.bf16.msra.mxu0 %v2449
    %3069 = vmatprep.subr.bf16.mxu0 %v2446
    %3070 = vmatpush1.bf16.msra.mxu0 %v2445
    %3071 = vmatprep.subr.bf16.mxu0 %v2442
    %3072 = vmatpush1.bf16.msra.mxu0 %v2441
    %3073 = vmatprep.subr.bf16.mxu0 %v2438
    %3074 = vmatpush1.bf16.msra.mxu0 %v2437
    %3075 = vmatprep.subr.bf16.mxu0 %v2434
    %3076 = vmatpush1.bf16.msra.mxu0 %v2433
    %3077 = vmatprep.subr.bf16.mxu0 %v2430
    %3078 = vmatpush1.bf16.msra.mxu0 %v2429
    %3079 = vmatprep.subr.bf16.mxu0 %v2426
    %3080 = vmatpush1.bf16.msra.mxu0 %v2425
    %3081 = vmatprep.subr.bf16.mxu0 %v2486
    %3082 = vmatpush2.bf16.msra.mxu0 %v2485
    %3083 = vmatprep.subr.bf16.mxu0 %v2482
    %3084 = vmatpush2.bf16.msra.mxu0 %v2481
    %3085 = vmatprep.subr.bf16.mxu0 %v2478
    %3086 = vmatpush2.bf16.msra.mxu0 %v2477
    %3087 = vmatprep.subr.bf16.mxu0 %v2474
    %3088 = vmatpush2.bf16.msra.mxu0 %v2473
    %3089 = vmatprep.subr.bf16.mxu0 %v2470
    %3090 = vmatpush2.bf16.msra.mxu0 %v2469
    %3091 = vmatprep.subr.bf16.mxu0 %v2466
    %3092 = vmatpush2.bf16.msra.mxu0 %v2465
    %3093 = vmatprep.subr.bf16.mxu0 %v2462
    %3094 = vmatpush2.bf16.msra.mxu0 %v2461
    %3095 = vmatprep.subr.bf16.mxu0 %v2458
    %3096 = vmatpush2.bf16.msra.mxu0 %v2457
    %3097 = vmatprep.mubr.bf16.mxu0 %v1446
    %3098 = vmatmul.mubr.bf16.gmra.mxu0 %v1445
    %v3099 = vpop.f32.mrf.mxu0
    %v3100 = vadd.f32 %v1428, %v3099
    %v3101 = vpop.f32.mrf.mxu0
    %v3102 = vadd.f32 %v1432, %v3101
    %v3103 = vpop.f32.mrf.mxu0
    %v3104 = vadd.f32 %v1428, %v3103
    %v3105 = vpop.f32.mrf.mxu0
    %v3106 = vadd.f32 %v1432, %v3105
    %3107 = vdwg.mxu0
    %3108 = vmatprep.subr.bf16.mxu0 %v2518
    %3109 = vmatpush1.bf16.msra.mxu0 %v2517
    %3110 = vmatprep.subr.bf16.mxu0 %v2514
    %3111 = vmatpush1.bf16.msra.mxu0 %v2513
    %3112 = vmatprep.subr.bf16.mxu0 %v2510
    %3113 = vmatpush1.bf16.msra.mxu0 %v2509
    %3114 = vmatprep.subr.bf16.mxu0 %v2506
    %3115 = vmatpush1.bf16.msra.mxu0 %v2505
    %3116 = vmatprep.subr.bf16.mxu0 %v2502
    %3117 = vmatpush1.bf16.msra.mxu0 %v2501
    %3118 = vmatprep.subr.bf16.mxu0 %v2498
    %3119 = vmatpush1.bf16.msra.mxu0 %v2497
    %3120 = vmatprep.subr.bf16.mxu0 %v2494
    %3121 = vmatpush1.bf16.msra.mxu0 %v2493
    %3122 = vmatprep.subr.bf16.mxu0 %v2490
    %3123 = vmatpush1.bf16.msra.mxu0 %v2489
    %3124 = vmatprep.subr.bf16.mxu0 %v2550
    %3125 = vmatpush2.bf16.msra.mxu0 %v2549
    %3126 = vmatprep.subr.bf16.mxu0 %v2546
    %3127 = vmatpush2.bf16.msra.mxu0 %v2545
    %3128 = vmatprep.subr.bf16.mxu0 %v2542
    %3129 = vmatpush2.bf16.msra.mxu0 %v2541
    %3130 = vmatprep.subr.bf16.mxu0 %v2538
    %3131 = vmatpush2.bf16.msra.mxu0 %v2537
    %3132 = vmatprep.subr.bf16.mxu0 %v2534
    %3133 = vmatpush2.bf16.msra.mxu0 %v2533
    %3134 = vmatprep.subr.bf16.mxu0 %v2530
    %3135 = vmatpush2.bf16.msra.mxu0 %v2529
    %3136 = vmatprep.subr.bf16.mxu0 %v2526
    %3137 = vmatpush2.bf16.msra.mxu0 %v2525
    %3138 = vmatprep.subr.bf16.mxu0 %v2522
    %3139 = vmatpush2.bf16.msra.mxu0 %v2521
    %3140 = vmatprep.mubr.bf16.mxu0 %v1448
    %3141 = vmatmul.mubr.bf16.gmra.mxu0 %v1447
    %v3142 = vpop.f32.mrf.mxu0
    %v3143 = vadd.f32 %v3100, %v3142
    %v3144 = vpop.f32.mrf.mxu0
    %v3145 = vadd.f32 %v3102, %v3144
    %v3146 = vpop.f32.mrf.mxu0
    %v3147 = vadd.f32 %v3104, %v3146
    %v3148 = vpop.f32.mrf.mxu0
    %v3149 = vadd.f32 %v3106, %v3148
    %3150 = vdwg.mxu0
    %3151 = vmatprep.subr.bf16.mxu0 %v2582
    %3152 = vmatpush1.bf16.msra.mxu0 %v2581
    %3153 = vmatprep.subr.bf16.mxu0 %v2578
    %3154 = vmatpush1.bf16.msra.mxu0 %v2577
    %3155 = vmatprep.subr.bf16.mxu0 %v2574
    %3156 = vmatpush1.bf16.msra.mxu0 %v2573
    %3157 = vmatprep.subr.bf16.mxu0 %v2570
    %3158 = vmatpush1.bf16.msra.mxu0 %v2569
    %3159 = vmatprep.subr.bf16.mxu0 %v2566
    %3160 = vmatpush1.bf16.msra.mxu0 %v2565
    %3161 = vmatprep.subr.bf16.mxu0 %v2562
    %3162 = vmatpush1.bf16.msra.mxu0 %v2561
    %3163 = vmatprep.subr.bf16.mxu0 %v2558
    %3164 = vmatpush1.bf16.msra.mxu0 %v2557
    %3165 = vmatprep.subr.bf16.mxu0 %v2554
    %3166 = vmatpush1.bf16.msra.mxu0 %v2553
    %3167 = vmatprep.subr.bf16.mxu0 %v2614
    %3168 = vmatpush2.bf16.msra.mxu0 %v2613
    %3169 = vmatprep.subr.bf16.mxu0 %v2610
    %3170 = vmatpush2.bf16.msra.mxu0 %v2609
    %3171 = vmatprep.subr.bf16.mxu0 %v2606
    %3172 = vmatpush2.bf16.msra.mxu0 %v2605
    %3173 = vmatprep.subr.bf16.mxu0 %v2602
    %3174 = vmatpush2.bf16.msra.mxu0 %v2601
    %3175 = vmatprep.subr.bf16.mxu0 %v2598
    %3176 = vmatpush2.bf16.msra.mxu0 %v2597
    %3177 = vmatprep.subr.bf16.mxu0 %v2594
    %3178 = vmatpush2.bf16.msra.mxu0 %v2593
    %3179 = vmatprep.subr.bf16.mxu0 %v2590
    %3180 = vmatpush2.bf16.msra.mxu0 %v2589
    %3181 = vmatprep.subr.bf16.mxu0 %v2586
    %3182 = vmatpush2.bf16.msra.mxu0 %v2585
    %3183 = vmatprep.mubr.bf16.mxu0 %v1450
    %3184 = vmatmul.mubr.bf16.gmra.mxu0 %v1449
    %v3185 = vpop.f32.mrf.mxu0
    %v3186 = vadd.f32 %v3143, %v3185
    %v3187 = vpop.f32.mrf.mxu0
    %v3188 = vadd.f32 %v3145, %v3187
    %v3189 = vpop.f32.mrf.mxu0
    %v3190 = vadd.f32 %v3147, %v3189
    %v3191 = vpop.f32.mrf.mxu0
    %v3192 = vadd.f32 %v3149, %v3191
    %3193 = vdwg.mxu0
    %3194 = vmatprep.subr.bf16.mxu0 %v2646
    %3195 = vmatpush1.bf16.msra.mxu0 %v2645
    %3196 = vmatprep.subr.bf16.mxu0 %v2642
    %3197 = vmatpush1.bf16.msra.mxu0 %v2641
    %3198 = vmatprep.subr.bf16.mxu0 %v2638
    %3199 = vmatpush1.bf16.msra.mxu0 %v2637
    %3200 = vmatprep.subr.bf16.mxu0 %v2634
    %3201 = vmatpush1.bf16.msra.mxu0 %v2633
    %3202 = vmatprep.subr.bf16.mxu0 %v2630
    %3203 = vmatpush1.bf16.msra.mxu0 %v2629
    %3204 = vmatprep.subr.bf16.mxu0 %v2626
    %3205 = vmatpush1.bf16.msra.mxu0 %v2625
    %3206 = vmatprep.subr.bf16.mxu0 %v2622
    %3207 = vmatpush1.bf16.msra.mxu0 %v2621
    %3208 = vmatprep.subr.bf16.mxu0 %v2618
    %3209 = vmatpush1.bf16.msra.mxu0 %v2617
    %3210 = vmatprep.subr.bf16.mxu0 %v2678
    %3211 = vmatpush2.bf16.msra.mxu0 %v2677
    %3212 = vmatprep.subr.bf16.mxu0 %v2674
    %3213 = vmatpush2.bf16.msra.mxu0 %v2673
    %3214 = vmatprep.subr.bf16.mxu0 %v2670
    %3215 = vmatpush2.bf16.msra.mxu0 %v2669
    %3216 = vmatprep.subr.bf16.mxu0 %v2666
    %3217 = vmatpush2.bf16.msra.mxu0 %v2665
    %3218 = vmatprep.subr.bf16.mxu0 %v2662
    %3219 = vmatpush2.bf16.msra.mxu0 %v2661
    %3220 = vmatprep.subr.bf16.mxu0 %v2658
    %3221 = vmatpush2.bf16.msra.mxu0 %v2657
    %3222 = vmatprep.subr.bf16.mxu0 %v2654
    %3223 = vmatpush2.bf16.msra.mxu0 %v2653
    %3224 = vmatprep.subr.bf16.mxu0 %v2650
    %3225 = vmatpush2.bf16.msra.mxu0 %v2649
    %3226 = vmatprep.mubr.bf16.mxu0 %v1452
    %3227 = vmatmul.mubr.bf16.gmra.mxu0 %v1451
    %v3228 = vpop.f32.mrf.mxu0
    %v3229 = vadd.f32 %v3186, %v3228
    %v3230 = vpop.f32.mrf.mxu0
    %v3231 = vadd.f32 %v3188, %v3230
    %v3232 = vpop.f32.mrf.mxu0
    %v3233 = vadd.f32 %v3190, %v3232
    %v3234 = vpop.f32.mrf.mxu0
    %v3235 = vadd.f32 %v3192, %v3234
    %3236 = vdwg.mxu0
    %3237 = vmatprep.subr.bf16.mxu0 %v2710
    %3238 = vmatpush1.bf16.msra.mxu0 %v2709
    %3239 = vmatprep.subr.bf16.mxu0 %v2706
    %3240 = vmatpush1.bf16.msra.mxu0 %v2705
    %3241 = vmatprep.subr.bf16.mxu0 %v2702
    %3242 = vmatpush1.bf16.msra.mxu0 %v2701
    %3243 = vmatprep.subr.bf16.mxu0 %v2698
    %3244 = vmatpush1.bf16.msra.mxu0 %v2697
    %3245 = vmatprep.subr.bf16.mxu0 %v2694
    %3246 = vmatpush1.bf16.msra.mxu0 %v2693
    %3247 = vmatprep.subr.bf16.mxu0 %v2690
    %3248 = vmatpush1.bf16.msra.mxu0 %v2689
    %3249 = vmatprep.subr.bf16.mxu0 %v2686
    %3250 = vmatpush1.bf16.msra.mxu0 %v2685
    %3251 = vmatprep.subr.bf16.mxu0 %v2682
    %3252 = vmatpush1.bf16.msra.mxu0 %v2681
    %3253 = vmatprep.subr.bf16.mxu0 %v2742
    %3254 = vmatpush2.bf16.msra.mxu0 %v2741
    %3255 = vmatprep.subr.bf16.mxu0 %v2738
    %3256 = vmatpush2.bf16.msra.mxu0 %v2737
    %3257 = vmatprep.subr.bf16.mxu0 %v2734
    %3258 = vmatpush2.bf16.msra.mxu0 %v2733
    %3259 = vmatprep.subr.bf16.mxu0 %v2730
    %3260 = vmatpush2.bf16.msra.mxu0 %v2729
    %3261 = vmatprep.subr.bf16.mxu0 %v2726
    %3262 = vmatpush2.bf16.msra.mxu0 %v2725
    %3263 = vmatprep.subr.bf16.mxu0 %v2722
    %3264 = vmatpush2.bf16.msra.mxu0 %v2721
    %3265 = vmatprep.subr.bf16.mxu0 %v2718
    %3266 = vmatpush2.bf16.msra.mxu0 %v2717
    %3267 = vmatprep.subr.bf16.mxu0 %v2714
    %3268 = vmatpush2.bf16.msra.mxu0 %v2713
    %3269 = vmatprep.mubr.bf16.mxu0 %v1454
    %3270 = vmatmul.mubr.bf16.gmra.mxu0 %v1453
    %v3271 = vpop.f32.mrf.mxu0
    %v3272 = vadd.f32 %v3229, %v3271
    %v3273 = vpop.f32.mrf.mxu0
    %v3274 = vadd.f32 %v3231, %v3273
    %v3275 = vpop.f32.mrf.mxu0
    %v3276 = vadd.f32 %v3233, %v3275
    %v3277 = vpop.f32.mrf.mxu0
    %v3278 = vadd.f32 %v3235, %v3277
    %3279 = vdwg.mxu0
    %3280 = vmatprep.subr.bf16.mxu0 %v2456
    %3281 = vmatpush1.bf16.msra.mxu0 %v2455
    %3282 = vmatprep.subr.bf16.mxu0 %v2452
    %3283 = vmatpush1.bf16.msra.mxu0 %v2451
    %3284 = vmatprep.subr.bf16.mxu0 %v2448
    %3285 = vmatpush1.bf16.msra.mxu0 %v2447
    %3286 = vmatprep.subr.bf16.mxu0 %v2444
    %3287 = vmatpush1.bf16.msra.mxu0 %v2443
    %3288 = vmatprep.subr.bf16.mxu0 %v2440
    %3289 = vmatpush1.bf16.msra.mxu0 %v2439
    %3290 = vmatprep.subr.bf16.mxu0 %v2436
    %3291 = vmatpush1.bf16.msra.mxu0 %v2435
    %3292 = vmatprep.subr.bf16.mxu0 %v2432
    %3293 = vmatpush1.bf16.msra.mxu0 %v2431
    %3294 = vmatprep.subr.bf16.mxu0 %v2428
    %3295 = vmatpush1.bf16.msra.mxu0 %v2427
    %3296 = vmatprep.subr.bf16.mxu0 %v2488
    %3297 = vmatpush2.bf16.msra.mxu0 %v2487
    %3298 = vmatprep.subr.bf16.mxu0 %v2484
    %3299 = vmatpush2.bf16.msra.mxu0 %v2483
    %3300 = vmatprep.subr.bf16.mxu0 %v2480
    %3301 = vmatpush2.bf16.msra.mxu0 %v2479
    %3302 = vmatprep.subr.bf16.mxu0 %v2476
    %3303 = vmatpush2.bf16.msra.mxu0 %v2475
    %3304 = vmatprep.subr.bf16.mxu0 %v2472
    %3305 = vmatpush2.bf16.msra.mxu0 %v2471
    %3306 = vmatprep.subr.bf16.mxu0 %v2468
    %3307 = vmatpush2.bf16.msra.mxu0 %v2467
    %3308 = vmatprep.subr.bf16.mxu0 %v2464
    %3309 = vmatpush2.bf16.msra.mxu0 %v2463
    %3310 = vmatprep.subr.bf16.mxu0 %v2460
    %3311 = vmatpush2.bf16.msra.mxu0 %v2459
    %3312 = vmatprep.mubr.bf16.mxu0 %v1446
    %3313 = vmatmul.mubr.bf16.gmra.mxu0 %v1445
    %v3314 = vpop.f32.mrf.mxu0
    %v3315 = vadd.f32 %v1436, %v3314
    %v3316 = vpop.f32.mrf.mxu0
    %v3317 = vadd.f32 %v1440, %v3316
    %v3318 = vpop.f32.mrf.mxu0
    %v3319 = vadd.f32 %v1436, %v3318
    %v3320 = vpop.f32.mrf.mxu0
    %v3321 = vadd.f32 %v1440, %v3320
    %3322 = vdwg.mxu0
    %3323 = vmatprep.subr.bf16.mxu0 %v2520
    %3324 = vmatpush1.bf16.msra.mxu0 %v2519
    %3325 = vmatprep.subr.bf16.mxu0 %v2516
    %3326 = vmatpush1.bf16.msra.mxu0 %v2515
    %3327 = vmatprep.subr.bf16.mxu0 %v2512
    %3328 = vmatpush1.bf16.msra.mxu0 %v2511
    %3329 = vmatprep.subr.bf16.mxu0 %v2508
    %3330 = vmatpush1.bf16.msra.mxu0 %v2507
    %3331 = vmatprep.subr.bf16.mxu0 %v2504
    %3332 = vmatpush1.bf16.msra.mxu0 %v2503
    %3333 = vmatprep.subr.bf16.mxu0 %v2500
    %3334 = vmatpush1.bf16.msra.mxu0 %v2499
    %3335 = vmatprep.subr.bf16.mxu0 %v2496
    %3336 = vmatpush1.bf16.msra.mxu0 %v2495
    %3337 = vmatprep.subr.bf16.mxu0 %v2492
    %3338 = vmatpush1.bf16.msra.mxu0 %v2491
    %3339 = vmatprep.subr.bf16.mxu0 %v2552
    %3340 = vmatpush2.bf16.msra.mxu0 %v2551
    %3341 = vmatprep.subr.bf16.mxu0 %v2548
    %3342 = vmatpush2.bf16.msra.mxu0 %v2547
    %3343 = vmatprep.subr.bf16.mxu0 %v2544
    %3344 = vmatpush2.bf16.msra.mxu0 %v2543
    %3345 = vmatprep.subr.bf16.mxu0 %v2540
    %3346 = vmatpush2.bf16.msra.mxu0 %v2539
    %3347 = vmatprep.subr.bf16.mxu0 %v2536
    %3348 = vmatpush2.bf16.msra.mxu0 %v2535
    %3349 = vmatprep.subr.bf16.mxu0 %v2532
    %3350 = vmatpush2.bf16.msra.mxu0 %v2531
    %3351 = vmatprep.subr.bf16.mxu0 %v2528
    %3352 = vmatpush2.bf16.msra.mxu0 %v2527
    %3353 = vmatprep.subr.bf16.mxu0 %v2524
    %3354 = vmatpush2.bf16.msra.mxu0 %v2523
    %3355 = vmatprep.mubr.bf16.mxu0 %v1448
    %3356 = vmatmul.mubr.bf16.gmra.mxu0 %v1447
    %v3357 = vpop.f32.mrf.mxu0
    %v3358 = vadd.f32 %v3315, %v3357
    %v3359 = vpop.f32.mrf.mxu0
    %v3360 = vadd.f32 %v3317, %v3359
    %v3361 = vpop.f32.mrf.mxu0
    %v3362 = vadd.f32 %v3319, %v3361
    %v3363 = vpop.f32.mrf.mxu0
    %v3364 = vadd.f32 %v3321, %v3363
    %3365 = vdwg.mxu0
    %3366 = vmatprep.subr.bf16.mxu0 %v2584
    %3367 = vmatpush1.bf16.msra.mxu0 %v2583
    %3368 = vmatprep.subr.bf16.mxu0 %v2580
    %3369 = vmatpush1.bf16.msra.mxu0 %v2579
    %3370 = vmatprep.subr.bf16.mxu0 %v2576
    %3371 = vmatpush1.bf16.msra.mxu0 %v2575
    %3372 = vmatprep.subr.bf16.mxu0 %v2572
    %3373 = vmatpush1.bf16.msra.mxu0 %v2571
    %3374 = vmatprep.subr.bf16.mxu0 %v2568
    %3375 = vmatpush1.bf16.msra.mxu0 %v2567
    %3376 = vmatprep.subr.bf16.mxu0 %v2564
    %3377 = vmatpush1.bf16.msra.mxu0 %v2563
    %3378 = vmatprep.subr.bf16.mxu0 %v2560
    %3379 = vmatpush1.bf16.msra.mxu0 %v2559
    %3380 = vmatprep.subr.bf16.mxu0 %v2556
    %3381 = vmatpush1.bf16.msra.mxu0 %v2555
    %3382 = vmatprep.subr.bf16.mxu0 %v2616
    %3383 = vmatpush2.bf16.msra.mxu0 %v2615
    %3384 = vmatprep.subr.bf16.mxu0 %v2612
    %3385 = vmatpush2.bf16.msra.mxu0 %v2611
    %3386 = vmatprep.subr.bf16.mxu0 %v2608
    %3387 = vmatpush2.bf16.msra.mxu0 %v2607
    %3388 = vmatprep.subr.bf16.mxu0 %v2604
    %3389 = vmatpush2.bf16.msra.mxu0 %v2603
    %3390 = vmatprep.subr.bf16.mxu0 %v2600
    %3391 = vmatpush2.bf16.msra.mxu0 %v2599
    %3392 = vmatprep.subr.bf16.mxu0 %v2596
    %3393 = vmatpush2.bf16.msra.mxu0 %v2595
    %3394 = vmatprep.subr.bf16.mxu0 %v2592
    %3395 = vmatpush2.bf16.msra.mxu0 %v2591
    %3396 = vmatprep.subr.bf16.mxu0 %v2588
    %3397 = vmatpush2.bf16.msra.mxu0 %v2587
    %3398 = vmatprep.mubr.bf16.mxu0 %v1450
    %3399 = vmatmul.mubr.bf16.gmra.mxu0 %v1449
    %v3400 = vpop.f32.mrf.mxu0
    %v3401 = vadd.f32 %v3358, %v3400
    %v3402 = vpop.f32.mrf.mxu0
    %v3403 = vadd.f32 %v3360, %v3402
    %v3404 = vpop.f32.mrf.mxu0
    %v3405 = vadd.f32 %v3362, %v3404
    %v3406 = vpop.f32.mrf.mxu0
    %v3407 = vadd.f32 %v3364, %v3406
    %3408 = vdwg.mxu0
    %3409 = vmatprep.subr.bf16.mxu0 %v2648
    %3410 = vmatpush1.bf16.msra.mxu0 %v2647
    %3411 = vmatprep.subr.bf16.mxu0 %v2644
    %3412 = vmatpush1.bf16.msra.mxu0 %v2643
    %3413 = vmatprep.subr.bf16.mxu0 %v2640
    %3414 = vmatpush1.bf16.msra.mxu0 %v2639
    %3415 = vmatprep.subr.bf16.mxu0 %v2636
    %3416 = vmatpush1.bf16.msra.mxu0 %v2635
    %3417 = vmatprep.subr.bf16.mxu0 %v2632
    %3418 = vmatpush1.bf16.msra.mxu0 %v2631
    %3419 = vmatprep.subr.bf16.mxu0 %v2628
    %3420 = vmatpush1.bf16.msra.mxu0 %v2627
    %3421 = vmatprep.subr.bf16.mxu0 %v2624
    %3422 = vmatpush1.bf16.msra.mxu0 %v2623
    %3423 = vmatprep.subr.bf16.mxu0 %v2620
    %3424 = vmatpush1.bf16.msra.mxu0 %v2619
    %3425 = vmatprep.subr.bf16.mxu0 %v2680
    %3426 = vmatpush2.bf16.msra.mxu0 %v2679
    %3427 = vmatprep.subr.bf16.mxu0 %v2676
    %3428 = vmatpush2.bf16.msra.mxu0 %v2675
    %3429 = vmatprep.subr.bf16.mxu0 %v2672
    %3430 = vmatpush2.bf16.msra.mxu0 %v2671
    %3431 = vmatprep.subr.bf16.mxu0 %v2668
    %3432 = vmatpush2.bf16.msra.mxu0 %v2667
    %3433 = vmatprep.subr.bf16.mxu0 %v2664
    %3434 = vmatpush2.bf16.msra.mxu0 %v2663
    %3435 = vmatprep.subr.bf16.mxu0 %v2660
    %3436 = vmatpush2.bf16.msra.mxu0 %v2659
    %3437 = vmatprep.subr.bf16.mxu0 %v2656
    %3438 = vmatpush2.bf16.msra.mxu0 %v2655
    %3439 = vmatprep.subr.bf16.mxu0 %v2652
    %3440 = vmatpush2.bf16.msra.mxu0 %v2651
    %3441 = vmatprep.mubr.bf16.mxu0 %v1452
    %3442 = vmatmul.mubr.bf16.gmra.mxu0 %v1451
    %v3443 = vpop.f32.mrf.mxu0
    %v3444 = vadd.f32 %v3401, %v3443
    %v3445 = vpop.f32.mrf.mxu0
    %v3446 = vadd.f32 %v3403, %v3445
    %v3447 = vpop.f32.mrf.mxu0
    %v3448 = vadd.f32 %v3405, %v3447
    %v3449 = vpop.f32.mrf.mxu0
    %v3450 = vadd.f32 %v3407, %v3449
    %3451 = vdwg.mxu0
    %3452 = vmatprep.subr.bf16.mxu0 %v2712
    %3453 = vmatpush1.bf16.msra.mxu0 %v2711
    %3454 = vmatprep.subr.bf16.mxu0 %v2708
    %3455 = vmatpush1.bf16.msra.mxu0 %v2707
    %3456 = vmatprep.subr.bf16.mxu0 %v2704
    %3457 = vmatpush1.bf16.msra.mxu0 %v2703
    %3458 = vmatprep.subr.bf16.mxu0 %v2700
    %3459 = vmatpush1.bf16.msra.mxu0 %v2699
    %3460 = vmatprep.subr.bf16.mxu0 %v2696
    %3461 = vmatpush1.bf16.msra.mxu0 %v2695
    %3462 = vmatprep.subr.bf16.mxu0 %v2692
    %3463 = vmatpush1.bf16.msra.mxu0 %v2691
    %3464 = vmatprep.subr.bf16.mxu0 %v2688
    %3465 = vmatpush1.bf16.msra.mxu0 %v2687
    %3466 = vmatprep.subr.bf16.mxu0 %v2684
    %3467 = vmatpush1.bf16.msra.mxu0 %v2683
    %3468 = vmatprep.subr.bf16.mxu0 %v2744
    %3469 = vmatpush2.bf16.msra.mxu0 %v2743
    %3470 = vmatprep.subr.bf16.mxu0 %v2740
    %3471 = vmatpush2.bf16.msra.mxu0 %v2739
    %3472 = vmatprep.subr.bf16.mxu0 %v2736
    %3473 = vmatpush2.bf16.msra.mxu0 %v2735
    %3474 = vmatprep.subr.bf16.mxu0 %v2732
    %3475 = vmatpush2.bf16.msra.mxu0 %v2731
    %3476 = vmatprep.subr.bf16.mxu0 %v2728
    %3477 = vmatpush2.bf16.msra.mxu0 %v2727
    %3478 = vmatprep.subr.bf16.mxu0 %v2724
    %3479 = vmatpush2.bf16.msra.mxu0 %v2723
    %3480 = vmatprep.subr.bf16.mxu0 %v2720
    %3481 = vmatpush2.bf16.msra.mxu0 %v2719
    %3482 = vmatprep.subr.bf16.mxu0 %v2716
    %3483 = vmatpush2.bf16.msra.mxu0 %v2715
    %3484 = vmatprep.mubr.bf16.mxu0 %v1454
    %3485 = vmatmul.mubr.bf16.gmra.mxu0 %v1453
    %v3486 = vpop.f32.mrf.mxu0
    %v3487 = vadd.f32 %v3444, %v3486
    %v3488 = vpop.f32.mrf.mxu0
    %v3489 = vadd.f32 %v3446, %v3488
    %v3490 = vpop.f32.mrf.mxu0
    %v3491 = vadd.f32 %v3448, %v3490
    %v3492 = vpop.f32.mrf.mxu0
    %v3493 = vadd.f32 %v3450, %v3492
    %3494 = vdwg.mxu0
    %v3495 = vmax.f32 %v3272, 0.0
    %v3496 = vmax.f32 %v3274, 0.0
    %v3497 = vmax.f32 %v3487, 0.0
    %v3498 = vmax.f32 %v3489, 0.0
    %v3499 = vmax.f32 %v3276, 0.0
    %v3500 = vmax.f32 %v3278, 0.0
    %v3501 = vmax.f32 %v3491, 0.0
    %v3502 = vmax.f32 %v3493, 0.0
    %v3503 = vmax.f32 %v3495, %v3497
    %v3504 = vmax.f32 %v3496, %v3498
    %v3505 = vmax.f32 %v3499, %v3501
    %v3506 = vmax.f32 %v3500, %v3502
    %v3511 = vrot.slane %v3503, 1
    %v3512 = vrot.slane %v3504, 1
    %v3513 = vrot.slane %v3505, 1
    %v3514 = vrot.slane %v3506, 1
    %v3519 = vmax.f32 %v3503, %v3511
    %v3520 = vmax.f32 %v3504, %v3512
    %v3521 = vmax.f32 %v3505, %v3513
    %v3522 = vmax.f32 %v3506, %v3514
    %v3527 = vcombine.low %v3519, %v3520
    %v3529 = vunpack.c.l.s4 1983009808
    %v3530 = vunpack.c.0.s8 %v3529
    %v3531 = vlaneseq
    %v3532 = vshrl.u32 %v3531, 7
    %v3533 = vsub.s32 %v3530, %v3532
    %v3534 = vrot.slane %v3527, %v3533
    %v3535 = vcombine.low %v3521, %v3522
    %v3537 = vunpack.c.l.s4 1983009808
    %v3538 = vunpack.c.0.s8 %v3537
    %v3539 = vlaneseq
    %v3540 = vshrl.u32 %v3539, 7
    %v3541 = vsub.s32 %v3538, %v3540
    %v3542 = vrot.slane %v3535, %v3541
    %vm3543 = vcmask 1044484
    %v3544 = vsel %vm3543, %v3534, %v3534
    %vm3545 = vcmask 1046534
    %v3546 = vsel %vm3545, %v3534, %v3544
    %v3547 = vrot.slane %v3542, 7
    %vm3548 = vcmask 1041409
    %v3549 = vsel %vm3548, %v3547, %v3546
    %vm3550 = vcmask 1043459
    %v3551 = vsel %vm3550, %v3547, %v3549
    %vm3552 = vcmask 1045509
    %v3553 = vsel %vm3552, %v3547, %v3551
    %vm3554 = vcmask 1047559
    %v3555 = vsel %vm3554, %v3547, %v3553
    %3557 = vst [vmem:[#allocation13] sm:$0xf] %v3555
    %v3558 = vcombine.high %v3534, %v3534
    %v3559 = vcombine.high %v3542, %v3542
    %v3560 = vsel %vm3543, %v3558, %v3558
    %v3561 = vsel %vm3545, %v3558, %v3560
    %v3562 = vrot.slane %v3559, 7
    %v3563 = vsel %vm3548, %v3562, %v3561
    %v3564 = vsel %vm3550, %v3562, %v3563
    %v3565 = vsel %vm3552, %v3562, %v3564
    %v3566 = vsel %vm3554, %v3562, %v3565
    %3568 = vst [vmem:[#allocation13 + $0x4] sm:$0xf] %v3566
    %v3569 = vcombine.high %v3519, %v3520
    %v3571 = vunpack.c.l.s4 1983009808
    %v3572 = vunpack.c.0.s8 %v3571
    %v3573 = vlaneseq
    %v3574 = vshrl.u32 %v3573, 7
    %v3575 = vsub.s32 %v3572, %v3574
    %v3576 = vrot.slane %v3569, %v3575
    %v3577 = vcombine.high %v3521, %v3522
    %v3579 = vunpack.c.l.s4 1983009808
    %v3580 = vunpack.c.0.s8 %v3579
    %v3581 = vlaneseq
    %v3582 = vshrl.u32 %v3581, 7
    %v3583 = vsub.s32 %v3580, %v3582
    %v3584 = vrot.slane %v3577, %v3583
    %v3585 = vsel %vm3543, %v3576, %v3576
    %v3586 = vsel %vm3545, %v3576, %v3585
    %v3587 = vrot.slane %v3584, 7
    %v3588 = vsel %vm3548, %v3587, %v3586
    %v3589 = vsel %vm3550, %v3587, %v3588
    %v3590 = vsel %vm3552, %v3587, %v3589
    %v3591 = vsel %vm3554, %v3587, %v3590
    %3593 = vst [vmem:[#allocation13 + $0x8] sm:$0xf] %v3591
    %v3594 = vcombine.high %v3576, %v3576
    %v3595 = vcombine.high %v3584, %v3584
    %v3596 = vsel %vm3543, %v3594, %v3594
    %v3597 = vsel %vm3545, %v3594, %v3596
    %v3598 = vrot.slane %v3595, 7
    %v3599 = vsel %vm3548, %v3598, %v3597
    %v3600 = vsel %vm3550, %v3598, %v3599
    %v3601 = vsel %vm3552, %v3598, %v3600
    %v3602 = vsel %vm3554, %v3598, %v3601
    %3604 = vst [vmem:[#allocation13 + $0xc] sm:$0xf] %v3602
    // Predicated region
    $region42: #{tpu_custom_call.1} parent=1 // pred_check
      _
    $region43: #{tpu_custom_call.1} parent=1 // pred_check_branch
      %3606 = sbr.rel (0) target = $region45
    $region44: #{tpu_custom_call.1} parent=1 // pred_region
      %s3608 = ssub.s32 256, 256
      %3609 = vsyncadd [#allocation6], %s3608
      %s3611 = sshll.u32 [#allocation13], 4
      %s3612 = int_to_ptr.vmem [resolvable:$true] %s3611
      %3614 = dma.vmem_to_hbm [thread:$0]  %s3612, 256, %s5, [#allocation6]
    $region45: #{tpu_custom_call.1} parent=1 // pred_fallthru
      _
    // Predicated region
    $region46: #{tpu_custom_call.1} parent=1 // pred_check
      _
    $region47: #{tpu_custom_call.1} parent=1 // pred_check_branch
      %3616 = sbr.rel (0) target = $region49
    $region48: #{tpu_custom_call.1} parent=1 // pred_region
      %3617 = dma.done [#allocation6], 256
    $region49: #{tpu_custom_call.1} parent=1 // pred_fallthru
      _
    %3618 = vsyncpa [#allocation5], 1
    %3619 = vsyncpa [#allocation8], 1
    %3620 = vsyncpa [#allocation11], 1
    %3621 = vsyncpa [#allocation6], 1

</llo_original>
